<compile_context>
chip_gen: v6e
topology: v6e:2x2x1
jax: 0.10.0
libtpu: 0.0.40
codegen_flags: <defaults>
</compile_context>

<pallas_src>
import functools

import jax
import jax.numpy as jnp
from jax import lax
from jax.experimental import pallas as pl
from jax.experimental.pallas import tpu as pltpu

EPS = 1e-5
VMEM_LIMIT = 32 * 1024 * 1024   # safe scoped-VMEM limit on v5e/v6e/v7x


def _round_up(x, m):
    return (x + m - 1) // m * m


# ------------------------------- kernel --------------------------------------

def _dan_kernel(b_real, n_layers, *refs):
    """refs = [x, (w1, b1, g2, be2, w2, b2, w3, b3) * n_layers, out]."""
    x_ref = refs[0]
    out_ref = refs[-1]
    layer_refs = refs[1:-1]

    h = x_ref[...]                                     # (b_pad, fi) f32, VMEM
    b_pad = h.shape[0]
    inv_b = 1.0 / b_real

    # Mask zero-padded batch rows out of the BN statistics.
    row = lax.broadcasted_iota(jnp.int32, (b_pad, 1), 0)
    mask = (row < b_real).astype(jnp.float32)

    def batch_stats(v):
        # Training-mode BN stats: per-feature mean and *biased* variance over
        # the real batch rows.  Cross-sublane reductions -> XLU (MXU stays free).
        mean = jnp.sum(v * mask, axis=0, keepdims=True) * inv_b
        d = (v - mean) * mask
        var = jnp.sum(d * d, axis=0, keepdims=True) * inv_b
        return mean, var

    for l in range(n_layers):
        w1, b1, g2, be2, w2, b2, w3, b3 = layer_refs[8 * l: 8 * l + 8]

        # BN1 (per-neuron affine already folded into w1/b1) -> Linear1 -> Tanh.
        m1, v1 = batch_stats(h)
        hstd = (h - m1) * lax.rsqrt(v1 + EPS)
        h1 = jnp.tanh(jnp.dot(hstd, w1[...],
                              preferred_element_type=jnp.float32) + b1[...])

        # BN2 (wide per-column affine) -> Linear2 (block-diagonal) -> Tanh.
        m2, v2 = batch_stats(h1)
        h1n = (h1 - m2) * lax.rsqrt(v2 + EPS) * g2[...] + be2[...]
        h2 = jnp.tanh(jnp.dot(h1n, w2[...],
                              preferred_element_type=jnp.float32) + b2[...])

        # Linear3 (block-diagonal) -> layer output, already concatenated in
        # neuron order along the lane axis.
        h = jnp.dot(h2, w3[...], preferred_element_type=jnp.float32) + b3[...]

    out_ref[...] = h.astype(out_ref.dtype)


# ----------------------------- host wrapper -----------------------------------

def _flat_layer_args(params):
    flat = []
    for layer in params:
        w = layer["wide"]
        flat += [w["w1"], w["b1"], w["g2"], w["be2"],
                 w["w2"], w["b2"], w["w3"], w["b3"]]
    return flat


def _vmem_estimate_bytes(b_pad, params):
    total_w = 0
    widths = []
    for layer in params:
        w = layer["wide"]
        for a in w.values():
            total_w += a.size * 4
        widths += [w["w1"].shape[0], w["w1"].shape[1], w["w3"].shape[1]]
    # ~4 live activations of the widest width plus all weights.
    return 4 * b_pad * max(widths) * 4 + total_w


def dan_forward(x, params):
    """x: (B, ni) float32.  params: list of layer dicts from init_dan_layer."""
    b, _ = x.shape
    b_pad = _round_up(b, 8)
    xp = jnp.pad(x.astype(jnp.float32), ((0, b_pad - b), (0, 0)))

    if _vmem_estimate_bytes(b_pad, params) > VMEM_LIMIT // 2:
        # NOTE: very large batches would need the batch-tiled two-pass variant.
        raise ValueError("batch too large for the fully fused VMEM-resident DAN kernel")

    flat = _flat_layer_args(params)
    out_w = params[-1]["wide"]["w3"].shape[1]

    out = pl.pallas_call(
        functools.partial(_dan_kernel, b, len(params)),
        out_shape=jax.ShapeDtypeStruct((b_pad, out_w), jnp.float32),
        compiler_params=pltpu.CompilerParams(vmem_limit_bytes=VMEM_LIMIT),
    )(xp, *flat)

    return out[:b]


# --------------------------------- init ----------------------------------------

def _init_neuron_raw(key, ni, nf, nout):
    """PyTorch-default-style init; Linear weights stored pre-transposed (in, out)."""
    ks = jax.random.split(key, 6)

    def lin(kw, kb, fin, fout):
        bound = 1.0 / (fin ** 0.5)
        w = jax.random.uniform(kw, (fin, fout), jnp.float32, -bound, bound)
        b = jax.random.uniform(kb, (fout,), jnp.float32, -bound, bound)
        return w, b

    w1, b1 = lin(ks[0], ks[1], ni, nf)
    w2, b2 = lin(ks[2], ks[3], nf, nf)
    w3, b3 = lin(ks[4], ks[5], nf, nout)
    return {
        "g1": jnp.ones((ni,), jnp.float32), "be1": jnp.zeros((ni,), jnp.float32),
        "w1": w1, "b1": b1,
        "g2": jnp.ones((nf,), jnp.float32), "be2": jnp.zeros((nf,), jnp.float32),
        "w2": w2, "b2": b2,
        "w3": w3, "b3": b3,
    }


def init_dan_layer(key, neurons, n_ni, n_nf, n_nout, p_neurons):
    ni = n_ni * p_neurons
    keys = jax.random.split(key, neurons)
    raw = [_init_neuron_raw(k, ni, n_nf, n_nout) for k in keys]

    # Fold each neuron's BN1 affine (gamma/beta) into its lin1 so the shared
    # input standardization can be applied once, activation-side, in the kernel:
    #   (xstd*g + be) @ w + b == xstd @ (g[:,None]*w) + (be @ w + b)
    w1_wide = jnp.concatenate([r["g1"][:, None] * r["w1"] for r in raw], axis=1)
    b1_wide = jnp.concatenate([r["b1"] + r["be1"] @ r["w1"] for r in raw])[None, :]

    g2_wide = jnp.concatenate([r["g2"] for r in raw])[None, :]
    be2_wide = jnp.concatenate([r["be2"] for r in raw])[None, :]
    b2_wide = jnp.concatenate([r["b2"] for r in raw])[None, :]
    b3_wide = jnp.concatenate([r["b3"] for r in raw])[None, :]

    # Block-diagonal lin2 / lin3 so all neurons run as one wide matmul and the
    # layer output comes out already concatenated in neuron order.
    w2_blk = jnp.zeros((neurons * n_nf, neurons * n_nf), jnp.float32)
    w3_blk = jnp.zeros((neurons * n_nf, neurons * n_nout), jnp.float32)
    for n, r in enumerate(raw):
        w2_blk = w2_blk.at[n * n_nf:(n + 1) * n_nf, n * n_nf:(n + 1) * n_nf].set(r["w2"])
        w3_blk = w3_blk.at[n * n_nf:(n + 1) * n_nf, n * n_nout:(n + 1) * n_nout].set(r["w3"])

    wide = {"w1": w1_wide, "b1": b1_wide, "g2": g2_wide, "be2": be2_wide,
            "w2": w2_blk, "b2": b2_wide, "w3": w3_blk, "b3": b3_wide}
    return {"raw": raw, "wide": wide, "ni": ni, "nout": n_nout}


def init_dan_params(key, ni, num_classes):
    """Hardcoded DAN architecture, as in the PyTorch reference."""
    k1, k2, k3 = jax.random.split(key, 3)
    return [
        init_dan_layer(k1, neurons=3, n_ni=ni, n_nf=50, n_nout=100, p_neurons=1),
        init_dan_layer(k2, neurons=2, n_ni=100, n_nf=50, n_nout=25, p_neurons=3),
        init_dan_layer(k3, neurons=1, n_ni=25, n_nf=10, n_nout=num_classes,
                       p_neurons=2),
    ]


# ------------------------------- reference -------------------------------------

def _neuron_ref(x, p):
    def bn(h, g, be):
        m = jnp.mean(h, axis=0, keepdims=True)
        v = jnp.mean((h - m) ** 2, axis=0, keepdims=True)   # biased variance
        return (h - m) / jnp.sqrt(v + EPS) * g + be

    h = bn(x, p["g1"], p["be1"])
    h = jnp.tanh(h @ p["w1"] + p["b1"])
    h = bn(h, p["g2"], p["be2"])
    h = jnp.tanh(h @ p["w2"] + p["b2"])
    return h @ p["w3"] + p["b3"]


def dan_reference(x, params):
    for layer in params:
        x = jnp.concatenate([_neuron_ref(x, r) for r in layer["raw"]], axis=1)
    return x


# --------------------------------- main -----------------------------------------

if __name__ == "__main__":
    B, NI, NUM_CLASSES = 160, 16, 4

    key = jax.random.PRNGKey(0)
    kx, kp = jax.random.split(key)
    x = jax.random.normal(kx, (B, NI), jnp.float32)
    params = init_dan_params(kp, NI, NUM_CLASSES)

    fwd = jax.jit(lambda xx: dan_forward(xx, params))
    out = jax.block_until_ready(fwd(x))

    ref = dan_reference(x, params)
    assert out.shape == (B, NUM_CLASSES), out.shape
    err = float(jnp.max(jnp.abs(out - ref)))
    assert jnp.allclose(out, ref, atol=2e-3, rtol=2e-3), f"max abs err {err}"

    print("KERNEL_OK")
</pallas_src>

<mosaic_0001>
module attributes {stable_mosaic.version = 11 : i64} {
  func.func @_dan_kernel(%arg0: memref<160x16xf32, #tpu.memory_space<vmem>>, %arg1: memref<16x150xf32, #tpu.memory_space<vmem>>, %arg2: memref<1x150xf32, #tpu.memory_space<vmem>>, %arg3: memref<1x150xf32, #tpu.memory_space<vmem>>, %arg4: memref<1x150xf32, #tpu.memory_space<vmem>>, %arg5: memref<150x150xf32, #tpu.memory_space<vmem>>, %arg6: memref<1x150xf32, #tpu.memory_space<vmem>>, %arg7: memref<150x300xf32, #tpu.memory_space<vmem>>, %arg8: memref<1x300xf32, #tpu.memory_space<vmem>>, %arg9: memref<300x100xf32, #tpu.memory_space<vmem>>, %arg10: memref<1x100xf32, #tpu.memory_space<vmem>>, %arg11: memref<1x100xf32, #tpu.memory_space<vmem>>, %arg12: memref<1x100xf32, #tpu.memory_space<vmem>>, %arg13: memref<100x100xf32, #tpu.memory_space<vmem>>, %arg14: memref<1x100xf32, #tpu.memory_space<vmem>>, %arg15: memref<100x50xf32, #tpu.memory_space<vmem>>, %arg16: memref<1x50xf32, #tpu.memory_space<vmem>>, %arg17: memref<50x10xf32, #tpu.memory_space<vmem>>, %arg18: memref<1x10xf32, #tpu.memory_space<vmem>>, %arg19: memref<1x10xf32, #tpu.memory_space<vmem>>, %arg20: memref<1x10xf32, #tpu.memory_space<vmem>>, %arg21: memref<10x10xf32, #tpu.memory_space<vmem>>, %arg22: memref<1x10xf32, #tpu.memory_space<vmem>>, %arg23: memref<10x4xf32, #tpu.memory_space<vmem>>, %arg24: memref<1x4xf32, #tpu.memory_space<vmem>>, %arg25: memref<160x4xf32, #tpu.memory_space<vmem>>) attributes {dimension_semantics = [], scalar_prefetch = 0 : i64, scratch_operands = 0 : i64, tpu.core_type = #tpu.core_type<tc>} {
    %c0 = arith.constant 0 : index
    %c0_0 = arith.constant 0 : index
    %0 = vector.load %arg0[%c0, %c0_0] : memref<160x16xf32, #tpu.memory_space<vmem>>, vector<160x16xf32>
    %1 = tpu.iota {dimensions = array<i32: 0>} : vector<160x1xi32>
    %c160_i32 = arith.constant 160 : i32
    %2 = vector.broadcast %c160_i32 : i32 to vector<160x1xi32>
    %3 = arith.cmpi slt, %1, %2 : vector<160x1xi32>
    %4 = arith.extui %3 : vector<160x1xi1> to vector<160x1xi32>
    %5 = arith.sitofp %4 : vector<160x1xi32> to vector<160x1xf32>
    %6 = vector.broadcast %5 : vector<160x1xf32> to vector<160x16xf32>
    %7 = arith.mulf %0, %6 : vector<160x16xf32>
    %cst = arith.constant dense<0.000000e+00> : vector<16xf32>
    %8 = vector.multi_reduction <add>, %7, %cst [0] : vector<160x16xf32> to vector<16xf32>
    %9 = vector.shape_cast %8 : vector<16xf32> to vector<1x16xf32>
    %cst_1 = arith.constant 6.250000e-03 : f32
    %10 = vector.broadcast %cst_1 : f32 to vector<1x16xf32>
    %11 = arith.mulf %9, %10 : vector<1x16xf32>
    %12 = vector.broadcast %11 : vector<1x16xf32> to vector<160x16xf32>
    %13 = arith.subf %0, %12 : vector<160x16xf32>
    %14 = vector.broadcast %5 : vector<160x1xf32> to vector<160x16xf32>
    %15 = arith.mulf %13, %14 : vector<160x16xf32>
    %16 = arith.mulf %15, %15 : vector<160x16xf32>
    %cst_2 = arith.constant dense<0.000000e+00> : vector<16xf32>
    %17 = vector.multi_reduction <add>, %16, %cst_2 [0] : vector<160x16xf32> to vector<16xf32>
    %18 = vector.shape_cast %17 : vector<16xf32> to vector<1x16xf32>
    %cst_3 = arith.constant 6.250000e-03 : f32
    %19 = vector.broadcast %cst_3 : f32 to vector<1x16xf32>
    %20 = arith.mulf %18, %19 : vector<1x16xf32>
    %21 = vector.broadcast %11 : vector<1x16xf32> to vector<160x16xf32>
    %22 = arith.subf %0, %21 : vector<160x16xf32>
    %cst_4 = arith.constant 9.99999974E-6 : f32
    %23 = vector.broadcast %cst_4 : f32 to vector<1x16xf32>
    %24 = arith.addf %20, %23 : vector<1x16xf32>
    %25 = math.rsqrt %24 : vector<1x16xf32>
    %26 = vector.broadcast %25 : vector<1x16xf32> to vector<160x16xf32>
    %27 = arith.mulf %22, %26 : vector<160x16xf32>
    %c0_5 = arith.constant 0 : index
    %c0_6 = arith.constant 0 : index
    %28 = vector.load %arg1[%c0_5, %c0_6] : memref<16x150xf32, #tpu.memory_space<vmem>>, vector<16x150xf32>
    %cst_7 = arith.constant dense<0.000000e+00> : vector<160x150xf32>
    %29 = tpu.matmul %27, %28, %cst_7 {dimension_numbers = #tpu.dot_dimension_numbers<[1], [0], [0], [1], [0, 0, 1, 1], [], []>} : vector<160x16xf32>, vector<16x150xf32>, vector<160x150xf32> -> vector<160x150xf32>
    %c0_8 = arith.constant 0 : index
    %c0_9 = arith.constant 0 : index
    %30 = vector.load %arg2[%c0_8, %c0_9] : memref<1x150xf32, #tpu.memory_space<vmem>>, vector<1x150xf32>
    %31 = vector.broadcast %30 : vector<1x150xf32> to vector<160x150xf32>
    %32 = arith.addf %29, %31 : vector<160x150xf32>
    %33 = math.tanh %32 : vector<160x150xf32>
    %34 = vector.broadcast %5 : vector<160x1xf32> to vector<160x150xf32>
    %35 = arith.mulf %33, %34 : vector<160x150xf32>
    %cst_10 = arith.constant dense<0.000000e+00> : vector<150xf32>
    %36 = vector.multi_reduction <add>, %35, %cst_10 [0] : vector<160x150xf32> to vector<150xf32>
    %37 = vector.shape_cast %36 : vector<150xf32> to vector<1x150xf32>
    %cst_11 = arith.constant 6.250000e-03 : f32
    %38 = vector.broadcast %cst_11 : f32 to vector<1x150xf32>
    %39 = arith.mulf %37, %38 : vector<1x150xf32>
    %40 = vector.broadcast %39 : vector<1x150xf32> to vector<160x150xf32>
    %41 = arith.subf %33, %40 : vector<160x150xf32>
    %42 = vector.broadcast %5 : vector<160x1xf32> to vector<160x150xf32>
    %43 = arith.mulf %41, %42 : vector<160x150xf32>
    %44 = arith.mulf %43, %43 : vector<160x150xf32>
    %cst_12 = arith.constant dense<0.000000e+00> : vector<150xf32>
    %45 = vector.multi_reduction <add>, %44, %cst_12 [0] : vector<160x150xf32> to vector<150xf32>
    %46 = vector.shape_cast %45 : vector<150xf32> to vector<1x150xf32>
    %cst_13 = arith.constant 6.250000e-03 : f32
    %47 = vector.broadcast %cst_13 : f32 to vector<1x150xf32>
    %48 = arith.mulf %46, %47 : vector<1x150xf32>
    %49 = vector.broadcast %39 : vector<1x150xf32> to vector<160x150xf32>
    %50 = arith.subf %33, %49 : vector<160x150xf32>
    %cst_14 = arith.constant 9.99999974E-6 : f32
    %51 = vector.broadcast %cst_14 : f32 to vector<1x150xf32>
    %52 = arith.addf %48, %51 : vector<1x150xf32>
    %53 = math.rsqrt %52 : vector<1x150xf32>
    %54 = vector.broadcast %53 : vector<1x150xf32> to vector<160x150xf32>
    %55 = arith.mulf %50, %54 : vector<160x150xf32>
    %c0_15 = arith.constant 0 : index
    %c0_16 = arith.constant 0 : index
    %56 = vector.load %arg3[%c0_15, %c0_16] : memref<1x150xf32, #tpu.memory_space<vmem>>, vector<1x150xf32>
    %57 = vector.broadcast %56 : vector<1x150xf32> to vector<160x150xf32>
    %58 = arith.mulf %55, %57 : vector<160x150xf32>
    %c0_17 = arith.constant 0 : index
    %c0_18 = arith.constant 0 : index
    %59 = vector.load %arg4[%c0_17, %c0_18] : memref<1x150xf32, #tpu.memory_space<vmem>>, vector<1x150xf32>
    %60 = vector.broadcast %59 : vector<1x150xf32> to vector<160x150xf32>
    %61 = arith.addf %58, %60 : vector<160x150xf32>
    %c0_19 = arith.constant 0 : index
    %c0_20 = arith.constant 0 : index
    %62 = vector.load %arg5[%c0_19, %c0_20] : memref<150x150xf32, #tpu.memory_space<vmem>>, vector<150x150xf32>
    %cst_21 = arith.constant dense<0.000000e+00> : vector<160x150xf32>
    %63 = tpu.matmul %61, %62, %cst_21 {dimension_numbers = #tpu.dot_dimension_numbers<[1], [0], [0], [1], [0, 0, 1, 1], [], []>} : vector<160x150xf32>, vector<150x150xf32>, vector<160x150xf32> -> vector<160x150xf32>
    %c0_22 = arith.constant 0 : index
    %c0_23 = arith.constant 0 : index
    %64 = vector.load %arg6[%c0_22, %c0_23] : memref<1x150xf32, #tpu.memory_space<vmem>>, vector<1x150xf32>
    %65 = vector.broadcast %64 : vector<1x150xf32> to vector<160x150xf32>
    %66 = arith.addf %63, %65 : vector<160x150xf32>
    %67 = math.tanh %66 : vector<160x150xf32>
    %c0_24 = arith.constant 0 : index
    %c0_25 = arith.constant 0 : index
    %68 = vector.load %arg7[%c0_24, %c0_25] : memref<150x300xf32, #tpu.memory_space<vmem>>, vector<150x300xf32>
    %cst_26 = arith.constant dense<0.000000e+00> : vector<160x300xf32>
    %69 = tpu.matmul %67, %68, %cst_26 {dimension_numbers = #tpu.dot_dimension_numbers<[1], [0], [0], [1], [0, 0, 1, 1], [], []>} : vector<160x150xf32>, vector<150x300xf32>, vector<160x300xf32> -> vector<160x300xf32>
    %c0_27 = arith.constant 0 : index
    %c0_28 = arith.constant 0 : index
    %70 = vector.load %arg8[%c0_27, %c0_28] : memref<1x300xf32, #tpu.memory_space<vmem>>, vector<1x300xf32>
    %71 = vector.broadcast %70 : vector<1x300xf32> to vector<160x300xf32>
    %72 = arith.addf %69, %71 : vector<160x300xf32>
    %73 = vector.broadcast %5 : vector<160x1xf32> to vector<160x300xf32>
    %74 = arith.mulf %72, %73 : vector<160x300xf32>
    %cst_29 = arith.constant dense<0.000000e+00> : vector<300xf32>
    %75 = vector.multi_reduction <add>, %74, %cst_29 [0] : vector<160x300xf32> to vector<300xf32>
    %76 = vector.shape_cast %75 : vector<300xf32> to vector<1x300xf32>
    %cst_30 = arith.constant 6.250000e-03 : f32
    %77 = vector.broadcast %cst_30 : f32 to vector<1x300xf32>
    %78 = arith.mulf %76, %77 : vector<1x300xf32>
    %79 = vector.broadcast %78 : vector<1x300xf32> to vector<160x300xf32>
    %80 = arith.subf %72, %79 : vector<160x300xf32>
    %81 = vector.broadcast %5 : vector<160x1xf32> to vector<160x300xf32>
    %82 = arith.mulf %80, %81 : vector<160x300xf32>
    %83 = arith.mulf %82, %82 : vector<160x300xf32>
    %cst_31 = arith.constant dense<0.000000e+00> : vector<300xf32>
    %84 = vector.multi_reduction <add>, %83, %cst_31 [0] : vector<160x300xf32> to vector<300xf32>
    %85 = vector.shape_cast %84 : vector<300xf32> to vector<1x300xf32>
    %cst_32 = arith.constant 6.250000e-03 : f32
    %86 = vector.broadcast %cst_32 : f32 to vector<1x300xf32>
    %87 = arith.mulf %85, %86 : vector<1x300xf32>
    %88 = vector.broadcast %78 : vector<1x300xf32> to vector<160x300xf32>
    %89 = arith.subf %72, %88 : vector<160x300xf32>
    %cst_33 = arith.constant 9.99999974E-6 : f32
    %90 = vector.broadcast %cst_33 : f32 to vector<1x300xf32>
    %91 = arith.addf %87, %90 : vector<1x300xf32>
    %92 = math.rsqrt %91 : vector<1x300xf32>
    %93 = vector.broadcast %92 : vector<1x300xf32> to vector<160x300xf32>
    %94 = arith.mulf %89, %93 : vector<160x300xf32>
    %c0_34 = arith.constant 0 : index
    %c0_35 = arith.constant 0 : index
    %95 = vector.load %arg9[%c0_34, %c0_35] : memref<300x100xf32, #tpu.memory_space<vmem>>, vector<300x100xf32>
    %cst_36 = arith.constant dense<0.000000e+00> : vector<160x100xf32>
    %96 = tpu.matmul %94, %95, %cst_36 {dimension_numbers = #tpu.dot_dimension_numbers<[1], [0], [0], [1], [0, 0, 1, 1], [], []>} : vector<160x300xf32>, vector<300x100xf32>, vector<160x100xf32> -> vector<160x100xf32>
    %c0_37 = arith.constant 0 : index
    %c0_38 = arith.constant 0 : index
    %97 = vector.load %arg10[%c0_37, %c0_38] : memref<1x100xf32, #tpu.memory_space<vmem>>, vector<1x100xf32>
    %98 = vector.broadcast %97 : vector<1x100xf32> to vector<160x100xf32>
    %99 = arith.addf %96, %98 : vector<160x100xf32>
    %100 = math.tanh %99 : vector<160x100xf32>
    %101 = vector.broadcast %5 : vector<160x1xf32> to vector<160x100xf32>
    %102 = arith.mulf %100, %101 : vector<160x100xf32>
    %cst_39 = arith.constant dense<0.000000e+00> : vector<100xf32>
    %103 = vector.multi_reduction <add>, %102, %cst_39 [0] : vector<160x100xf32> to vector<100xf32>
    %104 = vector.shape_cast %103 : vector<100xf32> to vector<1x100xf32>
    %cst_40 = arith.constant 6.250000e-03 : f32
    %105 = vector.broadcast %cst_40 : f32 to vector<1x100xf32>
    %106 = arith.mulf %104, %105 : vector<1x100xf32>
    %107 = vector.broadcast %106 : vector<1x100xf32> to vector<160x100xf32>
    %108 = arith.subf %100, %107 : vector<160x100xf32>
    %109 = vector.broadcast %5 : vector<160x1xf32> to vector<160x100xf32>
    %110 = arith.mulf %108, %109 : vector<160x100xf32>
    %111 = arith.mulf %110, %110 : vector<160x100xf32>
    %cst_41 = arith.constant dense<0.000000e+00> : vector<100xf32>
    %112 = vector.multi_reduction <add>, %111, %cst_41 [0] : vector<160x100xf32> to vector<100xf32>
    %113 = vector.shape_cast %112 : vector<100xf32> to vector<1x100xf32>
    %cst_42 = arith.constant 6.250000e-03 : f32
    %114 = vector.broadcast %cst_42 : f32 to vector<1x100xf32>
    %115 = arith.mulf %113, %114 : vector<1x100xf32>
    %116 = vector.broadcast %106 : vector<1x100xf32> to vector<160x100xf32>
    %117 = arith.subf %100, %116 : vector<160x100xf32>
    %cst_43 = arith.constant 9.99999974E-6 : f32
    %118 = vector.broadcast %cst_43 : f32 to vector<1x100xf32>
    %119 = arith.addf %115, %118 : vector<1x100xf32>
    %120 = math.rsqrt %119 : vector<1x100xf32>
    %121 = vector.broadcast %120 : vector<1x100xf32> to vector<160x100xf32>
    %122 = arith.mulf %117, %121 : vector<160x100xf32>
    %c0_44 = arith.constant 0 : index
    %c0_45 = arith.constant 0 : index
    %123 = vector.load %arg11[%c0_44, %c0_45] : memref<1x100xf32, #tpu.memory_space<vmem>>, vector<1x100xf32>
    %124 = vector.broadcast %123 : vector<1x100xf32> to vector<160x100xf32>
    %125 = arith.mulf %122, %124 : vector<160x100xf32>
    %c0_46 = arith.constant 0 : index
    %c0_47 = arith.constant 0 : index
    %126 = vector.load %arg12[%c0_46, %c0_47] : memref<1x100xf32, #tpu.memory_space<vmem>>, vector<1x100xf32>
    %127 = vector.broadcast %126 : vector<1x100xf32> to vector<160x100xf32>
    %128 = arith.addf %125, %127 : vector<160x100xf32>
    %c0_48 = arith.constant 0 : index
    %c0_49 = arith.constant 0 : index
    %129 = vector.load %arg13[%c0_48, %c0_49] : memref<100x100xf32, #tpu.memory_space<vmem>>, vector<100x100xf32>
    %cst_50 = arith.constant dense<0.000000e+00> : vector<160x100xf32>
    %130 = tpu.matmul %128, %129, %cst_50 {dimension_numbers = #tpu.dot_dimension_numbers<[1], [0], [0], [1], [0, 0, 1, 1], [], []>} : vector<160x100xf32>, vector<100x100xf32>, vector<160x100xf32> -> vector<160x100xf32>
    %c0_51 = arith.constant 0 : index
    %c0_52 = arith.constant 0 : index
    %131 = vector.load %arg14[%c0_51, %c0_52] : memref<1x100xf32, #tpu.memory_space<vmem>>, vector<1x100xf32>
    %132 = vector.broadcast %131 : vector<1x100xf32> to vector<160x100xf32>
    %133 = arith.addf %130, %132 : vector<160x100xf32>
    %134 = math.tanh %133 : vector<160x100xf32>
    %c0_53 = arith.constant 0 : index
    %c0_54 = arith.constant 0 : index
    %135 = vector.load %arg15[%c0_53, %c0_54] : memref<100x50xf32, #tpu.memory_space<vmem>>, vector<100x50xf32>
    %cst_55 = arith.constant dense<0.000000e+00> : vector<160x50xf32>
    %136 = tpu.matmul %134, %135, %cst_55 {dimension_numbers = #tpu.dot_dimension_numbers<[1], [0], [0], [1], [0, 0, 1, 1], [], []>} : vector<160x100xf32>, vector<100x50xf32>, vector<160x50xf32> -> vector<160x50xf32>
    %c0_56 = arith.constant 0 : index
    %c0_57 = arith.constant 0 : index
    %137 = vector.load %arg16[%c0_56, %c0_57] : memref<1x50xf32, #tpu.memory_space<vmem>>, vector<1x50xf32>
    %138 = vector.broadcast %137 : vector<1x50xf32> to vector<160x50xf32>
    %139 = arith.addf %136, %138 : vector<160x50xf32>
    %140 = vector.broadcast %5 : vector<160x1xf32> to vector<160x50xf32>
    %141 = arith.mulf %139, %140 : vector<160x50xf32>
    %cst_58 = arith.constant dense<0.000000e+00> : vector<50xf32>
    %142 = vector.multi_reduction <add>, %141, %cst_58 [0] : vector<160x50xf32> to vector<50xf32>
    %143 = vector.shape_cast %142 : vector<50xf32> to vector<1x50xf32>
    %cst_59 = arith.constant 6.250000e-03 : f32
    %144 = vector.broadcast %cst_59 : f32 to vector<1x50xf32>
    %145 = arith.mulf %143, %144 : vector<1x50xf32>
    %146 = vector.broadcast %145 : vector<1x50xf32> to vector<160x50xf32>
    %147 = arith.subf %139, %146 : vector<160x50xf32>
    %148 = vector.broadcast %5 : vector<160x1xf32> to vector<160x50xf32>
    %149 = arith.mulf %147, %148 : vector<160x50xf32>
    %150 = arith.mulf %149, %149 : vector<160x50xf32>
    %cst_60 = arith.constant dense<0.000000e+00> : vector<50xf32>
    %151 = vector.multi_reduction <add>, %150, %cst_60 [0] : vector<160x50xf32> to vector<50xf32>
    %152 = vector.shape_cast %151 : vector<50xf32> to vector<1x50xf32>
    %cst_61 = arith.constant 6.250000e-03 : f32
    %153 = vector.broadcast %cst_61 : f32 to vector<1x50xf32>
    %154 = arith.mulf %152, %153 : vector<1x50xf32>
    %155 = vector.broadcast %145 : vector<1x50xf32> to vector<160x50xf32>
    %156 = arith.subf %139, %155 : vector<160x50xf32>
    %cst_62 = arith.constant 9.99999974E-6 : f32
    %157 = vector.broadcast %cst_62 : f32 to vector<1x50xf32>
    %158 = arith.addf %154, %157 : vector<1x50xf32>
    %159 = math.rsqrt %158 : vector<1x50xf32>
    %160 = vector.broadcast %159 : vector<1x50xf32> to vector<160x50xf32>
    %161 = arith.mulf %156, %160 : vector<160x50xf32>
    %c0_63 = arith.constant 0 : index
    %c0_64 = arith.constant 0 : index
    %162 = vector.load %arg17[%c0_63, %c0_64] : memref<50x10xf32, #tpu.memory_space<vmem>>, vector<50x10xf32>
    %cst_65 = arith.constant dense<0.000000e+00> : vector<160x10xf32>
    %163 = tpu.matmul %161, %162, %cst_65 {dimension_numbers = #tpu.dot_dimension_numbers<[1], [0], [0], [1], [0, 0, 1, 1], [], []>} : vector<160x50xf32>, vector<50x10xf32>, vector<160x10xf32> -> vector<160x10xf32>
    %c0_66 = arith.constant 0 : index
    %c0_67 = arith.constant 0 : index
    %164 = vector.load %arg18[%c0_66, %c0_67] : memref<1x10xf32, #tpu.memory_space<vmem>>, vector<1x10xf32>
    %165 = vector.broadcast %164 : vector<1x10xf32> to vector<160x10xf32>
    %166 = arith.addf %163, %165 : vector<160x10xf32>
    %167 = math.tanh %166 : vector<160x10xf32>
    %168 = vector.broadcast %5 : vector<160x1xf32> to vector<160x10xf32>
    %169 = arith.mulf %167, %168 : vector<160x10xf32>
    %cst_68 = arith.constant dense<0.000000e+00> : vector<10xf32>
    %170 = vector.multi_reduction <add>, %169, %cst_68 [0] : vector<160x10xf32> to vector<10xf32>
    %171 = vector.shape_cast %170 : vector<10xf32> to vector<1x10xf32>
    %cst_69 = arith.constant 6.250000e-03 : f32
    %172 = vector.broadcast %cst_69 : f32 to vector<1x10xf32>
    %173 = arith.mulf %171, %172 : vector<1x10xf32>
    %174 = vector.broadcast %173 : vector<1x10xf32> to vector<160x10xf32>
    %175 = arith.subf %167, %174 : vector<160x10xf32>
    %176 = vector.broadcast %5 : vector<160x1xf32> to vector<160x10xf32>
    %177 = arith.mulf %175, %176 : vector<160x10xf32>
    %178 = arith.mulf %177, %177 : vector<160x10xf32>
    %cst_70 = arith.constant dense<0.000000e+00> : vector<10xf32>
    %179 = vector.multi_reduction <add>, %178, %cst_70 [0] : vector<160x10xf32> to vector<10xf32>
    %180 = vector.shape_cast %179 : vector<10xf32> to vector<1x10xf32>
    %cst_71 = arith.constant 6.250000e-03 : f32
    %181 = vector.broadcast %cst_71 : f32 to vector<1x10xf32>
    %182 = arith.mulf %180, %181 : vector<1x10xf32>
    %183 = vector.broadcast %173 : vector<1x10xf32> to vector<160x10xf32>
    %184 = arith.subf %167, %183 : vector<160x10xf32>
    %cst_72 = arith.constant 9.99999974E-6 : f32
    %185 = vector.broadcast %cst_72 : f32 to vector<1x10xf32>
    %186 = arith.addf %182, %185 : vector<1x10xf32>
    %187 = math.rsqrt %186 : vector<1x10xf32>
    %188 = vector.broadcast %187 : vector<1x10xf32> to vector<160x10xf32>
    %189 = arith.mulf %184, %188 : vector<160x10xf32>
    %c0_73 = arith.constant 0 : index
    %c0_74 = arith.constant 0 : index
    %190 = vector.load %arg19[%c0_73, %c0_74] : memref<1x10xf32, #tpu.memory_space<vmem>>, vector<1x10xf32>
    %191 = vector.broadcast %190 : vector<1x10xf32> to vector<160x10xf32>
    %192 = arith.mulf %189, %191 : vector<160x10xf32>
    %c0_75 = arith.constant 0 : index
    %c0_76 = arith.constant 0 : index
    %193 = vector.load %arg20[%c0_75, %c0_76] : memref<1x10xf32, #tpu.memory_space<vmem>>, vector<1x10xf32>
    %194 = vector.broadcast %193 : vector<1x10xf32> to vector<160x10xf32>
    %195 = arith.addf %192, %194 : vector<160x10xf32>
    %c0_77 = arith.constant 0 : index
    %c0_78 = arith.constant 0 : index
    %196 = vector.load %arg21[%c0_77, %c0_78] : memref<10x10xf32, #tpu.memory_space<vmem>>, vector<10x10xf32>
    %cst_79 = arith.constant dense<0.000000e+00> : vector<160x10xf32>
    %197 = tpu.matmul %195, %196, %cst_79 {dimension_numbers = #tpu.dot_dimension_numbers<[1], [0], [0], [1], [0, 0, 1, 1], [], []>} : vector<160x10xf32>, vector<10x10xf32>, vector<160x10xf32> -> vector<160x10xf32>
    %c0_80 = arith.constant 0 : index
    %c0_81 = arith.constant 0 : index
    %198 = vector.load %arg22[%c0_80, %c0_81] : memref<1x10xf32, #tpu.memory_space<vmem>>, vector<1x10xf32>
    %199 = vector.broadcast %198 : vector<1x10xf32> to vector<160x10xf32>
    %200 = arith.addf %197, %199 : vector<160x10xf32>
    %201 = math.tanh %200 : vector<160x10xf32>
    %c0_82 = arith.constant 0 : index
    %c0_83 = arith.constant 0 : index
    %202 = vector.load %arg23[%c0_82, %c0_83] : memref<10x4xf32, #tpu.memory_space<vmem>>, vector<10x4xf32>
    %cst_84 = arith.constant dense<0.000000e+00> : vector<160x4xf32>
    %203 = tpu.matmul %201, %202, %cst_84 {dimension_numbers = #tpu.dot_dimension_numbers<[1], [0], [0], [1], [0, 0, 1, 1], [], []>} : vector<160x10xf32>, vector<10x4xf32>, vector<160x4xf32> -> vector<160x4xf32>
    %c0_85 = arith.constant 0 : index
    %c0_86 = arith.constant 0 : index
    %204 = vector.load %arg24[%c0_85, %c0_86] : memref<1x4xf32, #tpu.memory_space<vmem>>, vector<1x4xf32>
    %205 = vector.broadcast %204 : vector<1x4xf32> to vector<160x4xf32>
    %206 = arith.addf %203, %205 : vector<160x4xf32>
    %c0_87 = arith.constant 0 : index
    %c0_88 = arith.constant 0 : index
    %207 = vector.load %arg25[%c0_87, %c0_88] : memref<160x4xf32, #tpu.memory_space<vmem>>, vector<160x4xf32>
    tpu.vector_store %arg25[%c0_87, %c0_88], %206 {strides = array<i32>} : memref<160x4xf32, #tpu.memory_space<vmem>>, vector<160x4xf32>,
    return
  }
}

</mosaic_0001>

<llo_original>
// kernel: _lambda_.1
$region0: #{_lambda_.1}
  #allocation0 [shape = 'u32[]', space=smem, size = 0x4, offset = 0x4, fixed_abs, tag = 'smem constant byte address 0x4 - core index']
  #allocation1 [shape = 'u32[144,128]{1,0:T(1,128)}', space=vmem, size = 0x12000, scoped, tag = 'internal scratch']
  %s0 = inlined_call_operand.vmem [shape: f32[160,16], index: 0, kind: input, shape index: {}]
  %s1 = inlined_call_operand.hbm [shape: f32[16,150], index: 1, kind: input, shape index: {}]
  %s2 = inlined_call_operand.hbm [shape: f32[1,150], index: 2, kind: input, shape index: {}]
  %s3 = inlined_call_operand.vmem [shape: f32[1,150], index: 3, kind: input, shape index: {}]
  %s4 = inlined_call_operand.vmem [shape: f32[1,150], index: 4, kind: input, shape index: {}]
  %s5 = inlined_call_operand.hbm [shape: f32[150,150], index: 5, kind: input, shape index: {}]
  %s6 = inlined_call_operand.hbm [shape: f32[1,150], index: 6, kind: input, shape index: {}]
  %s7 = inlined_call_operand.hbm [shape: f32[150,300], index: 7, kind: input, shape index: {}]
  %s8 = inlined_call_operand.hbm [shape: f32[1,300], index: 8, kind: input, shape index: {}]
  %s9 = inlined_call_operand.hbm [shape: f32[300,100], index: 9, kind: input, shape index: {}]
  %s10 = inlined_call_operand.hbm [shape: f32[1,100], index: 10, kind: input, shape index: {}]
  %s11 = inlined_call_operand.vmem [shape: f32[1,100], index: 11, kind: input, shape index: {}]
  %s12 = inlined_call_operand.vmem [shape: f32[1,100], index: 12, kind: input, shape index: {}]
  %s13 = inlined_call_operand.vmem [shape: f32[100,100], index: 13, kind: input, shape index: {}]
  %s14 = inlined_call_operand.hbm [shape: f32[1,100], index: 14, kind: input, shape index: {}]
  %s15 = inlined_call_operand.vmem [shape: f32[100,50], index: 15, kind: input, shape index: {}]
  %s16 = inlined_call_operand.vmem [shape: f32[1,50], index: 16, kind: input, shape index: {}]
  %s17 = inlined_call_operand.hbm [shape: f32[50,10], index: 17, kind: input, shape index: {}]
  %s18 = inlined_call_operand.vmem [shape: f32[1,10], index: 18, kind: input, shape index: {}]
  %s19 = inlined_call_operand.vmem [shape: f32[1,10], index: 19, kind: input, shape index: {}]
  %s20 = inlined_call_operand.vmem [shape: f32[1,10], index: 20, kind: input, shape index: {}]
  %s21 = inlined_call_operand.hbm [shape: f32[10,10], index: 21, kind: input, shape index: {}]
  %s22 = inlined_call_operand.vmem [shape: f32[1,10], index: 22, kind: input, shape index: {}]
  %s23 = inlined_call_operand.vmem [shape: f32[10,4], index: 23, kind: input, shape index: {}]
  %s24 = inlined_call_operand.vmem [shape: f32[1,4], index: 24, kind: input, shape index: {}]
  %s25 = inlined_call_operand.vmem [shape: f32[160,4], index: 25, kind: output, shape index: {}]
  %s26 = sld [smem:[#allocation0]]
  $region154: #{_lambda_.1} parent=0
    _
  %s28 = ssub.s32 1, %s26
  %s29 = scalar_select 0, %s28, %s26
  $region1: #{_lambda_.1} parent=0
    #allocation2 [shape = 'u8[16384]{0}', space=vmem, size = 0x4000, scoped, tag = 'input window, operand 1, single buffered']
    #allocation3 [shape = 's32[1]{0}', space=sflag, size = 0x4, scoped, tag = 'scoped memory for _lambda_.1']
    #allocation4 [shape = 'u8[1024]{0}', space=vmem, size = 0x400, scoped, tag = 'input window, operand 2, single buffered']
    #allocation5 [shape = 's32[1]{0}', space=sflag, size = 0x4, scoped, tag = 'scoped memory for _lambda_.1']
    #allocation6 [shape = 'u8[155648]{0}', space=vmem, size = 0x26000, scoped, tag = 'input window, operand 5, single buffered']
    #allocation7 [shape = 'u8[1024]{0}', space=vmem, size = 0x400, scoped, tag = 'input window, operand 6, single buffered']
    #allocation8 [shape = 's32[1]{0}', space=sflag, size = 0x4, scoped, tag = 'scoped memory for _lambda_.1']
    #allocation9 [shape = 'u8[233472]{0}', space=vmem, size = 0x39000, scoped, tag = 'input window, operand 7, single buffered']
    #allocation10 [shape = 'u8[1536]{0}', space=vmem, size = 0x800, scoped, tag = 'input window, operand 8, single buffered']
    #allocation11 [shape = 's32[1]{0}', space=sflag, size = 0x4, scoped, tag = 'scoped memory for _lambda_.1']
    #allocation12 [shape = 'u8[155648]{0}', space=vmem, size = 0x26000, scoped, tag = 'input window, operand 9, single buffered']
    #allocation13 [shape = 'u8[512]{0}', space=vmem, size = 0x400, scoped, tag = 'input window, operand 10, single buffered']
    #allocation14 [shape = 's32[1]{0}', space=sflag, size = 0x4, scoped, tag = 'scoped memory for _lambda_.1']
    #allocation15 [shape = 'u8[512]{0}', space=vmem, size = 0x400, scoped, tag = 'input window, operand 14, single buffered']
    #allocation16 [shape = 'u8[28672]{0}', space=vmem, size = 0x7000, scoped, tag = 'input window, operand 17, single buffered']
    #allocation17 [shape = 's32[1]{0}', space=sflag, size = 0x4, scoped, tag = 'scoped memory for _lambda_.1']
    #allocation18 [shape = 'u8[8192]{0}', space=vmem, size = 0x2000, scoped, tag = 'input window, operand 21, single buffered']
    %30 = vsyncpa [#allocation3], 0
    %31 = vsyncpa [#allocation5], 0
    %32 = vsyncpa [#allocation8], 0
    %33 = vsyncpa [#allocation11], 0
    %34 = vsyncpa [#allocation14], 0
    %35 = vsyncpa [#allocation17], 0
    // Predicated region
    $region2: #{_lambda_.1} parent=1 // pred_check
      _
    $region3: #{_lambda_.1} parent=1 // pred_check_branch
      %37 = sbr.rel (0) target = $region5
    $region4: #{_lambda_.1} parent=1 // pred_region
      _
    $region5: #{_lambda_.1} parent=1 // pred_fallthru
      _
    // Predicated region
    $region6: #{_lambda_.1} parent=1 // pred_check
      _
    $region7: #{_lambda_.1} parent=1 // pred_check_branch
      %39 = sbr.rel (0) target = $region9
    $region8: #{_lambda_.1} parent=1 // pred_region
      %s41 = ssub.s32 512, 512
      %42 = vsyncadd [#allocation3], %s41
      %s43 = sshll.u32 [#allocation2], 4
      %s44 = int_to_ptr.vmem [resolvable:$true] %s43
      %49 = dma.hbm_to_vmem [thread:$0]  %s1, 512, %s44, [#allocation3], 256, 256, 16
    $region9: #{_lambda_.1} parent=1 // pred_fallthru
      _
    // Predicated region
    $region10: #{_lambda_.1} parent=1 // pred_check
      _
    $region11: #{_lambda_.1} parent=1 // pred_check_branch
      %51 = sbr.rel (0) target = $region13
    $region12: #{_lambda_.1} parent=1 // pred_region
      %s53 = ssub.s32 32, 32
      %54 = vsyncadd [#allocation5], %s53
      %s56 = sshll.u32 [#allocation4], 4
      %s57 = int_to_ptr.vmem [resolvable:$true] %s56
      %59 = dma.hbm_to_vmem [thread:$0]  %s2, 32, %s57, [#allocation5]
    $region13: #{_lambda_.1} parent=1 // pred_fallthru
      _
    // Predicated region
    $region14: #{_lambda_.1} parent=1 // pred_check
      _
    $region15: #{_lambda_.1} parent=1 // pred_check_branch
      %61 = sbr.rel (0) target = $region17
    $region16: #{_lambda_.1} parent=1 // pred_region
      _
    $region17: #{_lambda_.1} parent=1 // pred_fallthru
      _
    // Predicated region
    $region18: #{_lambda_.1} parent=1 // pred_check
      _
    $region19: #{_lambda_.1} parent=1 // pred_check_branch
      %63 = sbr.rel (0) target = $region21
    $region20: #{_lambda_.1} parent=1 // pred_region
      _
    $region21: #{_lambda_.1} parent=1 // pred_fallthru
      _
    // Predicated region
    $region22: #{_lambda_.1} parent=1 // pred_check
      _
    $region23: #{_lambda_.1} parent=1 // pred_check_branch
      %65 = sbr.rel (0) target = $region25
    $region24: #{_lambda_.1} parent=1 // pred_region
      %s67 = ssub.s32 4864, 4864
      %68 = vsyncadd [#allocation5], %s67
      %s69 = sshll.u32 [#allocation6], 4
      %s70 = int_to_ptr.vmem [resolvable:$true] %s69
      %75 = dma.hbm_to_vmem [thread:$0]  %s5, 4864, %s70, [#allocation5], 256, 256, 16
    $region25: #{_lambda_.1} parent=1 // pred_fallthru
      _
    // Predicated region
    $region26: #{_lambda_.1} parent=1 // pred_check
      _
    $region27: #{_lambda_.1} parent=1 // pred_check_branch
      %77 = sbr.rel (0) target = $region29
    $region28: #{_lambda_.1} parent=1 // pred_region
      %s79 = ssub.s32 32, 32
      %80 = vsyncadd [#allocation8], %s79
      %s82 = sshll.u32 [#allocation7], 4
      %s83 = int_to_ptr.vmem [resolvable:$true] %s82
      %85 = dma.hbm_to_vmem [thread:$0]  %s6, 32, %s83, [#allocation8]
    $region29: #{_lambda_.1} parent=1 // pred_fallthru
      _
    // Predicated region
    $region30: #{_lambda_.1} parent=1 // pred_check
      _
    $region31: #{_lambda_.1} parent=1 // pred_check_branch
      %87 = sbr.rel (0) target = $region33
    $region32: #{_lambda_.1} parent=1 // pred_region
      %s89 = ssub.s32 7296, 7296
      %90 = vsyncadd [#allocation8], %s89
      %s91 = sshll.u32 [#allocation9], 4
      %s92 = int_to_ptr.vmem [resolvable:$true] %s91
      %97 = dma.hbm_to_vmem [thread:$0]  %s7, 7296, %s92, [#allocation8], 384, 384, 24
    $region33: #{_lambda_.1} parent=1 // pred_fallthru
      _
    // Predicated region
    $region34: #{_lambda_.1} parent=1 // pred_check
      _
    $region35: #{_lambda_.1} parent=1 // pred_check_branch
      %99 = sbr.rel (0) target = $region37
    $region36: #{_lambda_.1} parent=1 // pred_region
      %s101 = ssub.s32 48, 48
      %102 = vsyncadd [#allocation11], %s101
      %s104 = sshll.u32 [#allocation10], 4
      %s105 = int_to_ptr.vmem [resolvable:$true] %s104
      %107 = dma.hbm_to_vmem [thread:$0]  %s8, 48, %s105, [#allocation11]
    $region37: #{_lambda_.1} parent=1 // pred_fallthru
      _
    // Predicated region
    $region38: #{_lambda_.1} parent=1 // pred_check
      _
    $region39: #{_lambda_.1} parent=1 // pred_check_branch
      %109 = sbr.rel (0) target = $region41
    $region40: #{_lambda_.1} parent=1 // pred_region
      %s111 = ssub.s32 4864, 4864
      %112 = vsyncadd [#allocation11], %s111
      %s113 = sshll.u32 [#allocation12], 4
      %s114 = int_to_ptr.vmem [resolvable:$true] %s113
      %119 = dma.hbm_to_vmem [thread:$0]  %s9, 4864, %s114, [#allocation11], 128, 128, 8
    $region41: #{_lambda_.1} parent=1 // pred_fallthru
      _
    // Predicated region
    $region42: #{_lambda_.1} parent=1 // pred_check
      _
    $region43: #{_lambda_.1} parent=1 // pred_check_branch
      %121 = sbr.rel (0) target = $region45
    $region44: #{_lambda_.1} parent=1 // pred_region
      %s123 = ssub.s32 16, 16
      %124 = vsyncadd [#allocation14], %s123
      %s126 = sshll.u32 [#allocation13], 4
      %s127 = int_to_ptr.vmem [resolvable:$true] %s126
      %129 = dma.hbm_to_vmem [thread:$0]  %s10, 16, %s127, [#allocation14]
    $region45: #{_lambda_.1} parent=1 // pred_fallthru
      _
    // Predicated region
    $region46: #{_lambda_.1} parent=1 // pred_check
      _
    $region47: #{_lambda_.1} parent=1 // pred_check_branch
      %131 = sbr.rel (0) target = $region49
    $region48: #{_lambda_.1} parent=1 // pred_region
      _
    $region49: #{_lambda_.1} parent=1 // pred_fallthru
      _
    // Predicated region
    $region50: #{_lambda_.1} parent=1 // pred_check
      _
    $region51: #{_lambda_.1} parent=1 // pred_check_branch
      %133 = sbr.rel (0) target = $region53
    $region52: #{_lambda_.1} parent=1 // pred_region
      _
    $region53: #{_lambda_.1} parent=1 // pred_fallthru
      _
    // Predicated region
    $region54: #{_lambda_.1} parent=1 // pred_check
      _
    $region55: #{_lambda_.1} parent=1 // pred_check_branch
      %135 = sbr.rel (0) target = $region57
    $region56: #{_lambda_.1} parent=1 // pred_region
      _
    $region57: #{_lambda_.1} parent=1 // pred_fallthru
      _
    // Predicated region
    $region58: #{_lambda_.1} parent=1 // pred_check
      _
    $region59: #{_lambda_.1} parent=1 // pred_check_branch
      %137 = sbr.rel (0) target = $region61
    $region60: #{_lambda_.1} parent=1 // pred_region
      %s139 = ssub.s32 16, 16
      %140 = vsyncadd [#allocation14], %s139
      %s142 = sshll.u32 [#allocation15], 4
      %s143 = int_to_ptr.vmem [resolvable:$true] %s142
      %145 = dma.hbm_to_vmem [thread:$0]  %s14, 16, %s143, [#allocation14]
    $region61: #{_lambda_.1} parent=1 // pred_fallthru
      _
    // Predicated region
    $region62: #{_lambda_.1} parent=1 // pred_check
      _
    $region63: #{_lambda_.1} parent=1 // pred_check_branch
      %147 = sbr.rel (0) target = $region65
    $region64: #{_lambda_.1} parent=1 // pred_region
      _
    $region65: #{_lambda_.1} parent=1 // pred_fallthru
      _
    // Predicated region
    $region66: #{_lambda_.1} parent=1 // pred_check
      _
    $region67: #{_lambda_.1} parent=1 // pred_check_branch
      %149 = sbr.rel (0) target = $region69
    $region68: #{_lambda_.1} parent=1 // pred_region
      _
    $region69: #{_lambda_.1} parent=1 // pred_fallthru
      _
    // Predicated region
    $region70: #{_lambda_.1} parent=1 // pred_check
      _
    $region71: #{_lambda_.1} parent=1 // pred_check_branch
      %151 = sbr.rel (0) target = $region73
    $region72: #{_lambda_.1} parent=1 // pred_region
      %s153 = ssub.s32 896, 896
      %154 = vsyncadd [#allocation17], %s153
      %s155 = sshll.u32 [#allocation16], 4
      %s156 = int_to_ptr.vmem [resolvable:$true] %s155
      %161 = dma.hbm_to_vmem [thread:$0]  %s17, 896, %s156, [#allocation17], 128, 128, 8
    $region73: #{_lambda_.1} parent=1 // pred_fallthru
      _
    // Predicated region
    $region74: #{_lambda_.1} parent=1 // pred_check
      _
    $region75: #{_lambda_.1} parent=1 // pred_check_branch
      %163 = sbr.rel (0) target = $region77
    $region76: #{_lambda_.1} parent=1 // pred_region
      _
    $region77: #{_lambda_.1} parent=1 // pred_fallthru
      _
    // Predicated region
    $region78: #{_lambda_.1} parent=1 // pred_check
      _
    $region79: #{_lambda_.1} parent=1 // pred_check_branch
      %165 = sbr.rel (0) target = $region81
    $region80: #{_lambda_.1} parent=1 // pred_region
      _
    $region81: #{_lambda_.1} parent=1 // pred_fallthru
      _
    // Predicated region
    $region82: #{_lambda_.1} parent=1 // pred_check
      _
    $region83: #{_lambda_.1} parent=1 // pred_check_branch
      %167 = sbr.rel (0) target = $region85
    $region84: #{_lambda_.1} parent=1 // pred_region
      _
    $region85: #{_lambda_.1} parent=1 // pred_fallthru
      _
    // Predicated region
    $region86: #{_lambda_.1} parent=1 // pred_check
      _
    $region87: #{_lambda_.1} parent=1 // pred_check_branch
      %169 = sbr.rel (0) target = $region89
    $region88: #{_lambda_.1} parent=1 // pred_region
      %s171 = ssub.s32 256, 256
      %172 = vsyncadd [#allocation17], %s171
      %s173 = sshll.u32 [#allocation18], 4
      %s174 = int_to_ptr.vmem [resolvable:$true] %s173
      %179 = dma.hbm_to_vmem [thread:$0]  %s21, 256, %s174, [#allocation17], 128, 128, 8
    $region89: #{_lambda_.1} parent=1 // pred_fallthru
      _
    // Predicated region
    $region90: #{_lambda_.1} parent=1 // pred_check
      _
    $region91: #{_lambda_.1} parent=1 // pred_check_branch
      %181 = sbr.rel (0) target = $region93
    $region92: #{_lambda_.1} parent=1 // pred_region
      _
    $region93: #{_lambda_.1} parent=1 // pred_fallthru
      _
    // Predicated region
    $region94: #{_lambda_.1} parent=1 // pred_check
      _
    $region95: #{_lambda_.1} parent=1 // pred_check_branch
      %183 = sbr.rel (0) target = $region97
    $region96: #{_lambda_.1} parent=1 // pred_region
      _
    $region97: #{_lambda_.1} parent=1 // pred_fallthru
      _
    // Predicated region
    $region98: #{_lambda_.1} parent=1 // pred_check
      _
    $region99: #{_lambda_.1} parent=1 // pred_check_branch
      %185 = sbr.rel (0) target = $region101
    $region100: #{_lambda_.1} parent=1 // pred_region
      _
    $region101: #{_lambda_.1} parent=1 // pred_fallthru
      _
    // Predicated region
    $region102: #{_lambda_.1} parent=1 // pred_check
      _
    $region103: #{_lambda_.1} parent=1 // pred_check_branch
      %187 = sbr.rel (0) target = $region105
    $region104: #{_lambda_.1} parent=1 // pred_region
      %188 = dma.done [#allocation3], 512
    $region105: #{_lambda_.1} parent=1 // pred_fallthru
      _
    // Predicated region
    $region106: #{_lambda_.1} parent=1 // pred_check
      _
    $region107: #{_lambda_.1} parent=1 // pred_check_branch
      %190 = sbr.rel (0) target = $region109
    $region108: #{_lambda_.1} parent=1 // pred_region
      %191 = dma.done [#allocation5], 32
    $region109: #{_lambda_.1} parent=1 // pred_fallthru
      _
    // Predicated region
    $region110: #{_lambda_.1} parent=1 // pred_check
      _
    $region111: #{_lambda_.1} parent=1 // pred_check_branch
      %193 = sbr.rel (0) target = $region113
    $region112: #{_lambda_.1} parent=1 // pred_region
      %194 = dma.done [#allocation5], 4864
    $region113: #{_lambda_.1} parent=1 // pred_fallthru
      _
    // Predicated region
    $region114: #{_lambda_.1} parent=1 // pred_check
      _
    $region115: #{_lambda_.1} parent=1 // pred_check_branch
      %196 = sbr.rel (0) target = $region117
    $region116: #{_lambda_.1} parent=1 // pred_region
      %197 = dma.done [#allocation8], 32
    $region117: #{_lambda_.1} parent=1 // pred_fallthru
      _
    // Predicated region
    $region118: #{_lambda_.1} parent=1 // pred_check
      _
    $region119: #{_lambda_.1} parent=1 // pred_check_branch
      %199 = sbr.rel (0) target = $region121
    $region120: #{_lambda_.1} parent=1 // pred_region
      %200 = dma.done [#allocation8], 7296
    $region121: #{_lambda_.1} parent=1 // pred_fallthru
      _
    // Predicated region
    $region122: #{_lambda_.1} parent=1 // pred_check
      _
    $region123: #{_lambda_.1} parent=1 // pred_check_branch
      %202 = sbr.rel (0) target = $region125
    $region124: #{_lambda_.1} parent=1 // pred_region
      %203 = dma.done [#allocation11], 48
    $region125: #{_lambda_.1} parent=1 // pred_fallthru
      _
    // Predicated region
    $region126: #{_lambda_.1} parent=1 // pred_check
      _
    $region127: #{_lambda_.1} parent=1 // pred_check_branch
      %205 = sbr.rel (0) target = $region129
    $region128: #{_lambda_.1} parent=1 // pred_region
      %206 = dma.done [#allocation11], 4864
    $region129: #{_lambda_.1} parent=1 // pred_fallthru
      _
    // Predicated region
    $region130: #{_lambda_.1} parent=1 // pred_check
      _
    $region131: #{_lambda_.1} parent=1 // pred_check_branch
      %208 = sbr.rel (0) target = $region133
    $region132: #{_lambda_.1} parent=1 // pred_region
      %209 = dma.done [#allocation14], 16
    $region133: #{_lambda_.1} parent=1 // pred_fallthru
      _
    // Predicated region
    $region134: #{_lambda_.1} parent=1 // pred_check
      _
    $region135: #{_lambda_.1} parent=1 // pred_check_branch
      %211 = sbr.rel (0) target = $region137
    $region136: #{_lambda_.1} parent=1 // pred_region
      %212 = dma.done [#allocation14], 16
    $region137: #{_lambda_.1} parent=1 // pred_fallthru
      _
    // Predicated region
    $region138: #{_lambda_.1} parent=1 // pred_check
      _
    $region139: #{_lambda_.1} parent=1 // pred_check_branch
      %214 = sbr.rel (0) target = $region141
    $region140: #{_lambda_.1} parent=1 // pred_region
      %215 = dma.done [#allocation17], 896
    $region141: #{_lambda_.1} parent=1 // pred_fallthru
      _
    // Predicated region
    $region142: #{_lambda_.1} parent=1 // pred_check
      _
    $region143: #{_lambda_.1} parent=1 // pred_check_branch
      %217 = sbr.rel (0) target = $region145
    $region144: #{_lambda_.1} parent=1 // pred_region
      %218 = dma.done [#allocation17], 256
    $region145: #{_lambda_.1} parent=1 // pred_fallthru
      _
    %v219 = vld [vmem:[%s0] sm:$0xff]
    %v220 = vld [vmem:[%s0 + $0x8] sm:$0xff]
    %v221 = vld [vmem:[%s0 + $0x10] sm:$0xff]
    %v222 = vld [vmem:[%s0 + $0x18] sm:$0xff]
    %v223 = vld [vmem:[%s0 + $0x20] sm:$0xff]
    %v224 = vld [vmem:[%s0 + $0x28] sm:$0xff]
    %v225 = vld [vmem:[%s0 + $0x30] sm:$0xff]
    %v226 = vld [vmem:[%s0 + $0x38] sm:$0xff]
    %v227 = vld [vmem:[%s0 + $0x40] sm:$0xff]
    %v228 = vld [vmem:[%s0 + $0x48] sm:$0xff]
    %v229 = vld [vmem:[%s0 + $0x50] sm:$0xff]
    %v230 = vld [vmem:[%s0 + $0x58] sm:$0xff]
    %v231 = vld [vmem:[%s0 + $0x60] sm:$0xff]
    %v232 = vld [vmem:[%s0 + $0x68] sm:$0xff]
    %v233 = vld [vmem:[%s0 + $0x70] sm:$0xff]
    %v234 = vld [vmem:[%s0 + $0x78] sm:$0xff]
    %v235 = vld [vmem:[%s0 + $0x80] sm:$0xff]
    %v236 = vld [vmem:[%s0 + $0x88] sm:$0xff]
    %v237 = vld [vmem:[%s0 + $0x90] sm:$0xff]
    %v238 = vld [vmem:[%s0 + $0x98] sm:$0xff]
    %v239 = vlaneseq
    %v240 = vshrl.u32 %v239, 7
    %v241 = vadd.s32 %v240, 8
    %v242 = vadd.s32 %v240, 16
    %v243 = vadd.s32 %v240, 24
    %v244 = vadd.s32 %v240, 32
    %v245 = vadd.s32 %v240, 40
    %v246 = vadd.s32 %v240, 48
    %v247 = vadd.s32 %v240, 56
    %v248 = vadd.s32 %v240, 64
    %v249 = vadd.s32 %v240, 72
    %v250 = vadd.s32 %v240, 80
    %v251 = vadd.s32 %v240, 88
    %v252 = vadd.s32 %v240, 96
    %v253 = vadd.s32 %v240, 104
    %v254 = vadd.s32 %v240, 112
    %v255 = vadd.s32 %v240, 120
    %v256 = vadd.s32 %v240, 128
    %v257 = vadd.s32 %v240, 136
    %v258 = vadd.s32 %v240, 144
    %v259 = vadd.s32 %v240, 152
    %vm260 = vcmp.lt.s32.totalorder %v240, 160
    %vm261 = vcmp.lt.s32.totalorder %v241, 160
    %vm262 = vcmp.lt.s32.totalorder %v242, 160
    %vm263 = vcmp.lt.s32.totalorder %v243, 160
    %vm264 = vcmp.lt.s32.totalorder %v244, 160
    %vm265 = vcmp.lt.s32.totalorder %v245, 160
    %vm266 = vcmp.lt.s32.totalorder %v246, 160
    %vm267 = vcmp.lt.s32.totalorder %v247, 160
    %vm268 = vcmp.lt.s32.totalorder %v248, 160
    %vm269 = vcmp.lt.s32.totalorder %v249, 160
    %vm270 = vcmp.lt.s32.totalorder %v250, 160
    %vm271 = vcmp.lt.s32.totalorder %v251, 160
    %vm272 = vcmp.lt.s32.totalorder %v252, 160
    %vm273 = vcmp.lt.s32.totalorder %v253, 160
    %vm274 = vcmp.lt.s32.totalorder %v254, 160
    %vm275 = vcmp.lt.s32.totalorder %v255, 160
    %vm276 = vcmp.lt.s32.totalorder %v256, 160
    %vm277 = vcmp.lt.s32.totalorder %v257, 160
    %vm278 = vcmp.lt.s32.totalorder %v258, 160
    %vm279 = vcmp.lt.s32.totalorder %v259, 160
    %v280 = vsel %vm260, 1, 0
    %v281 = vsel %vm261, 1, 0
    %v282 = vsel %vm262, 1, 0
    %v283 = vsel %vm263, 1, 0
    %v284 = vsel %vm264, 1, 0
    %v285 = vsel %vm265, 1, 0
    %v286 = vsel %vm266, 1, 0
    %v287 = vsel %vm267, 1, 0
    %v288 = vsel %vm268, 1, 0
    %v289 = vsel %vm269, 1, 0
    %v290 = vsel %vm270, 1, 0
    %v291 = vsel %vm271, 1, 0
    %v292 = vsel %vm272, 1, 0
    %v293 = vsel %vm273, 1, 0
    %v294 = vsel %vm274, 1, 0
    %v295 = vsel %vm275, 1, 0
    %v296 = vsel %vm276, 1, 0
    %v297 = vsel %vm277, 1, 0
    %v298 = vsel %vm278, 1, 0
    %v299 = vsel %vm279, 1, 0
    %v300 = vcvt.s32.f32 %v280
    %v301 = vcvt.s32.f32 %v281
    %v302 = vcvt.s32.f32 %v282
    %v303 = vcvt.s32.f32 %v283
    %v304 = vcvt.s32.f32 %v284
    %v305 = vcvt.s32.f32 %v285
    %v306 = vcvt.s32.f32 %v286
    %v307 = vcvt.s32.f32 %v287
    %v308 = vcvt.s32.f32 %v288
    %v309 = vcvt.s32.f32 %v289
    %v310 = vcvt.s32.f32 %v290
    %v311 = vcvt.s32.f32 %v291
    %v312 = vcvt.s32.f32 %v292
    %v313 = vcvt.s32.f32 %v293
    %v314 = vcvt.s32.f32 %v294
    %v315 = vcvt.s32.f32 %v295
    %v316 = vcvt.s32.f32 %v296
    %v317 = vcvt.s32.f32 %v297
    %v318 = vcvt.s32.f32 %v298
    %v319 = vcvt.s32.f32 %v299
    %v320 = vmul.f32 %v219, %v300
    %v321 = vmul.f32 %v220, %v301
    %v322 = vmul.f32 %v221, %v302
    %v323 = vmul.f32 %v222, %v303
    %v324 = vmul.f32 %v223, %v304
    %v325 = vmul.f32 %v224, %v305
    %v326 = vmul.f32 %v225, %v306
    %v327 = vmul.f32 %v226, %v307
    %v328 = vmul.f32 %v227, %v308
    %v329 = vmul.f32 %v228, %v309
    %v330 = vmul.f32 %v229, %v310
    %v331 = vmul.f32 %v230, %v311
    %v332 = vmul.f32 %v231, %v312
    %v333 = vmul.f32 %v232, %v313
    %v334 = vmul.f32 %v233, %v314
    %v335 = vmul.f32 %v234, %v315
    %v336 = vmul.f32 %v235, %v316
    %v337 = vmul.f32 %v236, %v317
    %v338 = vmul.f32 %v237, %v318
    %v339 = vmul.f32 %v238, %v319
    %vm340 = vcmask 130048
    %v341 = vsel %vm340, %v320, 0.0
    %v342 = vsel %vm340, %v321, 0.0
    %v343 = vadd.f32 %v341, %v342
    %v344 = vsel %vm340, %v322, 0.0
    %v345 = vadd.f32 %v343, %v344
    %v346 = vsel %vm340, %v323, 0.0
    %v347 = vadd.f32 %v345, %v346
    %v348 = vsel %vm340, %v324, 0.0
    %v349 = vadd.f32 %v347, %v348
    %v350 = vsel %vm340, %v325, 0.0
    %v351 = vadd.f32 %v349, %v350
    %v352 = vsel %vm340, %v326, 0.0
    %v353 = vadd.f32 %v351, %v352
    %v354 = vsel %vm340, %v327, 0.0
    %v355 = vadd.f32 %v353, %v354
    %v356 = vsel %vm340, %v328, 0.0
    %v357 = vadd.f32 %v355, %v356
    %v358 = vsel %vm340, %v329, 0.0
    %v359 = vadd.f32 %v357, %v358
    %v360 = vsel %vm340, %v330, 0.0
    %v361 = vadd.f32 %v359, %v360
    %v362 = vsel %vm340, %v331, 0.0
    %v363 = vadd.f32 %v361, %v362
    %v364 = vsel %vm340, %v332, 0.0
    %v365 = vadd.f32 %v363, %v364
    %v366 = vsel %vm340, %v333, 0.0
    %v367 = vadd.f32 %v365, %v366
    %v368 = vsel %vm340, %v334, 0.0
    %v369 = vadd.f32 %v367, %v368
    %v370 = vsel %vm340, %v335, 0.0
    %v371 = vadd.f32 %v369, %v370
    %v372 = vsel %vm340, %v336, 0.0
    %v373 = vadd.f32 %v371, %v372
    %v374 = vsel %vm340, %v337, 0.0
    %v375 = vadd.f32 %v373, %v374
    %v376 = vsel %vm340, %v338, 0.0
    %v377 = vadd.f32 %v375, %v376
    %v378 = vsel %vm340, %v339, 0.0
    %v379 = vadd.f32 %v377, %v378
    %v380 = vrot.slane %v379, 4
    %v381 = vadd.f32 %v379, %v380
    %v382 = vrot.slane %v381, 2
    %v383 = vadd.f32 %v381, %v382
    %v384 = vrot.slane %v383, 1
    %v385 = vadd.f32 %v383, %v384
    %v386 = vmul.f32 %v385, 0.00625
    %v387 = vsub.f32 %v219, %v386
    %v388 = vsub.f32 %v220, %v386
    %v389 = vsub.f32 %v221, %v386
    %v390 = vsub.f32 %v222, %v386
    %v391 = vsub.f32 %v223, %v386
    %v392 = vsub.f32 %v224, %v386
    %v393 = vsub.f32 %v225, %v386
    %v394 = vsub.f32 %v226, %v386
    %v395 = vsub.f32 %v227, %v386
    %v396 = vsub.f32 %v228, %v386
    %v397 = vsub.f32 %v229, %v386
    %v398 = vsub.f32 %v230, %v386
    %v399 = vsub.f32 %v231, %v386
    %v400 = vsub.f32 %v232, %v386
    %v401 = vsub.f32 %v233, %v386
    %v402 = vsub.f32 %v234, %v386
    %v403 = vsub.f32 %v235, %v386
    %v404 = vsub.f32 %v236, %v386
    %v405 = vsub.f32 %v237, %v386
    %v406 = vsub.f32 %v238, %v386
    %v407 = vmul.f32 %v387, %v300
    %v408 = vmul.f32 %v388, %v301
    %v409 = vmul.f32 %v389, %v302
    %v410 = vmul.f32 %v390, %v303
    %v411 = vmul.f32 %v391, %v304
    %v412 = vmul.f32 %v392, %v305
    %v413 = vmul.f32 %v393, %v306
    %v414 = vmul.f32 %v394, %v307
    %v415 = vmul.f32 %v395, %v308
    %v416 = vmul.f32 %v396, %v309
    %v417 = vmul.f32 %v397, %v310
    %v418 = vmul.f32 %v398, %v311
    %v419 = vmul.f32 %v399, %v312
    %v420 = vmul.f32 %v400, %v313
    %v421 = vmul.f32 %v401, %v314
    %v422 = vmul.f32 %v402, %v315
    %v423 = vmul.f32 %v403, %v316
    %v424 = vmul.f32 %v404, %v317
    %v425 = vmul.f32 %v405, %v318
    %v426 = vmul.f32 %v406, %v319
    %v427 = vmul.f32 %v407, %v407
    %v428 = vmul.f32 %v408, %v408
    %v429 = vmul.f32 %v409, %v409
    %v430 = vmul.f32 %v410, %v410
    %v431 = vmul.f32 %v411, %v411
    %v432 = vmul.f32 %v412, %v412
    %v433 = vmul.f32 %v413, %v413
    %v434 = vmul.f32 %v414, %v414
    %v435 = vmul.f32 %v415, %v415
    %v436 = vmul.f32 %v416, %v416
    %v437 = vmul.f32 %v417, %v417
    %v438 = vmul.f32 %v418, %v418
    %v439 = vmul.f32 %v419, %v419
    %v440 = vmul.f32 %v420, %v420
    %v441 = vmul.f32 %v421, %v421
    %v442 = vmul.f32 %v422, %v422
    %v443 = vmul.f32 %v423, %v423
    %v444 = vmul.f32 %v424, %v424
    %v445 = vmul.f32 %v425, %v425
    %v446 = vmul.f32 %v426, %v426
    %v447 = vsel %vm340, %v427, 0.0
    %v448 = vsel %vm340, %v428, 0.0
    %v449 = vadd.f32 %v447, %v448
    %v450 = vsel %vm340, %v429, 0.0
    %v451 = vadd.f32 %v449, %v450
    %v452 = vsel %vm340, %v430, 0.0
    %v453 = vadd.f32 %v451, %v452
    %v454 = vsel %vm340, %v431, 0.0
    %v455 = vadd.f32 %v453, %v454
    %v456 = vsel %vm340, %v432, 0.0
    %v457 = vadd.f32 %v455, %v456
    %v458 = vsel %vm340, %v433, 0.0
    %v459 = vadd.f32 %v457, %v458
    %v460 = vsel %vm340, %v434, 0.0
    %v461 = vadd.f32 %v459, %v460
    %v462 = vsel %vm340, %v435, 0.0
    %v463 = vadd.f32 %v461, %v462
    %v464 = vsel %vm340, %v436, 0.0
    %v465 = vadd.f32 %v463, %v464
    %v466 = vsel %vm340, %v437, 0.0
    %v467 = vadd.f32 %v465, %v466
    %v468 = vsel %vm340, %v438, 0.0
    %v469 = vadd.f32 %v467, %v468
    %v470 = vsel %vm340, %v439, 0.0
    %v471 = vadd.f32 %v469, %v470
    %v472 = vsel %vm340, %v440, 0.0
    %v473 = vadd.f32 %v471, %v472
    %v474 = vsel %vm340, %v441, 0.0
    %v475 = vadd.f32 %v473, %v474
    %v476 = vsel %vm340, %v442, 0.0
    %v477 = vadd.f32 %v475, %v476
    %v478 = vsel %vm340, %v443, 0.0
    %v479 = vadd.f32 %v477, %v478
    %v480 = vsel %vm340, %v444, 0.0
    %v481 = vadd.f32 %v479, %v480
    %v482 = vsel %vm340, %v445, 0.0
    %v483 = vadd.f32 %v481, %v482
    %v484 = vsel %vm340, %v446, 0.0
    %v485 = vadd.f32 %v483, %v484
    %v486 = vrot.slane %v485, 4
    %v487 = vadd.f32 %v485, %v486
    %v488 = vrot.slane %v487, 2
    %v489 = vadd.f32 %v487, %v488
    %v490 = vrot.slane %v489, 1
    %v491 = vadd.f32 %v489, %v490
    %v492 = vmul.f32 %v491, 0.00625
    %v493 = vadd.f32 %v492, 1e-05
    %v494 = vrsqrt.pop %v493
    %v495 = vmul.f32 %v387, %v494
    %v496 = vmul.f32 %v388, %v494
    %v497 = vmul.f32 %v389, %v494
    %v498 = vmul.f32 %v390, %v494
    %v499 = vmul.f32 %v391, %v494
    %v500 = vmul.f32 %v392, %v494
    %v501 = vmul.f32 %v393, %v494
    %v502 = vmul.f32 %v394, %v494
    %v503 = vmul.f32 %v395, %v494
    %v504 = vmul.f32 %v396, %v494
    %v505 = vmul.f32 %v397, %v494
    %v506 = vmul.f32 %v398, %v494
    %v507 = vmul.f32 %v399, %v494
    %v508 = vmul.f32 %v400, %v494
    %v509 = vmul.f32 %v401, %v494
    %v510 = vmul.f32 %v402, %v494
    %v511 = vmul.f32 %v403, %v494
    %v512 = vmul.f32 %v404, %v494
    %v513 = vmul.f32 %v405, %v494
    %v514 = vmul.f32 %v406, %v494
    %v515 = vld [vmem:[#allocation2] sm:$0xff]
    %v516 = vld [vmem:[#allocation2 + $0x8] sm:$0xff]
    %v517 = vld [vmem:[#allocation2 + $0x10] sm:$0xff]
    %v518 = vld [vmem:[#allocation2 + $0x18] sm:$0xff]
    %v519 = vld [vmem:[#allocation4] sm:$0x3]
    %v521 = vlaneseq
    %v522 = vshrl.u32 %v521, 7
    %v523 = vsub.s32 0, %v522
    %v524 = vrot.slane %v519, %v523
    %v525 = vlaneseq
    %v526 = vshrl.u32 %v525, 7
    %v527 = vsub.s32 1, %v526
    %v528 = vrot.slane %v519, %v527
    %v532 = vsel %vm340, %v495, 0
    %v535 = vsel %vm340, %v496, 0
    %v538 = vsel %vm340, %v497, 0
    %v541 = vsel %vm340, %v498, 0
    %v544 = vsel %vm340, %v499, 0
    %v547 = vsel %vm340, %v500, 0
    %v550 = vsel %vm340, %v501, 0
    %v553 = vsel %vm340, %v502, 0
    %v556 = vsel %vm340, %v503, 0
    %v559 = vsel %vm340, %v504, 0
    %v562 = vsel %vm340, %v505, 0
    %v565 = vsel %vm340, %v506, 0
    %v568 = vsel %vm340, %v507, 0
    %v571 = vsel %vm340, %v508, 0
    %v574 = vsel %vm340, %v509, 0
    %v577 = vsel %vm340, %v510, 0
    %v580 = vsel %vm340, %v511, 0
    %v583 = vsel %vm340, %v512, 0
    %v586 = vsel %vm340, %v513, 0
    %v589 = vsel %vm340, %v514, 0
    %591 = vmatprep.subr.mxu0 0.0
    %592 = vmatpush1.msra.mxu0 0.0
    %593 = vmatprep.subr.mxu0 0.0
    %594 = vmatpush1.msra.mxu0 0.0
    %595 = vmatprep.subr.mxu0 0.0
    %596 = vmatpush1.msra.mxu0 0.0
    %597 = vmatprep.subr.mxu0 0.0
    %598 = vmatpush1.msra.mxu0 0.0
    %599 = vmatprep.subr.mxu0 0.0
    %600 = vmatpush1.msra.mxu0 0.0
    %601 = vmatprep.subr.mxu0 0.0
    %602 = vmatpush1.msra.mxu0 0.0
    %603 = vmatprep.subr.mxu0 0.0
    %604 = vmatpush1.msra.mxu0 0.0
    %605 = vmatprep.subr.mxu0 0.0
    %606 = vmatpush1.msra.mxu0 0.0
    %607 = vmatprep.subr.mxu0 0.0
    %608 = vmatpush1.msra.mxu0 0.0
    %609 = vmatprep.subr.mxu0 0.0
    %610 = vmatpush1.msra.mxu0 0.0
    %611 = vmatprep.subr.mxu0 0.0
    %612 = vmatpush1.msra.mxu0 0.0
    %613 = vmatprep.subr.mxu0 0.0
    %614 = vmatpush1.msra.mxu0 0.0
    %615 = vmatprep.subr.mxu0 0.0
    %616 = vmatpush1.msra.mxu0 0.0
    %617 = vmatprep.subr.mxu0 0.0
    %618 = vmatpush1.msra.mxu0 0.0
    %619 = vmatprep.subr.mxu0 %v518
    %620 = vmatpush1.msra.mxu0 %v517
    %621 = vmatprep.subr.mxu0 %v516
    %622 = vmatpush1.msra.mxu0 %v515
    %623 = vmatprep.subr.mxu0 0.0
    %624 = vmatpush2.msra.mxu0 0.0
    %625 = vmatprep.subr.mxu0 0.0
    %626 = vmatpush2.msra.mxu0 0.0
    %627 = vmatprep.subr.mxu0 0.0
    %628 = vmatpush2.msra.mxu0 0.0
    %629 = vmatprep.subr.mxu0 0.0
    %630 = vmatpush2.msra.mxu0 0.0
    %631 = vmatprep.subr.mxu0 0.0
    %632 = vmatpush2.msra.mxu0 0.0
    %633 = vmatprep.subr.mxu0 0.0
    %634 = vmatpush2.msra.mxu0 0.0
    %635 = vmatprep.subr.mxu0 0.0
    %636 = vmatpush2.msra.mxu0 0.0
    %637 = vmatprep.subr.mxu0 0.0
    %638 = vmatpush2.msra.mxu0 0.0
    %639 = vmatprep.subr.mxu0 0.0
    %640 = vmatpush2.msra.mxu0 0.0
    %641 = vmatprep.subr.mxu0 0.0
    %642 = vmatpush2.msra.mxu0 0.0
    %643 = vmatprep.subr.mxu0 0.0
    %644 = vmatpush2.msra.mxu0 0.0
    %645 = vmatprep.subr.mxu0 0.0
    %646 = vmatpush2.msra.mxu0 0.0
    %647 = vmatprep.subr.mxu0 0.0
    %648 = vmatpush2.msra.mxu0 0.0
    %649 = vmatprep.subr.mxu0 0.0
    %650 = vmatpush2.msra.mxu0 0.0
    %651 = vmatprep.subr.mxu0 0.0
    %652 = vmatpush2.msra.mxu0 0.0
    %653 = vmatprep.subr.mxu0 0.0
    %654 = vmatpush2.msra.mxu0 0.0
    %655 = vmatprep.mubr.f32.mxu0 0.0
    %656 = vmatmul.mubr.f32.gmra.mxu0 %v532
    %v657 = vpop.f32.mrf.mxu0
    %v658 = vadd.f32 %v524, %v657
    %v659 = vpop.f32.mrf.mxu0
    %v660 = vadd.f32 %v528, %v659
    %661 = vmatprep.mubr.f32.mxu0 0.0
    %662 = vmatmul.mubr.f32.gmra.mxu0 %v535
    %v663 = vpop.f32.mrf.mxu0
    %v664 = vadd.f32 %v524, %v663
    %v665 = vpop.f32.mrf.mxu0
    %v666 = vadd.f32 %v528, %v665
    %667 = vmatprep.mubr.f32.mxu0 0.0
    %668 = vmatmul.mubr.f32.gmra.mxu0 %v538
    %v669 = vpop.f32.mrf.mxu0
    %v670 = vadd.f32 %v524, %v669
    %v671 = vpop.f32.mrf.mxu0
    %v672 = vadd.f32 %v528, %v671
    %673 = vmatprep.mubr.f32.mxu0 0.0
    %674 = vmatmul.mubr.f32.gmra.mxu0 %v541
    %v675 = vpop.f32.mrf.mxu0
    %v676 = vadd.f32 %v524, %v675
    %v677 = vpop.f32.mrf.mxu0
    %v678 = vadd.f32 %v528, %v677
    %679 = vmatprep.mubr.f32.mxu0 0.0
    %680 = vmatmul.mubr.f32.gmra.mxu0 %v544
    %v681 = vpop.f32.mrf.mxu0
    %v682 = vadd.f32 %v524, %v681
    %v683 = vpop.f32.mrf.mxu0
    %v684 = vadd.f32 %v528, %v683
    %685 = vmatprep.mubr.f32.mxu0 0.0
    %686 = vmatmul.mubr.f32.gmra.mxu0 %v547
    %v687 = vpop.f32.mrf.mxu0
    %v688 = vadd.f32 %v524, %v687
    %v689 = vpop.f32.mrf.mxu0
    %v690 = vadd.f32 %v528, %v689
    %691 = vmatprep.mubr.f32.mxu0 0.0
    %692 = vmatmul.mubr.f32.gmra.mxu0 %v550
    %v693 = vpop.f32.mrf.mxu0
    %v694 = vadd.f32 %v524, %v693
    %v695 = vpop.f32.mrf.mxu0
    %v696 = vadd.f32 %v528, %v695
    %697 = vmatprep.mubr.f32.mxu0 0.0
    %698 = vmatmul.mubr.f32.gmra.mxu0 %v553
    %v699 = vpop.f32.mrf.mxu0
    %v700 = vadd.f32 %v524, %v699
    %v701 = vpop.f32.mrf.mxu0
    %v702 = vadd.f32 %v528, %v701
    %703 = vmatprep.mubr.f32.mxu0 0.0
    %704 = vmatmul.mubr.f32.gmra.mxu0 %v556
    %v705 = vpop.f32.mrf.mxu0
    %v706 = vadd.f32 %v524, %v705
    %v707 = vpop.f32.mrf.mxu0
    %v708 = vadd.f32 %v528, %v707
    %709 = vmatprep.mubr.f32.mxu0 0.0
    %710 = vmatmul.mubr.f32.gmra.mxu0 %v559
    %v711 = vpop.f32.mrf.mxu0
    %v712 = vadd.f32 %v524, %v711
    %v713 = vpop.f32.mrf.mxu0
    %v714 = vadd.f32 %v528, %v713
    %715 = vmatprep.mubr.f32.mxu0 0.0
    %716 = vmatmul.mubr.f32.gmra.mxu0 %v562
    %v717 = vpop.f32.mrf.mxu0
    %v718 = vadd.f32 %v524, %v717
    %v719 = vpop.f32.mrf.mxu0
    %v720 = vadd.f32 %v528, %v719
    %721 = vmatprep.mubr.f32.mxu0 0.0
    %722 = vmatmul.mubr.f32.gmra.mxu0 %v565
    %v723 = vpop.f32.mrf.mxu0
    %v724 = vadd.f32 %v524, %v723
    %v725 = vpop.f32.mrf.mxu0
    %v726 = vadd.f32 %v528, %v725
    %727 = vmatprep.mubr.f32.mxu0 0.0
    %728 = vmatmul.mubr.f32.gmra.mxu0 %v568
    %v729 = vpop.f32.mrf.mxu0
    %v730 = vadd.f32 %v524, %v729
    %v731 = vpop.f32.mrf.mxu0
    %v732 = vadd.f32 %v528, %v731
    %733 = vmatprep.mubr.f32.mxu0 0.0
    %734 = vmatmul.mubr.f32.gmra.mxu0 %v571
    %v735 = vpop.f32.mrf.mxu0
    %v736 = vadd.f32 %v524, %v735
    %v737 = vpop.f32.mrf.mxu0
    %v738 = vadd.f32 %v528, %v737
    %739 = vmatprep.mubr.f32.mxu0 0.0
    %740 = vmatmul.mubr.f32.gmra.mxu0 %v574
    %v741 = vpop.f32.mrf.mxu0
    %v742 = vadd.f32 %v524, %v741
    %v743 = vpop.f32.mrf.mxu0
    %v744 = vadd.f32 %v528, %v743
    %745 = vmatprep.mubr.f32.mxu0 0.0
    %746 = vmatmul.mubr.f32.gmra.mxu0 %v577
    %v747 = vpop.f32.mrf.mxu0
    %v748 = vadd.f32 %v524, %v747
    %v749 = vpop.f32.mrf.mxu0
    %v750 = vadd.f32 %v528, %v749
    %751 = vmatprep.mubr.f32.mxu0 0.0
    %752 = vmatmul.mubr.f32.gmra.mxu0 %v580
    %v753 = vpop.f32.mrf.mxu0
    %v754 = vadd.f32 %v524, %v753
    %v755 = vpop.f32.mrf.mxu0
    %v756 = vadd.f32 %v528, %v755
    %757 = vmatprep.mubr.f32.mxu0 0.0
    %758 = vmatmul.mubr.f32.gmra.mxu0 %v583
    %v759 = vpop.f32.mrf.mxu0
    %v760 = vadd.f32 %v524, %v759
    %v761 = vpop.f32.mrf.mxu0
    %v762 = vadd.f32 %v528, %v761
    %763 = vmatprep.mubr.f32.mxu0 0.0
    %764 = vmatmul.mubr.f32.gmra.mxu0 %v586
    %v765 = vpop.f32.mrf.mxu0
    %v766 = vadd.f32 %v524, %v765
    %v767 = vpop.f32.mrf.mxu0
    %v768 = vadd.f32 %v528, %v767
    %769 = vmatprep.mubr.f32.mxu0 0.0
    %770 = vmatmul.mubr.f32.gmra.mxu0 %v589
    %v771 = vpop.f32.mrf.mxu0
    %v772 = vadd.f32 %v524, %v771
    %v773 = vpop.f32.mrf.mxu0
    %v774 = vadd.f32 %v528, %v773
    %775 = vdwg.mxu0
    %v776 = vtanh.pop %v658
    %v777 = vtanh.pop %v660
    %v778 = vtanh.pop %v664
    %v779 = vtanh.pop %v666
    %v780 = vtanh.pop %v670
    %v781 = vtanh.pop %v672
    %v782 = vtanh.pop %v676
    %v783 = vtanh.pop %v678
    %v784 = vtanh.pop %v682
    %v785 = vtanh.pop %v684
    %v786 = vtanh.pop %v688
    %v787 = vtanh.pop %v690
    %v788 = vtanh.pop %v694
    %v789 = vtanh.pop %v696
    %v790 = vtanh.pop %v700
    %v791 = vtanh.pop %v702
    %v792 = vtanh.pop %v706
    %v793 = vtanh.pop %v708
    %v794 = vtanh.pop %v712
    %v795 = vtanh.pop %v714
    %v796 = vtanh.pop %v718
    %v797 = vtanh.pop %v720
    %v798 = vtanh.pop %v724
    %v799 = vtanh.pop %v726
    %v800 = vtanh.pop %v730
    %v801 = vtanh.pop %v732
    %v802 = vtanh.pop %v736
    %v803 = vtanh.pop %v738
    %v804 = vtanh.pop %v742
    %v805 = vtanh.pop %v744
    %v806 = vtanh.pop %v748
    %v807 = vtanh.pop %v750
    %v808 = vtanh.pop %v754
    %v809 = vtanh.pop %v756
    %v810 = vtanh.pop %v760
    %v811 = vtanh.pop %v762
    %v812 = vtanh.pop %v766
    %v813 = vtanh.pop %v768
    %v814 = vtanh.pop %v772
    %v815 = vtanh.pop %v774
    %v816 = vmul.f32 %v776, %v300
    %v817 = vmul.f32 %v777, %v300
    %v818 = vmul.f32 %v778, %v301
    %v819 = vmul.f32 %v779, %v301
    %v820 = vmul.f32 %v780, %v302
    %v821 = vmul.f32 %v781, %v302
    %v822 = vmul.f32 %v782, %v303
    %v823 = vmul.f32 %v783, %v303
    %v824 = vmul.f32 %v784, %v304
    %v825 = vmul.f32 %v785, %v304
    %v826 = vmul.f32 %v786, %v305
    %v827 = vmul.f32 %v787, %v305
    %v828 = vmul.f32 %v788, %v306
    %v829 = vmul.f32 %v789, %v306
    %v830 = vmul.f32 %v790, %v307
    %v831 = vmul.f32 %v791, %v307
    %v832 = vmul.f32 %v792, %v308
    %v833 = vmul.f32 %v793, %v308
    %v834 = vmul.f32 %v794, %v309
    %v835 = vmul.f32 %v795, %v309
    %v836 = vmul.f32 %v796, %v310
    %v837 = vmul.f32 %v797, %v310
    %v838 = vmul.f32 %v798, %v311
    %v839 = vmul.f32 %v799, %v311
    %v840 = vmul.f32 %v800, %v312
    %v841 = vmul.f32 %v801, %v312
    %v842 = vmul.f32 %v802, %v313
    %v843 = vmul.f32 %v803, %v313
    %v844 = vmul.f32 %v804, %v314
    %v845 = vmul.f32 %v805, %v314
    %v846 = vmul.f32 %v806, %v315
    %v847 = vmul.f32 %v807, %v315
    %v848 = vmul.f32 %v808, %v316
    %v849 = vmul.f32 %v809, %v316
    %v850 = vmul.f32 %v810, %v317
    %v851 = vmul.f32 %v811, %v317
    %v852 = vmul.f32 %v812, %v318
    %v853 = vmul.f32 %v813, %v318
    %v854 = vmul.f32 %v814, %v319
    %v855 = vmul.f32 %v815, %v319
    %v856 = vadd.f32 %v816, %v818
    %v857 = vadd.f32 %v856, %v820
    %v858 = vadd.f32 %v857, %v822
    %v859 = vadd.f32 %v858, %v824
    %v860 = vadd.f32 %v859, %v826
    %v861 = vadd.f32 %v860, %v828
    %v862 = vadd.f32 %v861, %v830
    %v863 = vadd.f32 %v862, %v832
    %v864 = vadd.f32 %v863, %v834
    %v865 = vadd.f32 %v864, %v836
    %v866 = vadd.f32 %v865, %v838
    %v867 = vadd.f32 %v866, %v840
    %v868 = vadd.f32 %v867, %v842
    %v869 = vadd.f32 %v868, %v844
    %v870 = vadd.f32 %v869, %v846
    %v871 = vadd.f32 %v870, %v848
    %v872 = vadd.f32 %v871, %v850
    %v873 = vadd.f32 %v872, %v852
    %v874 = vadd.f32 %v873, %v854
    %v875 = vrot.slane %v874, 4
    %v876 = vadd.f32 %v874, %v875
    %v877 = vrot.slane %v876, 2
    %v878 = vadd.f32 %v876, %v877
    %v879 = vrot.slane %v878, 1
    %v880 = vadd.f32 %v878, %v879
    %vm881 = vcmask 179200
    %v882 = vsel %vm881, %v817, 0.0
    %v883 = vsel %vm881, %v819, 0.0
    %v884 = vadd.f32 %v882, %v883
    %v885 = vsel %vm881, %v821, 0.0
    %v886 = vadd.f32 %v884, %v885
    %v887 = vsel %vm881, %v823, 0.0
    %v888 = vadd.f32 %v886, %v887
    %v889 = vsel %vm881, %v825, 0.0
    %v890 = vadd.f32 %v888, %v889
    %v891 = vsel %vm881, %v827, 0.0
    %v892 = vadd.f32 %v890, %v891
    %v893 = vsel %vm881, %v829, 0.0
    %v894 = vadd.f32 %v892, %v893
    %v895 = vsel %vm881, %v831, 0.0
    %v896 = vadd.f32 %v894, %v895
    %v897 = vsel %vm881, %v833, 0.0
    %v898 = vadd.f32 %v896, %v897
    %v899 = vsel %vm881, %v835, 0.0
    %v900 = vadd.f32 %v898, %v899
    %v901 = vsel %vm881, %v837, 0.0
    %v902 = vadd.f32 %v900, %v901
    %v903 = vsel %vm881, %v839, 0.0
    %v904 = vadd.f32 %v902, %v903
    %v905 = vsel %vm881, %v841, 0.0
    %v906 = vadd.f32 %v904, %v905
    %v907 = vsel %vm881, %v843, 0.0
    %v908 = vadd.f32 %v906, %v907
    %v909 = vsel %vm881, %v845, 0.0
    %v910 = vadd.f32 %v908, %v909
    %v911 = vsel %vm881, %v847, 0.0
    %v912 = vadd.f32 %v910, %v911
    %v913 = vsel %vm881, %v849, 0.0
    %v914 = vadd.f32 %v912, %v913
    %v915 = vsel %vm881, %v851, 0.0
    %v916 = vadd.f32 %v914, %v915
    %v917 = vsel %vm881, %v853, 0.0
    %v918 = vadd.f32 %v916, %v917
    %v919 = vsel %vm881, %v855, 0.0
    %v920 = vadd.f32 %v918, %v919
    %v921 = vrot.slane %v920, 4
    %v922 = vadd.f32 %v920, %v921
    %v923 = vrot.slane %v922, 2
    %v924 = vadd.f32 %v922, %v923
    %v925 = vrot.slane %v924, 1
    %v926 = vadd.f32 %v924, %v925
    %v927 = vmul.f32 %v880, 0.00625
    %v928 = vmul.f32 %v926, 0.00625
    %v929 = vsub.f32 %v776, %v927
    %v930 = vsub.f32 %v777, %v928
    %v931 = vsub.f32 %v778, %v927
    %v932 = vsub.f32 %v779, %v928
    %v933 = vsub.f32 %v780, %v927
    %v934 = vsub.f32 %v781, %v928
    %v935 = vsub.f32 %v782, %v927
    %v936 = vsub.f32 %v783, %v928
    %v937 = vsub.f32 %v784, %v927
    %v938 = vsub.f32 %v785, %v928
    %v939 = vsub.f32 %v786, %v927
    %v940 = vsub.f32 %v787, %v928
    %v941 = vsub.f32 %v788, %v927
    %v942 = vsub.f32 %v789, %v928
    %v943 = vsub.f32 %v790, %v927
    %v944 = vsub.f32 %v791, %v928
    %v945 = vsub.f32 %v792, %v927
    %v946 = vsub.f32 %v793, %v928
    %v947 = vsub.f32 %v794, %v927
    %v948 = vsub.f32 %v795, %v928
    %v949 = vsub.f32 %v796, %v927
    %v950 = vsub.f32 %v797, %v928
    %v951 = vsub.f32 %v798, %v927
    %v952 = vsub.f32 %v799, %v928
    %v953 = vsub.f32 %v800, %v927
    %v954 = vsub.f32 %v801, %v928
    %v955 = vsub.f32 %v802, %v927
    %v956 = vsub.f32 %v803, %v928
    %v957 = vsub.f32 %v804, %v927
    %v958 = vsub.f32 %v805, %v928
    %v959 = vsub.f32 %v806, %v927
    %v960 = vsub.f32 %v807, %v928
    %v961 = vsub.f32 %v808, %v927
    %v962 = vsub.f32 %v809, %v928
    %v963 = vsub.f32 %v810, %v927
    %v964 = vsub.f32 %v811, %v928
    %v965 = vsub.f32 %v812, %v927
    %v966 = vsub.f32 %v813, %v928
    %v967 = vsub.f32 %v814, %v927
    %v968 = vsub.f32 %v815, %v928
    %v969 = vmul.f32 %v929, %v300
    %v970 = vmul.f32 %v930, %v300
    %v971 = vmul.f32 %v931, %v301
    %v972 = vmul.f32 %v932, %v301
    %v973 = vmul.f32 %v933, %v302
    %v974 = vmul.f32 %v934, %v302
    %v975 = vmul.f32 %v935, %v303
    %v976 = vmul.f32 %v936, %v303
    %v977 = vmul.f32 %v937, %v304
    %v978 = vmul.f32 %v938, %v304
    %v979 = vmul.f32 %v939, %v305
    %v980 = vmul.f32 %v940, %v305
    %v981 = vmul.f32 %v941, %v306
    %v982 = vmul.f32 %v942, %v306
    %v983 = vmul.f32 %v943, %v307
    %v984 = vmul.f32 %v944, %v307
    %v985 = vmul.f32 %v945, %v308
    %v986 = vmul.f32 %v946, %v308
    %v987 = vmul.f32 %v947, %v309
    %v988 = vmul.f32 %v948, %v309
    %v989 = vmul.f32 %v949, %v310
    %v990 = vmul.f32 %v950, %v310
    %v991 = vmul.f32 %v951, %v311
    %v992 = vmul.f32 %v952, %v311
    %v993 = vmul.f32 %v953, %v312
    %v994 = vmul.f32 %v954, %v312
    %v995 = vmul.f32 %v955, %v313
    %v996 = vmul.f32 %v956, %v313
    %v997 = vmul.f32 %v957, %v314
    %v998 = vmul.f32 %v958, %v314
    %v999 = vmul.f32 %v959, %v315
    %v1000 = vmul.f32 %v960, %v315
    %v1001 = vmul.f32 %v961, %v316
    %v1002 = vmul.f32 %v962, %v316
    %v1003 = vmul.f32 %v963, %v317
    %v1004 = vmul.f32 %v964, %v317
    %v1005 = vmul.f32 %v965, %v318
    %v1006 = vmul.f32 %v966, %v318
    %v1007 = vmul.f32 %v967, %v319
    %v1008 = vmul.f32 %v968, %v319
    %v1009 = vmul.f32 %v969, %v969
    %v1010 = vmul.f32 %v970, %v970
    %v1011 = vmul.f32 %v971, %v971
    %v1012 = vmul.f32 %v972, %v972
    %v1013 = vmul.f32 %v973, %v973
    %v1014 = vmul.f32 %v974, %v974
    %v1015 = vmul.f32 %v975, %v975
    %v1016 = vmul.f32 %v976, %v976
    %v1017 = vmul.f32 %v977, %v977
    %v1018 = vmul.f32 %v978, %v978
    %v1019 = vmul.f32 %v979, %v979
    %v1020 = vmul.f32 %v980, %v980
    %v1021 = vmul.f32 %v981, %v981
    %v1022 = vmul.f32 %v982, %v982
    %v1023 = vmul.f32 %v983, %v983
    %v1024 = vmul.f32 %v984, %v984
    %v1025 = vmul.f32 %v985, %v985
    %v1026 = vmul.f32 %v986, %v986
    %v1027 = vmul.f32 %v987, %v987
    %v1028 = vmul.f32 %v988, %v988
    %v1029 = vmul.f32 %v989, %v989
    %v1030 = vmul.f32 %v990, %v990
    %v1031 = vmul.f32 %v991, %v991
    %v1032 = vmul.f32 %v992, %v992
    %v1033 = vmul.f32 %v993, %v993
    %v1034 = vmul.f32 %v994, %v994
    %v1035 = vmul.f32 %v995, %v995
    %v1036 = vmul.f32 %v996, %v996
    %v1037 = vmul.f32 %v997, %v997
    %v1038 = vmul.f32 %v998, %v998
    %v1039 = vmul.f32 %v999, %v999
    %v1040 = vmul.f32 %v1000, %v1000
    %v1041 = vmul.f32 %v1001, %v1001
    %v1042 = vmul.f32 %v1002, %v1002
    %v1043 = vmul.f32 %v1003, %v1003
    %v1044 = vmul.f32 %v1004, %v1004
    %v1045 = vmul.f32 %v1005, %v1005
    %v1046 = vmul.f32 %v1006, %v1006
    %v1047 = vmul.f32 %v1007, %v1007
    %v1048 = vmul.f32 %v1008, %v1008
    %v1049 = vadd.f32 %v1009, %v1011
    %v1050 = vadd.f32 %v1049, %v1013
    %v1051 = vadd.f32 %v1050, %v1015
    %v1052 = vadd.f32 %v1051, %v1017
    %v1053 = vadd.f32 %v1052, %v1019
    %v1054 = vadd.f32 %v1053, %v1021
    %v1055 = vadd.f32 %v1054, %v1023
    %v1056 = vadd.f32 %v1055, %v1025
    %v1057 = vadd.f32 %v1056, %v1027
    %v1058 = vadd.f32 %v1057, %v1029
    %v1059 = vadd.f32 %v1058, %v1031
    %v1060 = vadd.f32 %v1059, %v1033
    %v1061 = vadd.f32 %v1060, %v1035
    %v1062 = vadd.f32 %v1061, %v1037
    %v1063 = vadd.f32 %v1062, %v1039
    %v1064 = vadd.f32 %v1063, %v1041
    %v1065 = vadd.f32 %v1064, %v1043
    %v1066 = vadd.f32 %v1065, %v1045
    %v1067 = vadd.f32 %v1066, %v1047
    %v1068 = vrot.slane %v1067, 4
    %v1069 = vadd.f32 %v1067, %v1068
    %v1070 = vrot.slane %v1069, 2
    %v1071 = vadd.f32 %v1069, %v1070
    %v1072 = vrot.slane %v1071, 1
    %v1073 = vadd.f32 %v1071, %v1072
    %v1074 = vsel %vm881, %v1010, 0.0
    %v1075 = vsel %vm881, %v1012, 0.0
    %v1076 = vadd.f32 %v1074, %v1075
    %v1077 = vsel %vm881, %v1014, 0.0
    %v1078 = vadd.f32 %v1076, %v1077
    %v1079 = vsel %vm881, %v1016, 0.0
    %v1080 = vadd.f32 %v1078, %v1079
    %v1081 = vsel %vm881, %v1018, 0.0
    %v1082 = vadd.f32 %v1080, %v1081
    %v1083 = vsel %vm881, %v1020, 0.0
    %v1084 = vadd.f32 %v1082, %v1083
    %v1085 = vsel %vm881, %v1022, 0.0
    %v1086 = vadd.f32 %v1084, %v1085
    %v1087 = vsel %vm881, %v1024, 0.0
    %v1088 = vadd.f32 %v1086, %v1087
    %v1089 = vsel %vm881, %v1026, 0.0
    %v1090 = vadd.f32 %v1088, %v1089
    %v1091 = vsel %vm881, %v1028, 0.0
    %v1092 = vadd.f32 %v1090, %v1091
    %v1093 = vsel %vm881, %v1030, 0.0
    %v1094 = vadd.f32 %v1092, %v1093
    %v1095 = vsel %vm881, %v1032, 0.0
    %v1096 = vadd.f32 %v1094, %v1095
    %v1097 = vsel %vm881, %v1034, 0.0
    %v1098 = vadd.f32 %v1096, %v1097
    %v1099 = vsel %vm881, %v1036, 0.0
    %v1100 = vadd.f32 %v1098, %v1099
    %v1101 = vsel %vm881, %v1038, 0.0
    %v1102 = vadd.f32 %v1100, %v1101
    %v1103 = vsel %vm881, %v1040, 0.0
    %v1104 = vadd.f32 %v1102, %v1103
    %v1105 = vsel %vm881, %v1042, 0.0
    %v1106 = vadd.f32 %v1104, %v1105
    %v1107 = vsel %vm881, %v1044, 0.0
    %v1108 = vadd.f32 %v1106, %v1107
    %v1109 = vsel %vm881, %v1046, 0.0
    %v1110 = vadd.f32 %v1108, %v1109
    %v1111 = vsel %vm881, %v1048, 0.0
    %v1112 = vadd.f32 %v1110, %v1111
    %v1113 = vrot.slane %v1112, 4
    %v1114 = vadd.f32 %v1112, %v1113
    %v1115 = vrot.slane %v1114, 2
    %v1116 = vadd.f32 %v1114, %v1115
    %v1117 = vrot.slane %v1116, 1
    %v1118 = vadd.f32 %v1116, %v1117
    %v1119 = vmul.f32 %v1073, 0.00625
    %v1120 = vmul.f32 %v1118, 0.00625
    %v1121 = vadd.f32 %v1119, 1e-05
    %v1122 = vadd.f32 %v1120, 1e-05
    %v1123 = vrsqrt.pop %v1121
    %v1124 = vrsqrt.pop %v1122
    %v1125 = vmul.f32 %v929, %v1123
    %v1126 = vmul.f32 %v930, %v1124
    %v1127 = vmul.f32 %v931, %v1123
    %v1128 = vmul.f32 %v932, %v1124
    %v1129 = vmul.f32 %v933, %v1123
    %v1130 = vmul.f32 %v934, %v1124
    %v1131 = vmul.f32 %v935, %v1123
    %v1132 = vmul.f32 %v936, %v1124
    %v1133 = vmul.f32 %v937, %v1123
    %v1134 = vmul.f32 %v938, %v1124
    %v1135 = vmul.f32 %v939, %v1123
    %v1136 = vmul.f32 %v940, %v1124
    %v1137 = vmul.f32 %v941, %v1123
    %v1138 = vmul.f32 %v942, %v1124
    %v1139 = vmul.f32 %v943, %v1123
    %v1140 = vmul.f32 %v944, %v1124
    %v1141 = vmul.f32 %v945, %v1123
    %v1142 = vmul.f32 %v946, %v1124
    %v1143 = vmul.f32 %v947, %v1123
    %v1144 = vmul.f32 %v948, %v1124
    %v1145 = vmul.f32 %v949, %v1123
    %v1146 = vmul.f32 %v950, %v1124
    %v1147 = vmul.f32 %v951, %v1123
    %v1148 = vmul.f32 %v952, %v1124
    %v1149 = vmul.f32 %v953, %v1123
    %v1150 = vmul.f32 %v954, %v1124
    %v1151 = vmul.f32 %v955, %v1123
    %v1152 = vmul.f32 %v956, %v1124
    %v1153 = vmul.f32 %v957, %v1123
    %v1154 = vmul.f32 %v958, %v1124
    %v1155 = vmul.f32 %v959, %v1123
    %v1156 = vmul.f32 %v960, %v1124
    %v1157 = vmul.f32 %v961, %v1123
    %v1158 = vmul.f32 %v962, %v1124
    %v1159 = vmul.f32 %v963, %v1123
    %v1160 = vmul.f32 %v964, %v1124
    %v1161 = vmul.f32 %v965, %v1123
    %v1162 = vmul.f32 %v966, %v1124
    %v1163 = vmul.f32 %v967, %v1123
    %v1164 = vmul.f32 %v968, %v1124
    %v1165 = vld [vmem:[%s3] sm:$0x3]
    %v1167 = vlaneseq
    %v1168 = vshrl.u32 %v1167, 7
    %v1169 = vsub.s32 0, %v1168
    %v1170 = vrot.slane %v1165, %v1169
    %v1171 = vlaneseq
    %v1172 = vshrl.u32 %v1171, 7
    %v1173 = vsub.s32 1, %v1172
    %v1174 = vrot.slane %v1165, %v1173
    %v1177 = vmul.f32 %v1125, %v1170
    %v1178 = vmul.f32 %v1126, %v1174
    %v1179 = vmul.f32 %v1127, %v1170
    %v1180 = vmul.f32 %v1128, %v1174
    %v1181 = vmul.f32 %v1129, %v1170
    %v1182 = vmul.f32 %v1130, %v1174
    %v1183 = vmul.f32 %v1131, %v1170
    %v1184 = vmul.f32 %v1132, %v1174
    %v1185 = vmul.f32 %v1133, %v1170
    %v1186 = vmul.f32 %v1134, %v1174
    %v1187 = vmul.f32 %v1135, %v1170
    %v1188 = vmul.f32 %v1136, %v1174
    %v1189 = vmul.f32 %v1137, %v1170
    %v1190 = vmul.f32 %v1138, %v1174
    %v1191 = vmul.f32 %v1139, %v1170
    %v1192 = vmul.f32 %v1140, %v1174
    %v1193 = vmul.f32 %v1141, %v1170
    %v1194 = vmul.f32 %v1142, %v1174
    %v1195 = vmul.f32 %v1143, %v1170
    %v1196 = vmul.f32 %v1144, %v1174
    %v1197 = vmul.f32 %v1145, %v1170
    %v1198 = vmul.f32 %v1146, %v1174
    %v1199 = vmul.f32 %v1147, %v1170
    %v1200 = vmul.f32 %v1148, %v1174
    %v1201 = vmul.f32 %v1149, %v1170
    %v1202 = vmul.f32 %v1150, %v1174
    %v1203 = vmul.f32 %v1151, %v1170
    %v1204 = vmul.f32 %v1152, %v1174
    %v1205 = vmul.f32 %v1153, %v1170
    %v1206 = vmul.f32 %v1154, %v1174
    %v1207 = vmul.f32 %v1155, %v1170
    %v1208 = vmul.f32 %v1156, %v1174
    %v1209 = vmul.f32 %v1157, %v1170
    %v1210 = vmul.f32 %v1158, %v1174
    %v1211 = vmul.f32 %v1159, %v1170
    %v1212 = vmul.f32 %v1160, %v1174
    %v1213 = vmul.f32 %v1161, %v1170
    %v1214 = vmul.f32 %v1162, %v1174
    %v1215 = vmul.f32 %v1163, %v1170
    %v1216 = vmul.f32 %v1164, %v1174
    %v1217 = vld [vmem:[%s4] sm:$0x3]
    %v1219 = vlaneseq
    %v1220 = vshrl.u32 %v1219, 7
    %v1221 = vsub.s32 0, %v1220
    %v1222 = vrot.slane %v1217, %v1221
    %v1223 = vlaneseq
    %v1224 = vshrl.u32 %v1223, 7
    %v1225 = vsub.s32 1, %v1224
    %v1226 = vrot.slane %v1217, %v1225
    %v1229 = vadd.f32 %v1177, %v1222
    %v1230 = vadd.f32 %v1178, %v1226
    %v1231 = vadd.f32 %v1179, %v1222
    %v1232 = vadd.f32 %v1180, %v1226
    %v1233 = vadd.f32 %v1181, %v1222
    %v1234 = vadd.f32 %v1182, %v1226
    %v1235 = vadd.f32 %v1183, %v1222
    %v1236 = vadd.f32 %v1184, %v1226
    %v1237 = vadd.f32 %v1185, %v1222
    %v1238 = vadd.f32 %v1186, %v1226
    %v1239 = vadd.f32 %v1187, %v1222
    %v1240 = vadd.f32 %v1188, %v1226
    %v1241 = vadd.f32 %v1189, %v1222
    %v1242 = vadd.f32 %v1190, %v1226
    %v1243 = vadd.f32 %v1191, %v1222
    %v1244 = vadd.f32 %v1192, %v1226
    %v1245 = vadd.f32 %v1193, %v1222
    %v1246 = vadd.f32 %v1194, %v1226
    %v1247 = vadd.f32 %v1195, %v1222
    %v1248 = vadd.f32 %v1196, %v1226
    %v1249 = vadd.f32 %v1197, %v1222
    %v1250 = vadd.f32 %v1198, %v1226
    %v1251 = vadd.f32 %v1199, %v1222
    %v1252 = vadd.f32 %v1200, %v1226
    %v1253 = vadd.f32 %v1201, %v1222
    %v1254 = vadd.f32 %v1202, %v1226
    %v1255 = vadd.f32 %v1203, %v1222
    %v1256 = vadd.f32 %v1204, %v1226
    %v1257 = vadd.f32 %v1205, %v1222
    %v1258 = vadd.f32 %v1206, %v1226
    %v1259 = vadd.f32 %v1207, %v1222
    %v1260 = vadd.f32 %v1208, %v1226
    %v1261 = vadd.f32 %v1209, %v1222
    %v1262 = vadd.f32 %v1210, %v1226
    %v1263 = vadd.f32 %v1211, %v1222
    %v1264 = vadd.f32 %v1212, %v1226
    %v1265 = vadd.f32 %v1213, %v1222
    %v1266 = vadd.f32 %v1214, %v1226
    %v1267 = vadd.f32 %v1215, %v1222
    %v1268 = vadd.f32 %v1216, %v1226
    %v1269 = vld [vmem:[#allocation6] sm:$0xff]
    %v1270 = vld [vmem:[#allocation6 + $0x8] sm:$0xff]
    %v1271 = vld [vmem:[#allocation6 + $0x10] sm:$0xff]
    %v1272 = vld [vmem:[#allocation6 + $0x18] sm:$0xff]
    %v1273 = vld [vmem:[#allocation6 + $0x20] sm:$0xff]
    %v1274 = vld [vmem:[#allocation6 + $0x28] sm:$0xff]
    %v1275 = vld [vmem:[#allocation6 + $0x30] sm:$0xff]
    %v1276 = vld [vmem:[#allocation6 + $0x38] sm:$0xff]
    %v1277 = vld [vmem:[#allocation6 + $0x40] sm:$0xff]
    %v1278 = vld [vmem:[#allocation6 + $0x48] sm:$0xff]
    %v1279 = vld [vmem:[#allocation6 + $0x50] sm:$0xff]
    %v1280 = vld [vmem:[#allocation6 + $0x58] sm:$0xff]
    %v1281 = vld [vmem:[#allocation6 + $0x60] sm:$0xff]
    %v1282 = vld [vmem:[#allocation6 + $0x68] sm:$0xff]
    %v1283 = vld [vmem:[#allocation6 + $0x70] sm:$0xff]
    %v1284 = vld [vmem:[#allocation6 + $0x78] sm:$0xff]
    %v1285 = vld [vmem:[#allocation6 + $0x80] sm:$0xff]
    %v1286 = vld [vmem:[#allocation6 + $0x88] sm:$0xff]
    %v1287 = vld [vmem:[#allocation6 + $0x90] sm:$0xff]
    %v1288 = vld [vmem:[#allocation6 + $0x98] sm:$0xff]
    %v1289 = vld [vmem:[#allocation6 + $0xa0] sm:$0xff]
    %v1290 = vld [vmem:[#allocation6 + $0xa8] sm:$0xff]
    %v1291 = vld [vmem:[#allocation6 + $0xb0] sm:$0xff]
    %v1292 = vld [vmem:[#allocation6 + $0xb8] sm:$0xff]
    %v1293 = vld [vmem:[#allocation6 + $0xc0] sm:$0xff]
    %v1294 = vld [vmem:[#allocation6 + $0xc8] sm:$0xff]
    %v1295 = vld [vmem:[#allocation6 + $0xd0] sm:$0xff]
    %v1296 = vld [vmem:[#allocation6 + $0xd8] sm:$0xff]
    %v1297 = vld [vmem:[#allocation6 + $0xe0] sm:$0xff]
    %v1298 = vld [vmem:[#allocation6 + $0xe8] sm:$0xff]
    %v1299 = vld [vmem:[#allocation6 + $0xf0] sm:$0xff]
    %v1300 = vld [vmem:[#allocation6 + $0xf8] sm:$0xff]
    %v1301 = vld [vmem:[#allocation6 + $0x100] sm:$0xff]
    %v1302 = vld [vmem:[#allocation6 + $0x108] sm:$0xff]
    %v1303 = vld [vmem:[#allocation6 + $0x110] sm:$0xff]
    %v1304 = vld [vmem:[#allocation6 + $0x118] sm:$0xff]
    %v1305 = vld [vmem:[#allocation6 + $0x120] sm:$0x3f]
    %v1306 = vld [vmem:[#allocation6 + $0x128] sm:$0x3f]
    %v1307 = vld [vmem:[#allocation7] sm:$0x3]
    %v1309 = vlaneseq
    %v1310 = vshrl.u32 %v1309, 7
    %v1311 = vsub.s32 0, %v1310
    %v1312 = vrot.slane %v1307, %v1311
    %v1313 = vlaneseq
    %v1314 = vshrl.u32 %v1313, 7
    %v1315 = vsub.s32 1, %v1314
    %v1316 = vrot.slane %v1307, %v1315
    %v1320 = vsel %vm881, %v1230, 0
    %v1323 = vsel %vm881, %v1232, 0
    %v1326 = vsel %vm881, %v1234, 0
    %v1329 = vsel %vm881, %v1236, 0
    %v1332 = vsel %vm881, %v1238, 0
    %v1335 = vsel %vm881, %v1240, 0
    %v1338 = vsel %vm881, %v1242, 0
    %v1341 = vsel %vm881, %v1244, 0
    %v1344 = vsel %vm881, %v1246, 0
    %v1347 = vsel %vm881, %v1248, 0
    %v1350 = vsel %vm881, %v1250, 0
    %v1353 = vsel %vm881, %v1252, 0
    %v1356 = vsel %vm881, %v1254, 0
    %v1359 = vsel %vm881, %v1256, 0
    %v1362 = vsel %vm881, %v1258, 0
    %v1365 = vsel %vm881, %v1260, 0
    %v1368 = vsel %vm881, %v1262, 0
    %v1371 = vsel %vm881, %v1264, 0
    %v1374 = vsel %vm881, %v1266, 0
    %v1377 = vsel %vm881, %v1268, 0
    %vm1379 = vcmask 1045504
    %v1381 = vsel %vm1379, %v1305, 0
    %v1384 = vsel %vm1379, %v1306, 0
    %1386 = vmatprep.subr.mxu0 %v1300
    %1387 = vmatpush1.msra.mxu0 %v1299
    %1388 = vmatprep.subr.mxu0 %v1298
    %1389 = vmatpush1.msra.mxu0 %v1297
    %1390 = vmatprep.subr.mxu0 %v1296
    %1391 = vmatpush1.msra.mxu0 %v1295
    %1392 = vmatprep.subr.mxu0 %v1294
    %1393 = vmatpush1.msra.mxu0 %v1293
    %1394 = vmatprep.subr.mxu0 %v1292
    %1395 = vmatpush1.msra.mxu0 %v1291
    %1396 = vmatprep.subr.mxu0 %v1290
    %1397 = vmatpush1.msra.mxu0 %v1289
    %1398 = vmatprep.subr.mxu0 %v1288
    %1399 = vmatpush1.msra.mxu0 %v1287
    %1400 = vmatprep.subr.mxu0 %v1286
    %1401 = vmatpush1.msra.mxu0 %v1285
    %1402 = vmatprep.subr.mxu0 %v1284
    %1403 = vmatpush1.msra.mxu0 %v1283
    %1404 = vmatprep.subr.mxu0 %v1282
    %1405 = vmatpush1.msra.mxu0 %v1281
    %1406 = vmatprep.subr.mxu0 %v1280
    %1407 = vmatpush1.msra.mxu0 %v1279
    %1408 = vmatprep.subr.mxu0 %v1278
    %1409 = vmatpush1.msra.mxu0 %v1277
    %1410 = vmatprep.subr.mxu0 %v1276
    %1411 = vmatpush1.msra.mxu0 %v1275
    %1412 = vmatprep.subr.mxu0 %v1274
    %1413 = vmatpush1.msra.mxu0 %v1273
    %1414 = vmatprep.subr.mxu0 %v1272
    %1415 = vmatpush1.msra.mxu0 %v1271
    %1416 = vmatprep.subr.mxu0 %v1270
    %1417 = vmatpush1.msra.mxu0 %v1269
    %1418 = vmatprep.subr.mxu0 0.0
    %1419 = vmatpush2.msra.mxu0 0.0
    %1420 = vmatprep.subr.mxu0 0.0
    %1421 = vmatpush2.msra.mxu0 0.0
    %1422 = vmatprep.subr.mxu0 0.0
    %1423 = vmatpush2.msra.mxu0 0.0
    %1424 = vmatprep.subr.mxu0 0.0
    %1425 = vmatpush2.msra.mxu0 0.0
    %1426 = vmatprep.subr.mxu0 0.0
    %1427 = vmatpush2.msra.mxu0 0.0
    %1428 = vmatprep.subr.mxu0 0.0
    %1429 = vmatpush2.msra.mxu0 0.0
    %1430 = vmatprep.subr.mxu0 0.0
    %1431 = vmatpush2.msra.mxu0 0.0
    %1432 = vmatprep.subr.mxu0 0.0
    %1433 = vmatpush2.msra.mxu0 0.0
    %1434 = vmatprep.subr.mxu0 0.0
    %1435 = vmatpush2.msra.mxu0 0.0
    %1436 = vmatprep.subr.mxu0 0.0
    %1437 = vmatpush2.msra.mxu0 0.0
    %1438 = vmatprep.subr.mxu0 0.0
    %1439 = vmatpush2.msra.mxu0 0.0
    %1440 = vmatprep.subr.mxu0 0.0
    %1441 = vmatpush2.msra.mxu0 0.0
    %1442 = vmatprep.subr.mxu0 0.0
    %1443 = vmatpush2.msra.mxu0 0.0
    %1444 = vmatprep.subr.mxu0 %v1384
    %1445 = vmatpush2.msra.mxu0 %v1381
    %1446 = vmatprep.subr.mxu0 %v1304
    %1447 = vmatpush2.msra.mxu0 %v1303
    %1448 = vmatprep.subr.mxu0 %v1302
    %1449 = vmatpush2.msra.mxu0 %v1301
    %1450 = vmatprep.mubr.f32.mxu0 %v1320
    %1451 = vmatmul.mubr.f32.gmra.mxu0 %v1229
    %v1452 = vpop.f32.mrf.mxu0
    %v1453 = vadd.f32 %v1312, %v1452
    %v1454 = vpop.f32.mrf.mxu0
    %v1455 = vadd.f32 %v1316, %v1454
    %1456 = vmatprep.mubr.f32.mxu0 %v1323
    %1457 = vmatmul.mubr.f32.gmra.mxu0 %v1231
    %v1458 = vpop.f32.mrf.mxu0
    %v1459 = vadd.f32 %v1312, %v1458
    %v1460 = vpop.f32.mrf.mxu0
    %v1461 = vadd.f32 %v1316, %v1460
    %1462 = vmatprep.mubr.f32.mxu0 %v1326
    %1463 = vmatmul.mubr.f32.gmra.mxu0 %v1233
    %v1464 = vpop.f32.mrf.mxu0
    %v1465 = vadd.f32 %v1312, %v1464
    %v1466 = vpop.f32.mrf.mxu0
    %v1467 = vadd.f32 %v1316, %v1466
    %1468 = vmatprep.mubr.f32.mxu0 %v1329
    %1469 = vmatmul.mubr.f32.gmra.mxu0 %v1235
    %v1470 = vpop.f32.mrf.mxu0
    %v1471 = vadd.f32 %v1312, %v1470
    %v1472 = vpop.f32.mrf.mxu0
    %v1473 = vadd.f32 %v1316, %v1472
    %1474 = vmatprep.mubr.f32.mxu0 %v1332
    %1475 = vmatmul.mubr.f32.gmra.mxu0 %v1237
    %v1476 = vpop.f32.mrf.mxu0
    %v1477 = vadd.f32 %v1312, %v1476
    %v1478 = vpop.f32.mrf.mxu0
    %v1479 = vadd.f32 %v1316, %v1478
    %1480 = vmatprep.mubr.f32.mxu0 %v1335
    %1481 = vmatmul.mubr.f32.gmra.mxu0 %v1239
    %v1482 = vpop.f32.mrf.mxu0
    %v1483 = vadd.f32 %v1312, %v1482
    %v1484 = vpop.f32.mrf.mxu0
    %v1485 = vadd.f32 %v1316, %v1484
    %1486 = vmatprep.mubr.f32.mxu0 %v1338
    %1487 = vmatmul.mubr.f32.gmra.mxu0 %v1241
    %v1488 = vpop.f32.mrf.mxu0
    %v1489 = vadd.f32 %v1312, %v1488
    %v1490 = vpop.f32.mrf.mxu0
    %v1491 = vadd.f32 %v1316, %v1490
    %1492 = vmatprep.mubr.f32.mxu0 %v1341
    %1493 = vmatmul.mubr.f32.gmra.mxu0 %v1243
    %v1494 = vpop.f32.mrf.mxu0
    %v1495 = vadd.f32 %v1312, %v1494
    %v1496 = vpop.f32.mrf.mxu0
    %v1497 = vadd.f32 %v1316, %v1496
    %1498 = vmatprep.mubr.f32.mxu0 %v1344
    %1499 = vmatmul.mubr.f32.gmra.mxu0 %v1245
    %v1500 = vpop.f32.mrf.mxu0
    %v1501 = vadd.f32 %v1312, %v1500
    %v1502 = vpop.f32.mrf.mxu0
    %v1503 = vadd.f32 %v1316, %v1502
    %1504 = vmatprep.mubr.f32.mxu0 %v1347
    %1505 = vmatmul.mubr.f32.gmra.mxu0 %v1247
    %v1506 = vpop.f32.mrf.mxu0
    %v1507 = vadd.f32 %v1312, %v1506
    %v1508 = vpop.f32.mrf.mxu0
    %v1509 = vadd.f32 %v1316, %v1508
    %1510 = vmatprep.mubr.f32.mxu0 %v1350
    %1511 = vmatmul.mubr.f32.gmra.mxu0 %v1249
    %v1512 = vpop.f32.mrf.mxu0
    %v1513 = vadd.f32 %v1312, %v1512
    %v1514 = vpop.f32.mrf.mxu0
    %v1515 = vadd.f32 %v1316, %v1514
    %1516 = vmatprep.mubr.f32.mxu0 %v1353
    %1517 = vmatmul.mubr.f32.gmra.mxu0 %v1251
    %v1518 = vpop.f32.mrf.mxu0
    %v1519 = vadd.f32 %v1312, %v1518
    %v1520 = vpop.f32.mrf.mxu0
    %v1521 = vadd.f32 %v1316, %v1520
    %1522 = vmatprep.mubr.f32.mxu0 %v1356
    %1523 = vmatmul.mubr.f32.gmra.mxu0 %v1253
    %v1524 = vpop.f32.mrf.mxu0
    %v1525 = vadd.f32 %v1312, %v1524
    %v1526 = vpop.f32.mrf.mxu0
    %v1527 = vadd.f32 %v1316, %v1526
    %1528 = vmatprep.mubr.f32.mxu0 %v1359
    %1529 = vmatmul.mubr.f32.gmra.mxu0 %v1255
    %v1530 = vpop.f32.mrf.mxu0
    %v1531 = vadd.f32 %v1312, %v1530
    %v1532 = vpop.f32.mrf.mxu0
    %v1533 = vadd.f32 %v1316, %v1532
    %1534 = vmatprep.mubr.f32.mxu0 %v1362
    %1535 = vmatmul.mubr.f32.gmra.mxu0 %v1257
    %v1536 = vpop.f32.mrf.mxu0
    %v1537 = vadd.f32 %v1312, %v1536
    %v1538 = vpop.f32.mrf.mxu0
    %v1539 = vadd.f32 %v1316, %v1538
    %1540 = vmatprep.mubr.f32.mxu0 %v1365
    %1541 = vmatmul.mubr.f32.gmra.mxu0 %v1259
    %v1542 = vpop.f32.mrf.mxu0
    %v1543 = vadd.f32 %v1312, %v1542
    %v1544 = vpop.f32.mrf.mxu0
    %v1545 = vadd.f32 %v1316, %v1544
    %1546 = vmatprep.mubr.f32.mxu0 %v1368
    %1547 = vmatmul.mubr.f32.gmra.mxu0 %v1261
    %v1548 = vpop.f32.mrf.mxu0
    %v1549 = vadd.f32 %v1312, %v1548
    %v1550 = vpop.f32.mrf.mxu0
    %v1551 = vadd.f32 %v1316, %v1550
    %1552 = vmatprep.mubr.f32.mxu0 %v1371
    %1553 = vmatmul.mubr.f32.gmra.mxu0 %v1263
    %v1554 = vpop.f32.mrf.mxu0
    %v1555 = vadd.f32 %v1312, %v1554
    %v1556 = vpop.f32.mrf.mxu0
    %v1557 = vadd.f32 %v1316, %v1556
    %1558 = vmatprep.mubr.f32.mxu0 %v1374
    %1559 = vmatmul.mubr.f32.gmra.mxu0 %v1265
    %v1560 = vpop.f32.mrf.mxu0
    %v1561 = vadd.f32 %v1312, %v1560
    %v1562 = vpop.f32.mrf.mxu0
    %v1563 = vadd.f32 %v1316, %v1562
    %1564 = vmatprep.mubr.f32.mxu0 %v1377
    %1565 = vmatmul.mubr.f32.gmra.mxu0 %v1267
    %v1566 = vpop.f32.mrf.mxu0
    %v1567 = vadd.f32 %v1312, %v1566
    %v1568 = vpop.f32.mrf.mxu0
    %v1569 = vadd.f32 %v1316, %v1568
    %1570 = vdwg.mxu0
    %v1571 = vtanh.pop %v1453
    %v1572 = vtanh.pop %v1455
    %v1573 = vtanh.pop %v1459
    %v1574 = vtanh.pop %v1461
    %v1575 = vtanh.pop %v1465
    %v1576 = vtanh.pop %v1467
    %v1577 = vtanh.pop %v1471
    %v1578 = vtanh.pop %v1473
    %v1579 = vtanh.pop %v1477
    %v1580 = vtanh.pop %v1479
    %v1581 = vtanh.pop %v1483
    %v1582 = vtanh.pop %v1485
    %v1583 = vtanh.pop %v1489
    %v1584 = vtanh.pop %v1491
    %v1585 = vtanh.pop %v1495
    %v1586 = vtanh.pop %v1497
    %v1587 = vtanh.pop %v1501
    %v1588 = vtanh.pop %v1503
    %v1589 = vtanh.pop %v1507
    %v1590 = vtanh.pop %v1509
    %v1591 = vtanh.pop %v1513
    %v1592 = vtanh.pop %v1515
    %v1593 = vtanh.pop %v1519
    %v1594 = vtanh.pop %v1521
    %v1595 = vtanh.pop %v1525
    %v1596 = vtanh.pop %v1527
    %v1597 = vtanh.pop %v1531
    %v1598 = vtanh.pop %v1533
    %v1599 = vtanh.pop %v1537
    %v1600 = vtanh.pop %v1539
    %v1601 = vtanh.pop %v1543
    %v1602 = vtanh.pop %v1545
    %v1603 = vtanh.pop %v1549
    %v1604 = vtanh.pop %v1551
    %v1605 = vtanh.pop %v1555
    %v1606 = vtanh.pop %v1557
    %v1607 = vtanh.pop %v1561
    %v1608 = vtanh.pop %v1563
    %v1609 = vtanh.pop %v1567
    %v1610 = vtanh.pop %v1569
    %v1611 = vld [vmem:[#allocation9] sm:$0xff]
    %v1612 = vld [vmem:[#allocation9 + $0x8] sm:$0xff]
    %v1613 = vld [vmem:[#allocation9 + $0x10] sm:$0xff]
    %v1614 = vld [vmem:[#allocation9 + $0x18] sm:$0xff]
    %v1615 = vld [vmem:[#allocation9 + $0x20] sm:$0xff]
    %v1616 = vld [vmem:[#allocation9 + $0x28] sm:$0xff]
    %v1617 = vld [vmem:[#allocation9 + $0x30] sm:$0xff]
    %v1618 = vld [vmem:[#allocation9 + $0x38] sm:$0xff]
    %v1619 = vld [vmem:[#allocation9 + $0x40] sm:$0xff]
    %v1620 = vld [vmem:[#allocation9 + $0x48] sm:$0xff]
    %v1621 = vld [vmem:[#allocation9 + $0x50] sm:$0xff]
    %v1622 = vld [vmem:[#allocation9 + $0x58] sm:$0xff]
    %v1623 = vld [vmem:[#allocation9 + $0x60] sm:$0xff]
    %v1624 = vld [vmem:[#allocation9 + $0x68] sm:$0xff]
    %v1625 = vld [vmem:[#allocation9 + $0x70] sm:$0xff]
    %v1626 = vld [vmem:[#allocation9 + $0x78] sm:$0xff]
    %v1627 = vld [vmem:[#allocation9 + $0x80] sm:$0xff]
    %v1628 = vld [vmem:[#allocation9 + $0x88] sm:$0xff]
    %v1629 = vld [vmem:[#allocation9 + $0x90] sm:$0xff]
    %v1630 = vld [vmem:[#allocation9 + $0x98] sm:$0xff]
    %v1631 = vld [vmem:[#allocation9 + $0xa0] sm:$0xff]
    %v1632 = vld [vmem:[#allocation9 + $0xa8] sm:$0xff]
    %v1633 = vld [vmem:[#allocation9 + $0xb0] sm:$0xff]
    %v1634 = vld [vmem:[#allocation9 + $0xb8] sm:$0xff]
    %v1635 = vld [vmem:[#allocation9 + $0xc0] sm:$0xff]
    %v1636 = vld [vmem:[#allocation9 + $0xc8] sm:$0xff]
    %v1637 = vld [vmem:[#allocation9 + $0xd0] sm:$0xff]
    %v1638 = vld [vmem:[#allocation9 + $0xd8] sm:$0xff]
    %v1639 = vld [vmem:[#allocation9 + $0xe0] sm:$0xff]
    %v1640 = vld [vmem:[#allocation9 + $0xe8] sm:$0xff]
    %v1641 = vld [vmem:[#allocation9 + $0xf0] sm:$0xff]
    %v1642 = vld [vmem:[#allocation9 + $0xf8] sm:$0xff]
    %v1643 = vld [vmem:[#allocation9 + $0x100] sm:$0xff]
    %v1644 = vld [vmem:[#allocation9 + $0x108] sm:$0xff]
    %v1645 = vld [vmem:[#allocation9 + $0x110] sm:$0xff]
    %v1646 = vld [vmem:[#allocation9 + $0x118] sm:$0xff]
    %v1647 = vld [vmem:[#allocation9 + $0x120] sm:$0xff]
    %v1648 = vld [vmem:[#allocation9 + $0x128] sm:$0xff]
    %v1649 = vld [vmem:[#allocation9 + $0x130] sm:$0xff]
    %v1650 = vld [vmem:[#allocation9 + $0x138] sm:$0xff]
    %v1651 = vld [vmem:[#allocation9 + $0x140] sm:$0xff]
    %v1652 = vld [vmem:[#allocation9 + $0x148] sm:$0xff]
    %v1653 = vld [vmem:[#allocation9 + $0x150] sm:$0xff]
    %v1654 = vld [vmem:[#allocation9 + $0x158] sm:$0xff]
    %v1655 = vld [vmem:[#allocation9 + $0x160] sm:$0xff]
    %v1656 = vld [vmem:[#allocation9 + $0x168] sm:$0xff]
    %v1657 = vld [vmem:[#allocation9 + $0x170] sm:$0xff]
    %v1658 = vld [vmem:[#allocation9 + $0x178] sm:$0xff]
    %v1659 = vld [vmem:[#allocation9 + $0x180] sm:$0xff]
    %v1660 = vld [vmem:[#allocation9 + $0x188] sm:$0xff]
    %v1661 = vld [vmem:[#allocation9 + $0x190] sm:$0xff]
    %v1662 = vld [vmem:[#allocation9 + $0x198] sm:$0xff]
    %v1663 = vld [vmem:[#allocation9 + $0x1a0] sm:$0xff]
    %v1664 = vld [vmem:[#allocation9 + $0x1a8] sm:$0xff]
    %v1665 = vld [vmem:[#allocation9 + $0x1b0] sm:$0x3f]
    %v1666 = vld [vmem:[#allocation9 + $0x1b8] sm:$0x3f]
    %v1667 = vld [vmem:[#allocation9 + $0x1c0] sm:$0x3f]
    %v1668 = vld [vmem:[#allocation10] sm:$0x7]
    %v1670 = vlaneseq
    %v1671 = vshrl.u32 %v1670, 7
    %v1672 = vsub.s32 0, %v1671
    %v1673 = vrot.slane %v1668, %v1672
    %v1674 = vlaneseq
    %v1675 = vshrl.u32 %v1674, 7
    %v1676 = vsub.s32 1, %v1675
    %v1677 = vrot.slane %v1668, %v1676
    %v1678 = vlaneseq
    %v1679 = vshrl.u32 %v1678, 7
    %v1680 = vsub.s32 2, %v1679
    %v1681 = vrot.slane %v1668, %v1680
    %v1686 = vsel %vm881, %v1572, 0
    %v1689 = vsel %vm881, %v1574, 0
    %v1692 = vsel %vm881, %v1576, 0
    %v1695 = vsel %vm881, %v1578, 0
    %v1698 = vsel %vm881, %v1580, 0
    %v1701 = vsel %vm881, %v1582, 0
    %v1704 = vsel %vm881, %v1584, 0
    %v1707 = vsel %vm881, %v1586, 0
    %v1710 = vsel %vm881, %v1588, 0
    %v1713 = vsel %vm881, %v1590, 0
    %v1716 = vsel %vm881, %v1592, 0
    %v1719 = vsel %vm881, %v1594, 0
    %v1722 = vsel %vm881, %v1596, 0
    %v1725 = vsel %vm881, %v1598, 0
    %v1728 = vsel %vm881, %v1600, 0
    %v1731 = vsel %vm881, %v1602, 0
    %v1734 = vsel %vm881, %v1604, 0
    %v1737 = vsel %vm881, %v1606, 0
    %v1740 = vsel %vm881, %v1608, 0
    %v1743 = vsel %vm881, %v1610, 0
    %v1746 = vsel %vm1379, %v1665, 0
    %v1749 = vsel %vm1379, %v1666, 0
    %v1752 = vsel %vm1379, %v1667, 0
    %1754 = vmatprep.subr.mxu0 %v1657
    %1755 = vmatpush1.msra.mxu0 %v1656
    %1756 = vmatprep.subr.mxu0 %v1654
    %1757 = vmatpush1.msra.mxu0 %v1653
    %1758 = vmatprep.subr.mxu0 %v1651
    %1759 = vmatpush1.msra.mxu0 %v1650
    %1760 = vmatprep.subr.mxu0 %v1648
    %1761 = vmatpush1.msra.mxu0 %v1647
    %1762 = vmatprep.subr.mxu0 %v1645
    %1763 = vmatpush1.msra.mxu0 %v1644
    %1764 = vmatprep.subr.mxu0 %v1642
    %1765 = vmatpush1.msra.mxu0 %v1641
    %1766 = vmatprep.subr.mxu0 %v1639
    %1767 = vmatpush1.msra.mxu0 %v1638
    %1768 = vmatprep.subr.mxu0 %v1636
    %1769 = vmatpush1.msra.mxu0 %v1635
    %1770 = vmatprep.subr.mxu0 %v1633
    %1771 = vmatpush1.msra.mxu0 %v1632
    %1772 = vmatprep.subr.mxu0 %v1630
    %1773 = vmatpush1.msra.mxu0 %v1629
    %1774 = vmatprep.subr.mxu0 %v1627
    %1775 = vmatpush1.msra.mxu0 %v1626
    %1776 = vmatprep.subr.mxu0 %v1624
    %1777 = vmatpush1.msra.mxu0 %v1623
    %1778 = vmatprep.subr.mxu0 %v1621
    %1779 = vmatpush1.msra.mxu0 %v1620
    %1780 = vmatprep.subr.mxu0 %v1618
    %1781 = vmatpush1.msra.mxu0 %v1617
    %1782 = vmatprep.subr.mxu0 %v1615
    %1783 = vmatpush1.msra.mxu0 %v1614
    %1784 = vmatprep.subr.mxu0 %v1612
    %1785 = vmatpush1.msra.mxu0 %v1611
    %1786 = vmatprep.subr.mxu0 0.0
    %1787 = vmatpush2.msra.mxu0 0.0
    %1788 = vmatprep.subr.mxu0 0.0
    %1789 = vmatpush2.msra.mxu0 0.0
    %1790 = vmatprep.subr.mxu0 0.0
    %1791 = vmatpush2.msra.mxu0 0.0
    %1792 = vmatprep.subr.mxu0 0.0
    %1793 = vmatpush2.msra.mxu0 0.0
    %1794 = vmatprep.subr.mxu0 0.0
    %1795 = vmatpush2.msra.mxu0 0.0
    %1796 = vmatprep.subr.mxu0 0.0
    %1797 = vmatpush2.msra.mxu0 0.0
    %1798 = vmatprep.subr.mxu0 0.0
    %1799 = vmatpush2.msra.mxu0 0.0
    %1800 = vmatprep.subr.mxu0 0.0
    %1801 = vmatpush2.msra.mxu0 0.0
    %1802 = vmatprep.subr.mxu0 0.0
    %1803 = vmatpush2.msra.mxu0 0.0
    %1804 = vmatprep.subr.mxu0 0.0
    %1805 = vmatpush2.msra.mxu0 0.0
    %1806 = vmatprep.subr.mxu0 0.0
    %1807 = vmatpush2.msra.mxu0 0.0
    %1808 = vmatprep.subr.mxu0 0.0
    %1809 = vmatpush2.msra.mxu0 0.0
    %1810 = vmatprep.subr.mxu0 0.0
    %1811 = vmatpush2.msra.mxu0 0.0
    %1812 = vmatprep.subr.mxu0 %v1749
    %1813 = vmatpush2.msra.mxu0 %v1746
    %1814 = vmatprep.subr.mxu0 %v1663
    %1815 = vmatpush2.msra.mxu0 %v1662
    %1816 = vmatprep.subr.mxu0 %v1660
    %1817 = vmatpush2.msra.mxu0 %v1659
    %1818 = vmatprep.mubr.f32.mxu0 %v1686
    %1819 = vmatmul.mubr.f32.gmra.mxu0 %v1571
    %v1820 = vpop.f32.mrf.mxu0
    %v1821 = vadd.f32 %v1673, %v1820
    %v1822 = vpop.f32.mrf.mxu0
    %v1823 = vadd.f32 %v1677, %v1822
    %1824 = vmatprep.mubr.f32.mxu0 %v1689
    %1825 = vmatmul.mubr.f32.gmra.mxu0 %v1573
    %v1826 = vpop.f32.mrf.mxu0
    %v1827 = vadd.f32 %v1673, %v1826
    %v1828 = vpop.f32.mrf.mxu0
    %v1829 = vadd.f32 %v1677, %v1828
    %1830 = vmatprep.mubr.f32.mxu0 %v1692
    %1831 = vmatmul.mubr.f32.gmra.mxu0 %v1575
    %v1832 = vpop.f32.mrf.mxu0
    %v1833 = vadd.f32 %v1673, %v1832
    %v1834 = vpop.f32.mrf.mxu0
    %v1835 = vadd.f32 %v1677, %v1834
    %1836 = vmatprep.mubr.f32.mxu0 %v1695
    %1837 = vmatmul.mubr.f32.gmra.mxu0 %v1577
    %v1838 = vpop.f32.mrf.mxu0
    %v1839 = vadd.f32 %v1673, %v1838
    %v1840 = vpop.f32.mrf.mxu0
    %v1841 = vadd.f32 %v1677, %v1840
    %1842 = vmatprep.mubr.f32.mxu0 %v1698
    %1843 = vmatmul.mubr.f32.gmra.mxu0 %v1579
    %v1844 = vpop.f32.mrf.mxu0
    %v1845 = vadd.f32 %v1673, %v1844
    %v1846 = vpop.f32.mrf.mxu0
    %v1847 = vadd.f32 %v1677, %v1846
    %1848 = vmatprep.mubr.f32.mxu0 %v1701
    %1849 = vmatmul.mubr.f32.gmra.mxu0 %v1581
    %v1850 = vpop.f32.mrf.mxu0
    %v1851 = vadd.f32 %v1673, %v1850
    %v1852 = vpop.f32.mrf.mxu0
    %v1853 = vadd.f32 %v1677, %v1852
    %1854 = vmatprep.mubr.f32.mxu0 %v1704
    %1855 = vmatmul.mubr.f32.gmra.mxu0 %v1583
    %v1856 = vpop.f32.mrf.mxu0
    %v1857 = vadd.f32 %v1673, %v1856
    %v1858 = vpop.f32.mrf.mxu0
    %v1859 = vadd.f32 %v1677, %v1858
    %1860 = vmatprep.mubr.f32.mxu0 %v1707
    %1861 = vmatmul.mubr.f32.gmra.mxu0 %v1585
    %v1862 = vpop.f32.mrf.mxu0
    %v1863 = vadd.f32 %v1673, %v1862
    %v1864 = vpop.f32.mrf.mxu0
    %v1865 = vadd.f32 %v1677, %v1864
    %1866 = vmatprep.mubr.f32.mxu0 %v1710
    %1867 = vmatmul.mubr.f32.gmra.mxu0 %v1587
    %v1868 = vpop.f32.mrf.mxu0
    %v1869 = vadd.f32 %v1673, %v1868
    %v1870 = vpop.f32.mrf.mxu0
    %v1871 = vadd.f32 %v1677, %v1870
    %1872 = vmatprep.mubr.f32.mxu0 %v1713
    %1873 = vmatmul.mubr.f32.gmra.mxu0 %v1589
    %v1874 = vpop.f32.mrf.mxu0
    %v1875 = vadd.f32 %v1673, %v1874
    %v1876 = vpop.f32.mrf.mxu0
    %v1877 = vadd.f32 %v1677, %v1876
    %1878 = vmatprep.mubr.f32.mxu0 %v1716
    %1879 = vmatmul.mubr.f32.gmra.mxu0 %v1591
    %v1880 = vpop.f32.mrf.mxu0
    %v1881 = vadd.f32 %v1673, %v1880
    %v1882 = vpop.f32.mrf.mxu0
    %v1883 = vadd.f32 %v1677, %v1882
    %1884 = vmatprep.mubr.f32.mxu0 %v1719
    %1885 = vmatmul.mubr.f32.gmra.mxu0 %v1593
    %v1886 = vpop.f32.mrf.mxu0
    %v1887 = vadd.f32 %v1673, %v1886
    %v1888 = vpop.f32.mrf.mxu0
    %v1889 = vadd.f32 %v1677, %v1888
    %1890 = vmatprep.mubr.f32.mxu0 %v1722
    %1891 = vmatmul.mubr.f32.gmra.mxu0 %v1595
    %v1892 = vpop.f32.mrf.mxu0
    %v1893 = vadd.f32 %v1673, %v1892
    %v1894 = vpop.f32.mrf.mxu0
    %v1895 = vadd.f32 %v1677, %v1894
    %1896 = vmatprep.mubr.f32.mxu0 %v1725
    %1897 = vmatmul.mubr.f32.gmra.mxu0 %v1597
    %v1898 = vpop.f32.mrf.mxu0
    %v1899 = vadd.f32 %v1673, %v1898
    %v1900 = vpop.f32.mrf.mxu0
    %v1901 = vadd.f32 %v1677, %v1900
    %1902 = vmatprep.mubr.f32.mxu0 %v1728
    %1903 = vmatmul.mubr.f32.gmra.mxu0 %v1599
    %v1904 = vpop.f32.mrf.mxu0
    %v1905 = vadd.f32 %v1673, %v1904
    %v1906 = vpop.f32.mrf.mxu0
    %v1907 = vadd.f32 %v1677, %v1906
    %1908 = vmatprep.mubr.f32.mxu0 %v1731
    %1909 = vmatmul.mubr.f32.gmra.mxu0 %v1601
    %v1910 = vpop.f32.mrf.mxu0
    %v1911 = vadd.f32 %v1673, %v1910
    %v1912 = vpop.f32.mrf.mxu0
    %v1913 = vadd.f32 %v1677, %v1912
    %1914 = vmatprep.mubr.f32.mxu0 %v1734
    %1915 = vmatmul.mubr.f32.gmra.mxu0 %v1603
    %v1916 = vpop.f32.mrf.mxu0
    %v1917 = vadd.f32 %v1673, %v1916
    %v1918 = vpop.f32.mrf.mxu0
    %v1919 = vadd.f32 %v1677, %v1918
    %1920 = vmatprep.mubr.f32.mxu0 %v1737
    %1921 = vmatmul.mubr.f32.gmra.mxu0 %v1605
    %v1922 = vpop.f32.mrf.mxu0
    %v1923 = vadd.f32 %v1673, %v1922
    %v1924 = vpop.f32.mrf.mxu0
    %v1925 = vadd.f32 %v1677, %v1924
    %1926 = vmatprep.mubr.f32.mxu0 %v1740
    %1927 = vmatmul.mubr.f32.gmra.mxu0 %v1607
    %v1928 = vpop.f32.mrf.mxu0
    %v1929 = vadd.f32 %v1673, %v1928
    %v1930 = vpop.f32.mrf.mxu0
    %v1931 = vadd.f32 %v1677, %v1930
    %1932 = vmatprep.mubr.f32.mxu0 %v1743
    %1933 = vmatmul.mubr.f32.gmra.mxu0 %v1609
    %v1934 = vpop.f32.mrf.mxu0
    %v1935 = vadd.f32 %v1673, %v1934
    %v1936 = vpop.f32.mrf.mxu0
    %v1937 = vadd.f32 %v1677, %v1936
    %1938 = vdwg.mxu0
    %1939 = vmatprep.subr.mxu0 0.0
    %1940 = vmatpush1.msra.mxu0 %v1658
    %1941 = vmatprep.subr.mxu0 0.0
    %1942 = vmatpush1.msra.mxu0 %v1655
    %1943 = vmatprep.subr.mxu0 0.0
    %1944 = vmatpush1.msra.mxu0 %v1652
    %1945 = vmatprep.subr.mxu0 0.0
    %1946 = vmatpush1.msra.mxu0 %v1649
    %1947 = vmatprep.subr.mxu0 0.0
    %1948 = vmatpush1.msra.mxu0 %v1646
    %1949 = vmatprep.subr.mxu0 0.0
    %1950 = vmatpush1.msra.mxu0 %v1643
    %1951 = vmatprep.subr.mxu0 0.0
    %1952 = vmatpush1.msra.mxu0 %v1640
    %1953 = vmatprep.subr.mxu0 0.0
    %1954 = vmatpush1.msra.mxu0 %v1637
    %1955 = vmatprep.subr.mxu0 0.0
    %1956 = vmatpush1.msra.mxu0 %v1634
    %1957 = vmatprep.subr.mxu0 0.0
    %1958 = vmatpush1.msra.mxu0 %v1631
    %1959 = vmatprep.subr.mxu0 0.0
    %1960 = vmatpush1.msra.mxu0 %v1628
    %1961 = vmatprep.subr.mxu0 0.0
    %1962 = vmatpush1.msra.mxu0 %v1625
    %1963 = vmatprep.subr.mxu0 0.0
    %1964 = vmatpush1.msra.mxu0 %v1622
    %1965 = vmatprep.subr.mxu0 0.0
    %1966 = vmatpush1.msra.mxu0 %v1619
    %1967 = vmatprep.subr.mxu0 0.0
    %1968 = vmatpush1.msra.mxu0 %v1616
    %1969 = vmatprep.subr.mxu0 0.0
    %1970 = vmatpush1.msra.mxu0 %v1613
    %1971 = vmatprep.subr.mxu0 0.0
    %1972 = vmatpush2.msra.mxu0 0.0
    %1973 = vmatprep.subr.mxu0 0.0
    %1974 = vmatpush2.msra.mxu0 0.0
    %1975 = vmatprep.subr.mxu0 0.0
    %1976 = vmatpush2.msra.mxu0 0.0
    %1977 = vmatprep.subr.mxu0 0.0
    %1978 = vmatpush2.msra.mxu0 0.0
    %1979 = vmatprep.subr.mxu0 0.0
    %1980 = vmatpush2.msra.mxu0 0.0
    %1981 = vmatprep.subr.mxu0 0.0
    %1982 = vmatpush2.msra.mxu0 0.0
    %1983 = vmatprep.subr.mxu0 0.0
    %1984 = vmatpush2.msra.mxu0 0.0
    %1985 = vmatprep.subr.mxu0 0.0
    %1986 = vmatpush2.msra.mxu0 0.0
    %1987 = vmatprep.subr.mxu0 0.0
    %1988 = vmatpush2.msra.mxu0 0.0
    %1989 = vmatprep.subr.mxu0 0.0
    %1990 = vmatpush2.msra.mxu0 0.0
    %1991 = vmatprep.subr.mxu0 0.0
    %1992 = vmatpush2.msra.mxu0 0.0
    %1993 = vmatprep.subr.mxu0 0.0
    %1994 = vmatpush2.msra.mxu0 0.0
    %1995 = vmatprep.subr.mxu0 0.0
    %1996 = vmatpush2.msra.mxu0 0.0
    %1997 = vmatprep.subr.mxu0 0.0
    %1998 = vmatpush2.msra.mxu0 %v1752
    %1999 = vmatprep.subr.mxu0 0.0
    %2000 = vmatpush2.msra.mxu0 %v1664
    %2001 = vmatprep.subr.mxu0 0.0
    %2002 = vmatpush2.msra.mxu0 %v1661
    %2003 = vmatprep.mubr.f32.mxu0 %v1686
    %2004 = vmatmul.mubr.f32.gmra.mxu0 %v1571
    %v2005 = vpop.f32.mrf.mxu0
    %v2006 = vadd.f32 %v1681, %v2005
    %v2007 = vpop.f32.mrf.mxu0
    %2008 = vmatprep.mubr.f32.mxu0 %v1689
    %2009 = vmatmul.mubr.f32.gmra.mxu0 %v1573
    %v2010 = vpop.f32.mrf.mxu0
    %v2011 = vadd.f32 %v1681, %v2010
    %v2012 = vpop.f32.mrf.mxu0
    %2013 = vmatprep.mubr.f32.mxu0 %v1692
    %2014 = vmatmul.mubr.f32.gmra.mxu0 %v1575
    %v2015 = vpop.f32.mrf.mxu0
    %v2016 = vadd.f32 %v1681, %v2015
    %v2017 = vpop.f32.mrf.mxu0
    %2018 = vmatprep.mubr.f32.mxu0 %v1695
    %2019 = vmatmul.mubr.f32.gmra.mxu0 %v1577
    %v2020 = vpop.f32.mrf.mxu0
    %v2021 = vadd.f32 %v1681, %v2020
    %v2022 = vpop.f32.mrf.mxu0
    %2023 = vmatprep.mubr.f32.mxu0 %v1698
    %2024 = vmatmul.mubr.f32.gmra.mxu0 %v1579
    %v2025 = vpop.f32.mrf.mxu0
    %v2026 = vadd.f32 %v1681, %v2025
    %v2027 = vpop.f32.mrf.mxu0
    %2028 = vmatprep.mubr.f32.mxu0 %v1701
    %2029 = vmatmul.mubr.f32.gmra.mxu0 %v1581
    %v2030 = vpop.f32.mrf.mxu0
    %v2031 = vadd.f32 %v1681, %v2030
    %v2032 = vpop.f32.mrf.mxu0
    %2033 = vmatprep.mubr.f32.mxu0 %v1704
    %2034 = vmatmul.mubr.f32.gmra.mxu0 %v1583
    %v2035 = vpop.f32.mrf.mxu0
    %v2036 = vadd.f32 %v1681, %v2035
    %v2037 = vpop.f32.mrf.mxu0
    %2038 = vmatprep.mubr.f32.mxu0 %v1707
    %2039 = vmatmul.mubr.f32.gmra.mxu0 %v1585
    %v2040 = vpop.f32.mrf.mxu0
    %v2041 = vadd.f32 %v1681, %v2040
    %v2042 = vpop.f32.mrf.mxu0
    %2043 = vmatprep.mubr.f32.mxu0 %v1710
    %2044 = vmatmul.mubr.f32.gmra.mxu0 %v1587
    %v2045 = vpop.f32.mrf.mxu0
    %v2046 = vadd.f32 %v1681, %v2045
    %v2047 = vpop.f32.mrf.mxu0
    %2048 = vmatprep.mubr.f32.mxu0 %v1713
    %2049 = vmatmul.mubr.f32.gmra.mxu0 %v1589
    %v2050 = vpop.f32.mrf.mxu0
    %v2051 = vadd.f32 %v1681, %v2050
    %v2052 = vpop.f32.mrf.mxu0
    %2053 = vmatprep.mubr.f32.mxu0 %v1716
    %2054 = vmatmul.mubr.f32.gmra.mxu0 %v1591
    %v2055 = vpop.f32.mrf.mxu0
    %v2056 = vadd.f32 %v1681, %v2055
    %v2057 = vpop.f32.mrf.mxu0
    %2058 = vmatprep.mubr.f32.mxu0 %v1719
    %2059 = vmatmul.mubr.f32.gmra.mxu0 %v1593
    %v2060 = vpop.f32.mrf.mxu0
    %v2061 = vadd.f32 %v1681, %v2060
    %v2062 = vpop.f32.mrf.mxu0
    %2063 = vmatprep.mubr.f32.mxu0 %v1722
    %2064 = vmatmul.mubr.f32.gmra.mxu0 %v1595
    %v2065 = vpop.f32.mrf.mxu0
    %v2066 = vadd.f32 %v1681, %v2065
    %v2067 = vpop.f32.mrf.mxu0
    %2068 = vmatprep.mubr.f32.mxu0 %v1725
    %2069 = vmatmul.mubr.f32.gmra.mxu0 %v1597
    %v2070 = vpop.f32.mrf.mxu0
    %v2071 = vadd.f32 %v1681, %v2070
    %v2072 = vpop.f32.mrf.mxu0
    %2073 = vmatprep.mubr.f32.mxu0 %v1728
    %2074 = vmatmul.mubr.f32.gmra.mxu0 %v1599
    %v2075 = vpop.f32.mrf.mxu0
    %v2076 = vadd.f32 %v1681, %v2075
    %v2077 = vpop.f32.mrf.mxu0
    %2078 = vmatprep.mubr.f32.mxu0 %v1731
    %2079 = vmatmul.mubr.f32.gmra.mxu0 %v1601
    %v2080 = vpop.f32.mrf.mxu0
    %v2081 = vadd.f32 %v1681, %v2080
    %v2082 = vpop.f32.mrf.mxu0
    %2083 = vmatprep.mubr.f32.mxu0 %v1734
    %2084 = vmatmul.mubr.f32.gmra.mxu0 %v1603
    %v2085 = vpop.f32.mrf.mxu0
    %v2086 = vadd.f32 %v1681, %v2085
    %v2087 = vpop.f32.mrf.mxu0
    %2088 = vmatprep.mubr.f32.mxu0 %v1737
    %2089 = vmatmul.mubr.f32.gmra.mxu0 %v1605
    %v2090 = vpop.f32.mrf.mxu0
    %v2091 = vadd.f32 %v1681, %v2090
    %v2092 = vpop.f32.mrf.mxu0
    %2093 = vmatprep.mubr.f32.mxu0 %v1740
    %2094 = vmatmul.mubr.f32.gmra.mxu0 %v1607
    %v2095 = vpop.f32.mrf.mxu0
    %v2096 = vadd.f32 %v1681, %v2095
    %v2097 = vpop.f32.mrf.mxu0
    %2098 = vmatprep.mubr.f32.mxu0 %v1743
    %2099 = vmatmul.mubr.f32.gmra.mxu0 %v1609
    %v2100 = vpop.f32.mrf.mxu0
    %v2101 = vadd.f32 %v1681, %v2100
    %v2102 = vpop.f32.mrf.mxu0
    %2103 = vdwg.mxu0
    %v2104 = vmul.f32 %v1821, %v300
    %v2105 = vmul.f32 %v1823, %v300
    %v2106 = vmul.f32 %v2006, %v300
    %v2107 = vmul.f32 %v1827, %v301
    %v2108 = vmul.f32 %v1829, %v301
    %v2109 = vmul.f32 %v2011, %v301
    %v2110 = vmul.f32 %v1833, %v302
    %v2111 = vmul.f32 %v1835, %v302
    %v2112 = vmul.f32 %v2016, %v302
    %v2113 = vmul.f32 %v1839, %v303
    %v2114 = vmul.f32 %v1841, %v303
    %v2115 = vmul.f32 %v2021, %v303
    %v2116 = vmul.f32 %v1845, %v304
    %v2117 = vmul.f32 %v1847, %v304
    %v2118 = vmul.f32 %v2026, %v304
    %v2119 = vmul.f32 %v1851, %v305
    %v2120 = vmul.f32 %v1853, %v305
    %v2121 = vmul.f32 %v2031, %v305
    %v2122 = vmul.f32 %v1857, %v306
    %v2123 = vmul.f32 %v1859, %v306
    %v2124 = vmul.f32 %v2036, %v306
    %v2125 = vmul.f32 %v1863, %v307
    %v2126 = vmul.f32 %v1865, %v307
    %v2127 = vmul.f32 %v2041, %v307
    %v2128 = vmul.f32 %v1869, %v308
    %v2129 = vmul.f32 %v1871, %v308
    %v2130 = vmul.f32 %v2046, %v308
    %v2131 = vmul.f32 %v1875, %v309
    %v2132 = vmul.f32 %v1877, %v309
    %v2133 = vmul.f32 %v2051, %v309
    %v2134 = vmul.f32 %v1881, %v310
    %v2135 = vmul.f32 %v1883, %v310
    %v2136 = vmul.f32 %v2056, %v310
    %v2137 = vmul.f32 %v1887, %v311
    %v2138 = vmul.f32 %v1889, %v311
    %v2139 = vmul.f32 %v2061, %v311
    %v2140 = vmul.f32 %v1893, %v312
    %v2141 = vmul.f32 %v1895, %v312
    %v2142 = vmul.f32 %v2066, %v312
    %v2143 = vmul.f32 %v1899, %v313
    %v2144 = vmul.f32 %v1901, %v313
    %v2145 = vmul.f32 %v2071, %v313
    %v2146 = vmul.f32 %v1905, %v314
    %v2147 = vmul.f32 %v1907, %v314
    %v2148 = vmul.f32 %v2076, %v314
    %v2149 = vmul.f32 %v1911, %v315
    %v2150 = vmul.f32 %v1913, %v315
    %v2151 = vmul.f32 %v2081, %v315
    %v2152 = vmul.f32 %v1917, %v316
    %v2153 = vmul.f32 %v1919, %v316
    %v2154 = vmul.f32 %v2086, %v316
    %v2155 = vmul.f32 %v1923, %v317
    %v2156 = vmul.f32 %v1925, %v317
    %v2157 = vmul.f32 %v2091, %v317
    %v2158 = vmul.f32 %v1929, %v318
    %v2159 = vmul.f32 %v1931, %v318
    %v2160 = vmul.f32 %v2096, %v318
    %v2161 = vmul.f32 %v1935, %v319
    %v2162 = vmul.f32 %v1937, %v319
    %v2163 = vmul.f32 %v2101, %v319
    %v2164 = vadd.f32 %v2104, %v2107
    %v2165 = vadd.f32 %v2164, %v2110
    %v2166 = vadd.f32 %v2165, %v2113
    %v2167 = vadd.f32 %v2166, %v2116
    %v2168 = vadd.f32 %v2167, %v2119
    %v2169 = vadd.f32 %v2168, %v2122
    %v2170 = vadd.f32 %v2169, %v2125
    %v2171 = vadd.f32 %v2170, %v2128
    %v2172 = vadd.f32 %v2171, %v2131
    %v2173 = vadd.f32 %v2172, %v2134
    %v2174 = vadd.f32 %v2173, %v2137
    %v2175 = vadd.f32 %v2174, %v2140
    %v2176 = vadd.f32 %v2175, %v2143
    %v2177 = vadd.f32 %v2176, %v2146
    %v2178 = vadd.f32 %v2177, %v2149
    %v2179 = vadd.f32 %v2178, %v2152
    %v2180 = vadd.f32 %v2179, %v2155
    %v2181 = vadd.f32 %v2180, %v2158
    %v2182 = vadd.f32 %v2181, %v2161
    %v2183 = vrot.slane %v2182, 4
    %v2184 = vadd.f32 %v2182, %v2183
    %v2185 = vrot.slane %v2184, 2
    %v2186 = vadd.f32 %v2184, %v2185
    %v2187 = vrot.slane %v2186, 1
    %v2188 = vadd.f32 %v2186, %v2187
    %v2189 = vadd.f32 %v2105, %v2108
    %v2190 = vadd.f32 %v2189, %v2111
    %v2191 = vadd.f32 %v2190, %v2114
    %v2192 = vadd.f32 %v2191, %v2117
    %v2193 = vadd.f32 %v2192, %v2120
    %v2194 = vadd.f32 %v2193, %v2123
    %v2195 = vadd.f32 %v2194, %v2126
    %v2196 = vadd.f32 %v2195, %v2129
    %v2197 = vadd.f32 %v2196, %v2132
    %v2198 = vadd.f32 %v2197, %v2135
    %v2199 = vadd.f32 %v2198, %v2138
    %v2200 = vadd.f32 %v2199, %v2141
    %v2201 = vadd.f32 %v2200, %v2144
    %v2202 = vadd.f32 %v2201, %v2147
    %v2203 = vadd.f32 %v2202, %v2150
    %v2204 = vadd.f32 %v2203, %v2153
    %v2205 = vadd.f32 %v2204, %v2156
    %v2206 = vadd.f32 %v2205, %v2159
    %v2207 = vadd.f32 %v2206, %v2162
    %v2208 = vrot.slane %v2207, 4
    %v2209 = vadd.f32 %v2207, %v2208
    %v2210 = vrot.slane %v2209, 2
    %v2211 = vadd.f32 %v2209, %v2210
    %v2212 = vrot.slane %v2211, 1
    %v2213 = vadd.f32 %v2211, %v2212
    %vm2214 = vcmask 359424
    %v2215 = vsel %vm2214, %v2106, 0.0
    %v2216 = vsel %vm2214, %v2109, 0.0
    %v2217 = vadd.f32 %v2215, %v2216
    %v2218 = vsel %vm2214, %v2112, 0.0
    %v2219 = vadd.f32 %v2217, %v2218
    %v2220 = vsel %vm2214, %v2115, 0.0
    %v2221 = vadd.f32 %v2219, %v2220
    %v2222 = vsel %vm2214, %v2118, 0.0
    %v2223 = vadd.f32 %v2221, %v2222
    %v2224 = vsel %vm2214, %v2121, 0.0
    %v2225 = vadd.f32 %v2223, %v2224
    %v2226 = vsel %vm2214, %v2124, 0.0
    %v2227 = vadd.f32 %v2225, %v2226
    %v2228 = vsel %vm2214, %v2127, 0.0
    %v2229 = vadd.f32 %v2227, %v2228
    %v2230 = vsel %vm2214, %v2130, 0.0
    %v2231 = vadd.f32 %v2229, %v2230
    %v2232 = vsel %vm2214, %v2133, 0.0
    %v2233 = vadd.f32 %v2231, %v2232
    %v2234 = vsel %vm2214, %v2136, 0.0
    %v2235 = vadd.f32 %v2233, %v2234
    %v2236 = vsel %vm2214, %v2139, 0.0
    %v2237 = vadd.f32 %v2235, %v2236
    %v2238 = vsel %vm2214, %v2142, 0.0
    %v2239 = vadd.f32 %v2237, %v2238
    %v2240 = vsel %vm2214, %v2145, 0.0
    %v2241 = vadd.f32 %v2239, %v2240
    %v2242 = vsel %vm2214, %v2148, 0.0
    %v2243 = vadd.f32 %v2241, %v2242
    %v2244 = vsel %vm2214, %v2151, 0.0
    %v2245 = vadd.f32 %v2243, %v2244
    %v2246 = vsel %vm2214, %v2154, 0.0
    %v2247 = vadd.f32 %v2245, %v2246
    %v2248 = vsel %vm2214, %v2157, 0.0
    %v2249 = vadd.f32 %v2247, %v2248
    %v2250 = vsel %vm2214, %v2160, 0.0
    %v2251 = vadd.f32 %v2249, %v2250
    %v2252 = vsel %vm2214, %v2163, 0.0
    %v2253 = vadd.f32 %v2251, %v2252
    %v2254 = vrot.slane %v2253, 4
    %v2255 = vadd.f32 %v2253, %v2254
    %v2256 = vrot.slane %v2255, 2
    %v2257 = vadd.f32 %v2255, %v2256
    %v2258 = vrot.slane %v2257, 1
    %v2259 = vadd.f32 %v2257, %v2258
    %v2260 = vmul.f32 %v2188, 0.00625
    %v2261 = vmul.f32 %v2213, 0.00625
    %v2262 = vmul.f32 %v2259, 0.00625
    %v2263 = vsub.f32 %v1821, %v2260
    %v2264 = vsub.f32 %v1823, %v2261
    %v2265 = vsub.f32 %v2006, %v2262
    %v2266 = vsub.f32 %v1827, %v2260
    %v2267 = vsub.f32 %v1829, %v2261
    %v2268 = vsub.f32 %v2011, %v2262
    %v2269 = vsub.f32 %v1833, %v2260
    %v2270 = vsub.f32 %v1835, %v2261
    %v2271 = vsub.f32 %v2016, %v2262
    %v2272 = vsub.f32 %v1839, %v2260
    %v2273 = vsub.f32 %v1841, %v2261
    %v2274 = vsub.f32 %v2021, %v2262
    %v2275 = vsub.f32 %v1845, %v2260
    %v2276 = vsub.f32 %v1847, %v2261
    %v2277 = vsub.f32 %v2026, %v2262
    %v2278 = vsub.f32 %v1851, %v2260
    %v2279 = vsub.f32 %v1853, %v2261
    %v2280 = vsub.f32 %v2031, %v2262
    %v2281 = vsub.f32 %v1857, %v2260
    %v2282 = vsub.f32 %v1859, %v2261
    %v2283 = vsub.f32 %v2036, %v2262
    %v2284 = vsub.f32 %v1863, %v2260
    %v2285 = vsub.f32 %v1865, %v2261
    %v2286 = vsub.f32 %v2041, %v2262
    %v2287 = vsub.f32 %v1869, %v2260
    %v2288 = vsub.f32 %v1871, %v2261
    %v2289 = vsub.f32 %v2046, %v2262
    %v2290 = vsub.f32 %v1875, %v2260
    %v2291 = vsub.f32 %v1877, %v2261
    %v2292 = vsub.f32 %v2051, %v2262
    %v2293 = vsub.f32 %v1881, %v2260
    %v2294 = vsub.f32 %v1883, %v2261
    %v2295 = vsub.f32 %v2056, %v2262
    %v2296 = vsub.f32 %v1887, %v2260
    %v2297 = vsub.f32 %v1889, %v2261
    %v2298 = vsub.f32 %v2061, %v2262
    %v2299 = vsub.f32 %v1893, %v2260
    %v2300 = vsub.f32 %v1895, %v2261
    %v2301 = vsub.f32 %v2066, %v2262
    %v2302 = vsub.f32 %v1899, %v2260
    %v2303 = vsub.f32 %v1901, %v2261
    %v2304 = vsub.f32 %v2071, %v2262
    %v2305 = vsub.f32 %v1905, %v2260
    %v2306 = vsub.f32 %v1907, %v2261
    %v2307 = vsub.f32 %v2076, %v2262
    %v2308 = vsub.f32 %v1911, %v2260
    %v2309 = vsub.f32 %v1913, %v2261
    %v2310 = vsub.f32 %v2081, %v2262
    %v2311 = vsub.f32 %v1917, %v2260
    %v2312 = vsub.f32 %v1919, %v2261
    %v2313 = vsub.f32 %v2086, %v2262
    %v2314 = vsub.f32 %v1923, %v2260
    %v2315 = vsub.f32 %v1925, %v2261
    %v2316 = vsub.f32 %v2091, %v2262
    %v2317 = vsub.f32 %v1929, %v2260
    %v2318 = vsub.f32 %v1931, %v2261
    %v2319 = vsub.f32 %v2096, %v2262
    %v2320 = vsub.f32 %v1935, %v2260
    %v2321 = vsub.f32 %v1937, %v2261
    %v2322 = vsub.f32 %v2101, %v2262
    %v2323 = vmul.f32 %v2263, %v300
    %v2324 = vmul.f32 %v2264, %v300
    %v2325 = vmul.f32 %v2265, %v300
    %v2326 = vmul.f32 %v2266, %v301
    %v2327 = vmul.f32 %v2267, %v301
    %v2328 = vmul.f32 %v2268, %v301
    %v2329 = vmul.f32 %v2269, %v302
    %v2330 = vmul.f32 %v2270, %v302
    %v2331 = vmul.f32 %v2271, %v302
    %v2332 = vmul.f32 %v2272, %v303
    %v2333 = vmul.f32 %v2273, %v303
    %v2334 = vmul.f32 %v2274, %v303
    %v2335 = vmul.f32 %v2275, %v304
    %v2336 = vmul.f32 %v2276, %v304
    %v2337 = vmul.f32 %v2277, %v304
    %v2338 = vmul.f32 %v2278, %v305
    %v2339 = vmul.f32 %v2279, %v305
    %v2340 = vmul.f32 %v2280, %v305
    %v2341 = vmul.f32 %v2281, %v306
    %v2342 = vmul.f32 %v2282, %v306
    %v2343 = vmul.f32 %v2283, %v306
    %v2344 = vmul.f32 %v2284, %v307
    %v2345 = vmul.f32 %v2285, %v307
    %v2346 = vmul.f32 %v2286, %v307
    %v2347 = vmul.f32 %v2287, %v308
    %v2348 = vmul.f32 %v2288, %v308
    %v2349 = vmul.f32 %v2289, %v308
    %v2350 = vmul.f32 %v2290, %v309
    %v2351 = vmul.f32 %v2291, %v309
    %v2352 = vmul.f32 %v2292, %v309
    %v2353 = vmul.f32 %v2293, %v310
    %v2354 = vmul.f32 %v2294, %v310
    %v2355 = vmul.f32 %v2295, %v310
    %v2356 = vmul.f32 %v2296, %v311
    %v2357 = vmul.f32 %v2297, %v311
    %v2358 = vmul.f32 %v2298, %v311
    %v2359 = vmul.f32 %v2299, %v312
    %v2360 = vmul.f32 %v2300, %v312
    %v2361 = vmul.f32 %v2301, %v312
    %v2362 = vmul.f32 %v2302, %v313
    %v2363 = vmul.f32 %v2303, %v313
    %v2364 = vmul.f32 %v2304, %v313
    %v2365 = vmul.f32 %v2305, %v314
    %v2366 = vmul.f32 %v2306, %v314
    %v2367 = vmul.f32 %v2307, %v314
    %v2368 = vmul.f32 %v2308, %v315
    %v2369 = vmul.f32 %v2309, %v315
    %v2370 = vmul.f32 %v2310, %v315
    %v2371 = vmul.f32 %v2311, %v316
    %v2372 = vmul.f32 %v2312, %v316
    %v2373 = vmul.f32 %v2313, %v316
    %v2374 = vmul.f32 %v2314, %v317
    %v2375 = vmul.f32 %v2315, %v317
    %v2376 = vmul.f32 %v2316, %v317
    %v2377 = vmul.f32 %v2317, %v318
    %v2378 = vmul.f32 %v2318, %v318
    %v2379 = vmul.f32 %v2319, %v318
    %v2380 = vmul.f32 %v2320, %v319
    %v2381 = vmul.f32 %v2321, %v319
    %v2382 = vmul.f32 %v2322, %v319
    %v2383 = vmul.f32 %v2323, %v2323
    %v2384 = vmul.f32 %v2324, %v2324
    %v2385 = vmul.f32 %v2325, %v2325
    %v2386 = vmul.f32 %v2326, %v2326
    %v2387 = vmul.f32 %v2327, %v2327
    %v2388 = vmul.f32 %v2328, %v2328
    %v2389 = vmul.f32 %v2329, %v2329
    %v2390 = vmul.f32 %v2330, %v2330
    %v2391 = vmul.f32 %v2331, %v2331
    %v2392 = vmul.f32 %v2332, %v2332
    %v2393 = vmul.f32 %v2333, %v2333
    %v2394 = vmul.f32 %v2334, %v2334
    %v2395 = vmul.f32 %v2335, %v2335
    %v2396 = vmul.f32 %v2336, %v2336
    %v2397 = vmul.f32 %v2337, %v2337
    %v2398 = vmul.f32 %v2338, %v2338
    %v2399 = vmul.f32 %v2339, %v2339
    %v2400 = vmul.f32 %v2340, %v2340
    %v2401 = vmul.f32 %v2341, %v2341
    %v2402 = vmul.f32 %v2342, %v2342
    %v2403 = vmul.f32 %v2343, %v2343
    %v2404 = vmul.f32 %v2344, %v2344
    %v2405 = vmul.f32 %v2345, %v2345
    %v2406 = vmul.f32 %v2346, %v2346
    %v2407 = vmul.f32 %v2347, %v2347
    %v2408 = vmul.f32 %v2348, %v2348
    %v2409 = vmul.f32 %v2349, %v2349
    %v2410 = vmul.f32 %v2350, %v2350
    %v2411 = vmul.f32 %v2351, %v2351
    %v2412 = vmul.f32 %v2352, %v2352
    %v2413 = vmul.f32 %v2353, %v2353
    %v2414 = vmul.f32 %v2354, %v2354
    %v2415 = vmul.f32 %v2355, %v2355
    %v2416 = vmul.f32 %v2356, %v2356
    %v2417 = vmul.f32 %v2357, %v2357
    %v2418 = vmul.f32 %v2358, %v2358
    %v2419 = vmul.f32 %v2359, %v2359
    %v2420 = vmul.f32 %v2360, %v2360
    %v2421 = vmul.f32 %v2361, %v2361
    %v2422 = vmul.f32 %v2362, %v2362
    %v2423 = vmul.f32 %v2363, %v2363
    %v2424 = vmul.f32 %v2364, %v2364
    %v2425 = vmul.f32 %v2365, %v2365
    %v2426 = vmul.f32 %v2366, %v2366
    %v2427 = vmul.f32 %v2367, %v2367
    %v2428 = vmul.f32 %v2368, %v2368
    %v2429 = vmul.f32 %v2369, %v2369
    %v2430 = vmul.f32 %v2370, %v2370
    %v2431 = vmul.f32 %v2371, %v2371
    %v2432 = vmul.f32 %v2372, %v2372
    %v2433 = vmul.f32 %v2373, %v2373
    %v2434 = vmul.f32 %v2374, %v2374
    %v2435 = vmul.f32 %v2375, %v2375
    %v2436 = vmul.f32 %v2376, %v2376
    %v2437 = vmul.f32 %v2377, %v2377
    %v2438 = vmul.f32 %v2378, %v2378
    %v2439 = vmul.f32 %v2379, %v2379
    %v2440 = vmul.f32 %v2380, %v2380
    %v2441 = vmul.f32 %v2381, %v2381
    %v2442 = vmul.f32 %v2382, %v2382
    %v2443 = vadd.f32 %v2383, %v2386
    %v2444 = vadd.f32 %v2443, %v2389
    %v2445 = vadd.f32 %v2444, %v2392
    %v2446 = vadd.f32 %v2445, %v2395
    %v2447 = vadd.f32 %v2446, %v2398
    %v2448 = vadd.f32 %v2447, %v2401
    %v2449 = vadd.f32 %v2448, %v2404
    %v2450 = vadd.f32 %v2449, %v2407
    %v2451 = vadd.f32 %v2450, %v2410
    %v2452 = vadd.f32 %v2451, %v2413
    %v2453 = vadd.f32 %v2452, %v2416
    %v2454 = vadd.f32 %v2453, %v2419
    %v2455 = vadd.f32 %v2454, %v2422
    %v2456 = vadd.f32 %v2455, %v2425
    %v2457 = vadd.f32 %v2456, %v2428
    %v2458 = vadd.f32 %v2457, %v2431
    %v2459 = vadd.f32 %v2458, %v2434
    %v2460 = vadd.f32 %v2459, %v2437
    %v2461 = vadd.f32 %v2460, %v2440
    %v2462 = vrot.slane %v2461, 4
    %v2463 = vadd.f32 %v2461, %v2462
    %v2464 = vrot.slane %v2463, 2
    %v2465 = vadd.f32 %v2463, %v2464
    %v2466 = vrot.slane %v2465, 1
    %v2467 = vadd.f32 %v2465, %v2466
    %v2468 = vadd.f32 %v2384, %v2387
    %v2469 = vadd.f32 %v2468, %v2390
    %v2470 = vadd.f32 %v2469, %v2393
    %v2471 = vadd.f32 %v2470, %v2396
    %v2472 = vadd.f32 %v2471, %v2399
    %v2473 = vadd.f32 %v2472, %v2402
    %v2474 = vadd.f32 %v2473, %v2405
    %v2475 = vadd.f32 %v2474, %v2408
    %v2476 = vadd.f32 %v2475, %v2411
    %v2477 = vadd.f32 %v2476, %v2414
    %v2478 = vadd.f32 %v2477, %v2417
    %v2479 = vadd.f32 %v2478, %v2420
    %v2480 = vadd.f32 %v2479, %v2423
    %v2481 = vadd.f32 %v2480, %v2426
    %v2482 = vadd.f32 %v2481, %v2429
    %v2483 = vadd.f32 %v2482, %v2432
    %v2484 = vadd.f32 %v2483, %v2435
    %v2485 = vadd.f32 %v2484, %v2438
    %v2486 = vadd.f32 %v2485, %v2441
    %v2487 = vrot.slane %v2486, 4
    %v2488 = vadd.f32 %v2486, %v2487
    %v2489 = vrot.slane %v2488, 2
    %v2490 = vadd.f32 %v2488, %v2489
    %v2491 = vrot.slane %v2490, 1
    %v2492 = vadd.f32 %v2490, %v2491
    %v2493 = vsel %vm2214, %v2385, 0.0
    %v2494 = vsel %vm2214, %v2388, 0.0
    %v2495 = vadd.f32 %v2493, %v2494
    %v2496 = vsel %vm2214, %v2391, 0.0
    %v2497 = vadd.f32 %v2495, %v2496
    %v2498 = vsel %vm2214, %v2394, 0.0
    %v2499 = vadd.f32 %v2497, %v2498
    %v2500 = vsel %vm2214, %v2397, 0.0
    %v2501 = vadd.f32 %v2499, %v2500
    %v2502 = vsel %vm2214, %v2400, 0.0
    %v2503 = vadd.f32 %v2501, %v2502
    %v2504 = vsel %vm2214, %v2403, 0.0
    %v2505 = vadd.f32 %v2503, %v2504
    %v2506 = vsel %vm2214, %v2406, 0.0
    %v2507 = vadd.f32 %v2505, %v2506
    %v2508 = vsel %vm2214, %v2409, 0.0
    %v2509 = vadd.f32 %v2507, %v2508
    %v2510 = vsel %vm2214, %v2412, 0.0
    %v2511 = vadd.f32 %v2509, %v2510
    %v2512 = vsel %vm2214, %v2415, 0.0
    %v2513 = vadd.f32 %v2511, %v2512
    %v2514 = vsel %vm2214, %v2418, 0.0
    %v2515 = vadd.f32 %v2513, %v2514
    %v2516 = vsel %vm2214, %v2421, 0.0
    %v2517 = vadd.f32 %v2515, %v2516
    %v2518 = vsel %vm2214, %v2424, 0.0
    %v2519 = vadd.f32 %v2517, %v2518
    %v2520 = vsel %vm2214, %v2427, 0.0
    %v2521 = vadd.f32 %v2519, %v2520
    %v2522 = vsel %vm2214, %v2430, 0.0
    %v2523 = vadd.f32 %v2521, %v2522
    %v2524 = vsel %vm2214, %v2433, 0.0
    %v2525 = vadd.f32 %v2523, %v2524
    %v2526 = vsel %vm2214, %v2436, 0.0
    %v2527 = vadd.f32 %v2525, %v2526
    %v2528 = vsel %vm2214, %v2439, 0.0
    %v2529 = vadd.f32 %v2527, %v2528
    %v2530 = vsel %vm2214, %v2442, 0.0
    %v2531 = vadd.f32 %v2529, %v2530
    %v2532 = vrot.slane %v2531, 4
    %v2533 = vadd.f32 %v2531, %v2532
    %v2534 = vrot.slane %v2533, 2
    %v2535 = vadd.f32 %v2533, %v2534
    %v2536 = vrot.slane %v2535, 1
    %v2537 = vadd.f32 %v2535, %v2536
    %v2538 = vmul.f32 %v2467, 0.00625
    %v2539 = vmul.f32 %v2492, 0.00625
    %v2540 = vmul.f32 %v2537, 0.00625
    %v2541 = vadd.f32 %v2538, 1e-05
    %v2542 = vadd.f32 %v2539, 1e-05
    %v2543 = vadd.f32 %v2540, 1e-05
    %v2544 = vrsqrt.pop %v2541
    %v2545 = vrsqrt.pop %v2542
    %v2546 = vrsqrt.pop %v2543
    %v2547 = vmul.f32 %v2263, %v2544
    %v2548 = vmul.f32 %v2264, %v2545
    %v2549 = vmul.f32 %v2265, %v2546
    %v2550 = vmul.f32 %v2266, %v2544
    %v2551 = vmul.f32 %v2267, %v2545
    %v2552 = vmul.f32 %v2268, %v2546
    %v2553 = vmul.f32 %v2269, %v2544
    %v2554 = vmul.f32 %v2270, %v2545
    %v2555 = vmul.f32 %v2271, %v2546
    %v2556 = vmul.f32 %v2272, %v2544
    %v2557 = vmul.f32 %v2273, %v2545
    %v2558 = vmul.f32 %v2274, %v2546
    %v2559 = vmul.f32 %v2275, %v2544
    %v2560 = vmul.f32 %v2276, %v2545
    %v2561 = vmul.f32 %v2277, %v2546
    %v2562 = vmul.f32 %v2278, %v2544
    %v2563 = vmul.f32 %v2279, %v2545
    %v2564 = vmul.f32 %v2280, %v2546
    %v2565 = vmul.f32 %v2281, %v2544
    %v2566 = vmul.f32 %v2282, %v2545
    %v2567 = vmul.f32 %v2283, %v2546
    %v2568 = vmul.f32 %v2284, %v2544
    %v2569 = vmul.f32 %v2285, %v2545
    %v2570 = vmul.f32 %v2286, %v2546
    %v2571 = vmul.f32 %v2287, %v2544
    %v2572 = vmul.f32 %v2288, %v2545
    %v2573 = vmul.f32 %v2289, %v2546
    %v2574 = vmul.f32 %v2290, %v2544
    %v2575 = vmul.f32 %v2291, %v2545
    %v2576 = vmul.f32 %v2292, %v2546
    %v2577 = vmul.f32 %v2293, %v2544
    %v2578 = vmul.f32 %v2294, %v2545
    %v2579 = vmul.f32 %v2295, %v2546
    %v2580 = vmul.f32 %v2296, %v2544
    %v2581 = vmul.f32 %v2297, %v2545
    %v2582 = vmul.f32 %v2298, %v2546
    %v2583 = vmul.f32 %v2299, %v2544
    %v2584 = vmul.f32 %v2300, %v2545
    %v2585 = vmul.f32 %v2301, %v2546
    %v2586 = vmul.f32 %v2302, %v2544
    %v2587 = vmul.f32 %v2303, %v2545
    %v2588 = vmul.f32 %v2304, %v2546
    %v2589 = vmul.f32 %v2305, %v2544
    %v2590 = vmul.f32 %v2306, %v2545
    %v2591 = vmul.f32 %v2307, %v2546
    %v2592 = vmul.f32 %v2308, %v2544
    %v2593 = vmul.f32 %v2309, %v2545
    %v2594 = vmul.f32 %v2310, %v2546
    %v2595 = vmul.f32 %v2311, %v2544
    %v2596 = vmul.f32 %v2312, %v2545
    %v2597 = vmul.f32 %v2313, %v2546
    %v2598 = vmul.f32 %v2314, %v2544
    %v2599 = vmul.f32 %v2315, %v2545
    %v2600 = vmul.f32 %v2316, %v2546
    %v2601 = vmul.f32 %v2317, %v2544
    %v2602 = vmul.f32 %v2318, %v2545
    %v2603 = vmul.f32 %v2319, %v2546
    %v2604 = vmul.f32 %v2320, %v2544
    %v2605 = vmul.f32 %v2321, %v2545
    %v2606 = vmul.f32 %v2322, %v2546
    %v2607 = vld [vmem:[#allocation12] sm:$0xff]
    %v2608 = vld [vmem:[#allocation12 + $0x8] sm:$0xff]
    %v2609 = vld [vmem:[#allocation12 + $0x10] sm:$0xff]
    %v2610 = vld [vmem:[#allocation12 + $0x18] sm:$0xff]
    %v2611 = vld [vmem:[#allocation12 + $0x20] sm:$0xff]
    %v2612 = vld [vmem:[#allocation12 + $0x28] sm:$0xff]
    %v2613 = vld [vmem:[#allocation12 + $0x30] sm:$0xff]
    %v2614 = vld [vmem:[#allocation12 + $0x38] sm:$0xff]
    %v2615 = vld [vmem:[#allocation12 + $0x40] sm:$0xff]
    %v2616 = vld [vmem:[#allocation12 + $0x48] sm:$0xff]
    %v2617 = vld [vmem:[#allocation12 + $0x50] sm:$0xff]
    %v2618 = vld [vmem:[#allocation12 + $0x58] sm:$0xff]
    %v2619 = vld [vmem:[#allocation12 + $0x60] sm:$0xff]
    %v2620 = vld [vmem:[#allocation12 + $0x68] sm:$0xff]
    %v2621 = vld [vmem:[#allocation12 + $0x70] sm:$0xff]
    %v2622 = vld [vmem:[#allocation12 + $0x78] sm:$0xff]
    %v2623 = vld [vmem:[#allocation12 + $0x80] sm:$0xff]
    %v2624 = vld [vmem:[#allocation12 + $0x88] sm:$0xff]
    %v2625 = vld [vmem:[#allocation12 + $0x90] sm:$0xff]
    %v2626 = vld [vmem:[#allocation12 + $0x98] sm:$0xff]
    %v2627 = vld [vmem:[#allocation12 + $0xa0] sm:$0xff]
    %v2628 = vld [vmem:[#allocation12 + $0xa8] sm:$0xff]
    %v2629 = vld [vmem:[#allocation12 + $0xb0] sm:$0xff]
    %v2630 = vld [vmem:[#allocation12 + $0xb8] sm:$0xff]
    %v2631 = vld [vmem:[#allocation12 + $0xc0] sm:$0xff]
    %v2632 = vld [vmem:[#allocation12 + $0xc8] sm:$0xff]
    %v2633 = vld [vmem:[#allocation12 + $0xd0] sm:$0xff]
    %v2634 = vld [vmem:[#allocation12 + $0xd8] sm:$0xff]
    %v2635 = vld [vmem:[#allocation12 + $0xe0] sm:$0xff]
    %v2636 = vld [vmem:[#allocation12 + $0xe8] sm:$0xff]
    %v2637 = vld [vmem:[#allocation12 + $0xf0] sm:$0xff]
    %v2638 = vld [vmem:[#allocation12 + $0xf8] sm:$0xff]
    %v2639 = vld [vmem:[#allocation12 + $0x100] sm:$0xff]
    %v2640 = vld [vmem:[#allocation12 + $0x108] sm:$0xff]
    %v2641 = vld [vmem:[#allocation12 + $0x110] sm:$0xff]
    %v2642 = vld [vmem:[#allocation12 + $0x118] sm:$0xff]
    %v2643 = vld [vmem:[#allocation12 + $0x120] sm:$0xff]
    %v2644 = vld [vmem:[#allocation12 + $0x128] sm:$0xf]
    %v2645 = vld [vmem:[#allocation13] sm:$0x1]
    %v2647 = vlaneseq
    %v2648 = vshrl.u32 %v2647, 7
    %v2649 = vsub.s32 0, %v2648
    %v2650 = vrot.slane %v2645, %v2649
    %v2653 = vsel %vm2214, %v2549, 0
    %v2656 = vsel %vm2214, %v2552, 0
    %v2659 = vsel %vm2214, %v2555, 0
    %v2662 = vsel %vm2214, %v2558, 0
    %v2665 = vsel %vm2214, %v2561, 0
    %v2668 = vsel %vm2214, %v2564, 0
    %v2671 = vsel %vm2214, %v2567, 0
    %v2674 = vsel %vm2214, %v2570, 0
    %v2677 = vsel %vm2214, %v2573, 0
    %v2680 = vsel %vm2214, %v2576, 0
    %v2683 = vsel %vm2214, %v2579, 0
    %v2686 = vsel %vm2214, %v2582, 0
    %v2689 = vsel %vm2214, %v2585, 0
    %v2692 = vsel %vm2214, %v2588, 0
    %v2695 = vsel %vm2214, %v2591, 0
    %v2698 = vsel %vm2214, %v2594, 0
    %v2701 = vsel %vm2214, %v2597, 0
    %v2704 = vsel %vm2214, %v2600, 0
    %v2707 = vsel %vm2214, %v2603, 0
    %v2710 = vsel %vm2214, %v2606, 0
    %vm2712 = vcmask 1043456
    %v2714 = vsel %vm2712, %v2644, 0
    %2716 = vmatprep.subr.mxu0 0.0
    %2717 = vmatpush1.msra.mxu0 %v2622
    %2718 = vmatprep.subr.mxu0 0.0
    %2719 = vmatpush1.msra.mxu0 %v2621
    %2720 = vmatprep.subr.mxu0 0.0
    %2721 = vmatpush1.msra.mxu0 %v2620
    %2722 = vmatprep.subr.mxu0 0.0
    %2723 = vmatpush1.msra.mxu0 %v2619
    %2724 = vmatprep.subr.mxu0 0.0
    %2725 = vmatpush1.msra.mxu0 %v2618
    %2726 = vmatprep.subr.mxu0 0.0
    %2727 = vmatpush1.msra.mxu0 %v2617
    %2728 = vmatprep.subr.mxu0 0.0
    %2729 = vmatpush1.msra.mxu0 %v2616
    %2730 = vmatprep.subr.mxu0 0.0
    %2731 = vmatpush1.msra.mxu0 %v2615
    %2732 = vmatprep.subr.mxu0 0.0
    %2733 = vmatpush1.msra.mxu0 %v2614
    %2734 = vmatprep.subr.mxu0 0.0
    %2735 = vmatpush1.msra.mxu0 %v2613
    %2736 = vmatprep.subr.mxu0 0.0
    %2737 = vmatpush1.msra.mxu0 %v2612
    %2738 = vmatprep.subr.mxu0 0.0
    %2739 = vmatpush1.msra.mxu0 %v2611
    %2740 = vmatprep.subr.mxu0 0.0
    %2741 = vmatpush1.msra.mxu0 %v2610
    %2742 = vmatprep.subr.mxu0 0.0
    %2743 = vmatpush1.msra.mxu0 %v2609
    %2744 = vmatprep.subr.mxu0 0.0
    %2745 = vmatpush1.msra.mxu0 %v2608
    %2746 = vmatprep.subr.mxu0 0.0
    %2747 = vmatpush1.msra.mxu0 %v2607
    %2748 = vmatprep.subr.mxu0 0.0
    %2749 = vmatpush2.msra.mxu0 %v2638
    %2750 = vmatprep.subr.mxu0 0.0
    %2751 = vmatpush2.msra.mxu0 %v2637
    %2752 = vmatprep.subr.mxu0 0.0
    %2753 = vmatpush2.msra.mxu0 %v2636
    %2754 = vmatprep.subr.mxu0 0.0
    %2755 = vmatpush2.msra.mxu0 %v2635
    %2756 = vmatprep.subr.mxu0 0.0
    %2757 = vmatpush2.msra.mxu0 %v2634
    %2758 = vmatprep.subr.mxu0 0.0
    %2759 = vmatpush2.msra.mxu0 %v2633
    %2760 = vmatprep.subr.mxu0 0.0
    %2761 = vmatpush2.msra.mxu0 %v2632
    %2762 = vmatprep.subr.mxu0 0.0
    %2763 = vmatpush2.msra.mxu0 %v2631
    %2764 = vmatprep.subr.mxu0 0.0
    %2765 = vmatpush2.msra.mxu0 %v2630
    %2766 = vmatprep.subr.mxu0 0.0
    %2767 = vmatpush2.msra.mxu0 %v2629
    %2768 = vmatprep.subr.mxu0 0.0
    %2769 = vmatpush2.msra.mxu0 %v2628
    %2770 = vmatprep.subr.mxu0 0.0
    %2771 = vmatpush2.msra.mxu0 %v2627
    %2772 = vmatprep.subr.mxu0 0.0
    %2773 = vmatpush2.msra.mxu0 %v2626
    %2774 = vmatprep.subr.mxu0 0.0
    %2775 = vmatpush2.msra.mxu0 %v2625
    %2776 = vmatprep.subr.mxu0 0.0
    %2777 = vmatpush2.msra.mxu0 %v2624
    %2778 = vmatprep.subr.mxu0 0.0
    %2779 = vmatpush2.msra.mxu0 %v2623
    %2780 = vmatprep.mubr.f32.mxu0 %v2548
    %2781 = vmatmul.mubr.f32.gmra.mxu0 %v2547
    %v2782 = vpop.f32.mrf.mxu0
    %v2783 = vadd.f32 %v2650, %v2782
    %v2784 = vpop.f32.mrf.mxu0
    %2785 = vmatprep.mubr.f32.mxu0 %v2551
    %2786 = vmatmul.mubr.f32.gmra.mxu0 %v2550
    %v2787 = vpop.f32.mrf.mxu0
    %v2788 = vadd.f32 %v2650, %v2787
    %v2789 = vpop.f32.mrf.mxu0
    %2790 = vmatprep.mubr.f32.mxu0 %v2554
    %2791 = vmatmul.mubr.f32.gmra.mxu0 %v2553
    %v2792 = vpop.f32.mrf.mxu0
    %v2793 = vadd.f32 %v2650, %v2792
    %v2794 = vpop.f32.mrf.mxu0
    %2795 = vmatprep.mubr.f32.mxu0 %v2557
    %2796 = vmatmul.mubr.f32.gmra.mxu0 %v2556
    %v2797 = vpop.f32.mrf.mxu0
    %v2798 = vadd.f32 %v2650, %v2797
    %v2799 = vpop.f32.mrf.mxu0
    %2800 = vmatprep.mubr.f32.mxu0 %v2560
    %2801 = vmatmul.mubr.f32.gmra.mxu0 %v2559
    %v2802 = vpop.f32.mrf.mxu0
    %v2803 = vadd.f32 %v2650, %v2802
    %v2804 = vpop.f32.mrf.mxu0
    %2805 = vmatprep.mubr.f32.mxu0 %v2563
    %2806 = vmatmul.mubr.f32.gmra.mxu0 %v2562
    %v2807 = vpop.f32.mrf.mxu0
    %v2808 = vadd.f32 %v2650, %v2807
    %v2809 = vpop.f32.mrf.mxu0
    %2810 = vmatprep.mubr.f32.mxu0 %v2566
    %2811 = vmatmul.mubr.f32.gmra.mxu0 %v2565
    %v2812 = vpop.f32.mrf.mxu0
    %v2813 = vadd.f32 %v2650, %v2812
    %v2814 = vpop.f32.mrf.mxu0
    %2815 = vmatprep.mubr.f32.mxu0 %v2569
    %2816 = vmatmul.mubr.f32.gmra.mxu0 %v2568
    %v2817 = vpop.f32.mrf.mxu0
    %v2818 = vadd.f32 %v2650, %v2817
    %v2819 = vpop.f32.mrf.mxu0
    %2820 = vmatprep.mubr.f32.mxu0 %v2572
    %2821 = vmatmul.mubr.f32.gmra.mxu0 %v2571
    %v2822 = vpop.f32.mrf.mxu0
    %v2823 = vadd.f32 %v2650, %v2822
    %v2824 = vpop.f32.mrf.mxu0
    %2825 = vmatprep.mubr.f32.mxu0 %v2575
    %2826 = vmatmul.mubr.f32.gmra.mxu0 %v2574
    %v2827 = vpop.f32.mrf.mxu0
    %v2828 = vadd.f32 %v2650, %v2827
    %v2829 = vpop.f32.mrf.mxu0
    %2830 = vmatprep.mubr.f32.mxu0 %v2578
    %2831 = vmatmul.mubr.f32.gmra.mxu0 %v2577
    %v2832 = vpop.f32.mrf.mxu0
    %v2833 = vadd.f32 %v2650, %v2832
    %v2834 = vpop.f32.mrf.mxu0
    %2835 = vmatprep.mubr.f32.mxu0 %v2581
    %2836 = vmatmul.mubr.f32.gmra.mxu0 %v2580
    %v2837 = vpop.f32.mrf.mxu0
    %v2838 = vadd.f32 %v2650, %v2837
    %v2839 = vpop.f32.mrf.mxu0
    %2840 = vmatprep.mubr.f32.mxu0 %v2584
    %2841 = vmatmul.mubr.f32.gmra.mxu0 %v2583
    %v2842 = vpop.f32.mrf.mxu0
    %v2843 = vadd.f32 %v2650, %v2842
    %v2844 = vpop.f32.mrf.mxu0
    %2845 = vmatprep.mubr.f32.mxu0 %v2587
    %2846 = vmatmul.mubr.f32.gmra.mxu0 %v2586
    %v2847 = vpop.f32.mrf.mxu0
    %v2848 = vadd.f32 %v2650, %v2847
    %v2849 = vpop.f32.mrf.mxu0
    %2850 = vmatprep.mubr.f32.mxu0 %v2590
    %2851 = vmatmul.mubr.f32.gmra.mxu0 %v2589
    %v2852 = vpop.f32.mrf.mxu0
    %v2853 = vadd.f32 %v2650, %v2852
    %v2854 = vpop.f32.mrf.mxu0
    %2855 = vmatprep.mubr.f32.mxu0 %v2593
    %2856 = vmatmul.mubr.f32.gmra.mxu0 %v2592
    %v2857 = vpop.f32.mrf.mxu0
    %v2858 = vadd.f32 %v2650, %v2857
    %v2859 = vpop.f32.mrf.mxu0
    %2860 = vmatprep.mubr.f32.mxu0 %v2596
    %2861 = vmatmul.mubr.f32.gmra.mxu0 %v2595
    %v2862 = vpop.f32.mrf.mxu0
    %v2863 = vadd.f32 %v2650, %v2862
    %v2864 = vpop.f32.mrf.mxu0
    %2865 = vmatprep.mubr.f32.mxu0 %v2599
    %2866 = vmatmul.mubr.f32.gmra.mxu0 %v2598
    %v2867 = vpop.f32.mrf.mxu0
    %v2868 = vadd.f32 %v2650, %v2867
    %v2869 = vpop.f32.mrf.mxu0
    %2870 = vmatprep.mubr.f32.mxu0 %v2602
    %2871 = vmatmul.mubr.f32.gmra.mxu0 %v2601
    %v2872 = vpop.f32.mrf.mxu0
    %v2873 = vadd.f32 %v2650, %v2872
    %v2874 = vpop.f32.mrf.mxu0
    %2875 = vmatprep.mubr.f32.mxu0 %v2605
    %2876 = vmatmul.mubr.f32.gmra.mxu0 %v2604
    %v2877 = vpop.f32.mrf.mxu0
    %v2878 = vadd.f32 %v2650, %v2877
    %v2879 = vpop.f32.mrf.mxu0
    %2880 = vdwg.mxu0
    %2881 = vmatprep.subr.mxu0 0.0
    %2882 = vmatpush1.msra.mxu0 0.0
    %2883 = vmatprep.subr.mxu0 0.0
    %2884 = vmatpush1.msra.mxu0 0.0
    %2885 = vmatprep.subr.mxu0 0.0
    %2886 = vmatpush1.msra.mxu0 0.0
    %2887 = vmatprep.subr.mxu0 0.0
    %2888 = vmatpush1.msra.mxu0 0.0
    %2889 = vmatprep.subr.mxu0 0.0
    %2890 = vmatpush1.msra.mxu0 0.0
    %2891 = vmatprep.subr.mxu0 0.0
    %2892 = vmatpush1.msra.mxu0 0.0
    %2893 = vmatprep.subr.mxu0 0.0
    %2894 = vmatpush1.msra.mxu0 0.0
    %2895 = vmatprep.subr.mxu0 0.0
    %2896 = vmatpush1.msra.mxu0 0.0
    %2897 = vmatprep.subr.mxu0 0.0
    %2898 = vmatpush1.msra.mxu0 0.0
    %2899 = vmatprep.subr.mxu0 0.0
    %2900 = vmatpush1.msra.mxu0 0.0
    %2901 = vmatprep.subr.mxu0 0.0
    %2902 = vmatpush1.msra.mxu0 %v2714
    %2903 = vmatprep.subr.mxu0 0.0
    %2904 = vmatpush1.msra.mxu0 %v2643
    %2905 = vmatprep.subr.mxu0 0.0
    %2906 = vmatpush1.msra.mxu0 %v2642
    %2907 = vmatprep.subr.mxu0 0.0
    %2908 = vmatpush1.msra.mxu0 %v2641
    %2909 = vmatprep.subr.mxu0 0.0
    %2910 = vmatpush1.msra.mxu0 %v2640
    %2911 = vmatprep.subr.mxu0 0.0
    %2912 = vmatpush1.msra.mxu0 %v2639
    %2913 = vmatprep.subr.mxu0 0.0
    %2914 = vmatpush2.msra.mxu0 0.0
    %2915 = vmatprep.subr.mxu0 0.0
    %2916 = vmatpush2.msra.mxu0 0.0
    %2917 = vmatprep.subr.mxu0 0.0
    %2918 = vmatpush2.msra.mxu0 0.0
    %2919 = vmatprep.subr.mxu0 0.0
    %2920 = vmatpush2.msra.mxu0 0.0
    %2921 = vmatprep.subr.mxu0 0.0
    %2922 = vmatpush2.msra.mxu0 0.0
    %2923 = vmatprep.subr.mxu0 0.0
    %2924 = vmatpush2.msra.mxu0 0.0
    %2925 = vmatprep.subr.mxu0 0.0
    %2926 = vmatpush2.msra.mxu0 0.0
    %2927 = vmatprep.subr.mxu0 0.0
    %2928 = vmatpush2.msra.mxu0 0.0
    %2929 = vmatprep.subr.mxu0 0.0
    %2930 = vmatpush2.msra.mxu0 0.0
    %2931 = vmatprep.subr.mxu0 0.0
    %2932 = vmatpush2.msra.mxu0 0.0
    %2933 = vmatprep.subr.mxu0 0.0
    %2934 = vmatpush2.msra.mxu0 0.0
    %2935 = vmatprep.subr.mxu0 0.0
    %2936 = vmatpush2.msra.mxu0 0.0
    %2937 = vmatprep.subr.mxu0 0.0
    %2938 = vmatpush2.msra.mxu0 0.0
    %2939 = vmatprep.subr.mxu0 0.0
    %2940 = vmatpush2.msra.mxu0 0.0
    %2941 = vmatprep.subr.mxu0 0.0
    %2942 = vmatpush2.msra.mxu0 0.0
    %2943 = vmatprep.subr.mxu0 0.0
    %2944 = vmatpush2.msra.mxu0 0.0
    %2945 = vmatprep.mubr.f32.mxu0 0.0
    %2946 = vmatmul.mubr.f32.gmra.mxu0 %v2653
    %v2947 = vpop.f32.mrf.mxu0
    %v2948 = vadd.f32 %v2783, %v2947
    %v2949 = vpop.f32.mrf.mxu0
    %2950 = vmatprep.mubr.f32.mxu0 0.0
    %2951 = vmatmul.mubr.f32.gmra.mxu0 %v2656
    %v2952 = vpop.f32.mrf.mxu0
    %v2953 = vadd.f32 %v2788, %v2952
    %v2954 = vpop.f32.mrf.mxu0
    %2955 = vmatprep.mubr.f32.mxu0 0.0
    %2956 = vmatmul.mubr.f32.gmra.mxu0 %v2659
    %v2957 = vpop.f32.mrf.mxu0
    %v2958 = vadd.f32 %v2793, %v2957
    %v2959 = vpop.f32.mrf.mxu0
    %2960 = vmatprep.mubr.f32.mxu0 0.0
    %2961 = vmatmul.mubr.f32.gmra.mxu0 %v2662
    %v2962 = vpop.f32.mrf.mxu0
    %v2963 = vadd.f32 %v2798, %v2962
    %v2964 = vpop.f32.mrf.mxu0
    %2965 = vmatprep.mubr.f32.mxu0 0.0
    %2966 = vmatmul.mubr.f32.gmra.mxu0 %v2665
    %v2967 = vpop.f32.mrf.mxu0
    %v2968 = vadd.f32 %v2803, %v2967
    %v2969 = vpop.f32.mrf.mxu0
    %2970 = vmatprep.mubr.f32.mxu0 0.0
    %2971 = vmatmul.mubr.f32.gmra.mxu0 %v2668
    %v2972 = vpop.f32.mrf.mxu0
    %v2973 = vadd.f32 %v2808, %v2972
    %v2974 = vpop.f32.mrf.mxu0
    %2975 = vmatprep.mubr.f32.mxu0 0.0
    %2976 = vmatmul.mubr.f32.gmra.mxu0 %v2671
    %v2977 = vpop.f32.mrf.mxu0
    %v2978 = vadd.f32 %v2813, %v2977
    %v2979 = vpop.f32.mrf.mxu0
    %2980 = vmatprep.mubr.f32.mxu0 0.0
    %2981 = vmatmul.mubr.f32.gmra.mxu0 %v2674
    %v2982 = vpop.f32.mrf.mxu0
    %v2983 = vadd.f32 %v2818, %v2982
    %v2984 = vpop.f32.mrf.mxu0
    %2985 = vmatprep.mubr.f32.mxu0 0.0
    %2986 = vmatmul.mubr.f32.gmra.mxu0 %v2677
    %v2987 = vpop.f32.mrf.mxu0
    %v2988 = vadd.f32 %v2823, %v2987
    %v2989 = vpop.f32.mrf.mxu0
    %2990 = vmatprep.mubr.f32.mxu0 0.0
    %2991 = vmatmul.mubr.f32.gmra.mxu0 %v2680
    %v2992 = vpop.f32.mrf.mxu0
    %v2993 = vadd.f32 %v2828, %v2992
    %v2994 = vpop.f32.mrf.mxu0
    %2995 = vmatprep.mubr.f32.mxu0 0.0
    %2996 = vmatmul.mubr.f32.gmra.mxu0 %v2683
    %v2997 = vpop.f32.mrf.mxu0
    %v2998 = vadd.f32 %v2833, %v2997
    %v2999 = vpop.f32.mrf.mxu0
    %3000 = vmatprep.mubr.f32.mxu0 0.0
    %3001 = vmatmul.mubr.f32.gmra.mxu0 %v2686
    %v3002 = vpop.f32.mrf.mxu0
    %v3003 = vadd.f32 %v2838, %v3002
    %v3004 = vpop.f32.mrf.mxu0
    %3005 = vmatprep.mubr.f32.mxu0 0.0
    %3006 = vmatmul.mubr.f32.gmra.mxu0 %v2689
    %v3007 = vpop.f32.mrf.mxu0
    %v3008 = vadd.f32 %v2843, %v3007
    %v3009 = vpop.f32.mrf.mxu0
    %3010 = vmatprep.mubr.f32.mxu0 0.0
    %3011 = vmatmul.mubr.f32.gmra.mxu0 %v2692
    %v3012 = vpop.f32.mrf.mxu0
    %v3013 = vadd.f32 %v2848, %v3012
    %v3014 = vpop.f32.mrf.mxu0
    %3015 = vmatprep.mubr.f32.mxu0 0.0
    %3016 = vmatmul.mubr.f32.gmra.mxu0 %v2695
    %v3017 = vpop.f32.mrf.mxu0
    %v3018 = vadd.f32 %v2853, %v3017
    %v3019 = vpop.f32.mrf.mxu0
    %3020 = vmatprep.mubr.f32.mxu0 0.0
    %3021 = vmatmul.mubr.f32.gmra.mxu0 %v2698
    %v3022 = vpop.f32.mrf.mxu0
    %v3023 = vadd.f32 %v2858, %v3022
    %v3024 = vpop.f32.mrf.mxu0
    %3025 = vmatprep.mubr.f32.mxu0 0.0
    %3026 = vmatmul.mubr.f32.gmra.mxu0 %v2701
    %v3027 = vpop.f32.mrf.mxu0
    %v3028 = vadd.f32 %v2863, %v3027
    %v3029 = vpop.f32.mrf.mxu0
    %3030 = vmatprep.mubr.f32.mxu0 0.0
    %3031 = vmatmul.mubr.f32.gmra.mxu0 %v2704
    %v3032 = vpop.f32.mrf.mxu0
    %v3033 = vadd.f32 %v2868, %v3032
    %v3034 = vpop.f32.mrf.mxu0
    %3035 = vmatprep.mubr.f32.mxu0 0.0
    %3036 = vmatmul.mubr.f32.gmra.mxu0 %v2707
    %v3037 = vpop.f32.mrf.mxu0
    %v3038 = vadd.f32 %v2873, %v3037
    %v3039 = vpop.f32.mrf.mxu0
    %3040 = vmatprep.mubr.f32.mxu0 0.0
    %3041 = vmatmul.mubr.f32.gmra.mxu0 %v2710
    %v3042 = vpop.f32.mrf.mxu0
    %v3043 = vadd.f32 %v2878, %v3042
    %v3044 = vpop.f32.mrf.mxu0
    %3045 = vdwg.mxu0
    %v3046 = vtanh.pop %v2948
    %v3047 = vtanh.pop %v2953
    %v3048 = vtanh.pop %v2958
    %v3049 = vtanh.pop %v2963
    %v3050 = vtanh.pop %v2968
    %v3051 = vtanh.pop %v2973
    %v3052 = vtanh.pop %v2978
    %v3053 = vtanh.pop %v2983
    %v3054 = vtanh.pop %v2988
    %v3055 = vtanh.pop %v2993
    %v3056 = vtanh.pop %v2998
    %v3057 = vtanh.pop %v3003
    %v3058 = vtanh.pop %v3008
    %v3059 = vtanh.pop %v3013
    %v3060 = vtanh.pop %v3018
    %v3061 = vtanh.pop %v3023
    %v3062 = vtanh.pop %v3028
    %v3063 = vtanh.pop %v3033
    %v3064 = vtanh.pop %v3038
    %v3065 = vtanh.pop %v3043
    %v3066 = vmul.f32 %v3046, %v300
    %v3067 = vmul.f32 %v3047, %v301
    %v3068 = vmul.f32 %v3048, %v302
    %v3069 = vmul.f32 %v3049, %v303
    %v3070 = vmul.f32 %v3050, %v304
    %v3071 = vmul.f32 %v3051, %v305
    %v3072 = vmul.f32 %v3052, %v306
    %v3073 = vmul.f32 %v3053, %v307
    %v3074 = vmul.f32 %v3054, %v308
    %v3075 = vmul.f32 %v3055, %v309
    %v3076 = vmul.f32 %v3056, %v310
    %v3077 = vmul.f32 %v3057, %v311
    %v3078 = vmul.f32 %v3058, %v312
    %v3079 = vmul.f32 %v3059, %v313
    %v3080 = vmul.f32 %v3060, %v314
    %v3081 = vmul.f32 %v3061, %v315
    %v3082 = vmul.f32 %v3062, %v316
    %v3083 = vmul.f32 %v3063, %v317
    %v3084 = vmul.f32 %v3064, %v318
    %v3085 = vmul.f32 %v3065, %v319
    %vm3086 = vcmask 818176
    %v3087 = vsel %vm3086, %v3066, 0.0
    %v3088 = vsel %vm3086, %v3067, 0.0
    %v3089 = vadd.f32 %v3087, %v3088
    %v3090 = vsel %vm3086, %v3068, 0.0
    %v3091 = vadd.f32 %v3089, %v3090
    %v3092 = vsel %vm3086, %v3069, 0.0
    %v3093 = vadd.f32 %v3091, %v3092
    %v3094 = vsel %vm3086, %v3070, 0.0
    %v3095 = vadd.f32 %v3093, %v3094
    %v3096 = vsel %vm3086, %v3071, 0.0
    %v3097 = vadd.f32 %v3095, %v3096
    %v3098 = vsel %vm3086, %v3072, 0.0
    %v3099 = vadd.f32 %v3097, %v3098
    %v3100 = vsel %vm3086, %v3073, 0.0
    %v3101 = vadd.f32 %v3099, %v3100
    %v3102 = vsel %vm3086, %v3074, 0.0
    %v3103 = vadd.f32 %v3101, %v3102
    %v3104 = vsel %vm3086, %v3075, 0.0
    %v3105 = vadd.f32 %v3103, %v3104
    %v3106 = vsel %vm3086, %v3076, 0.0
    %v3107 = vadd.f32 %v3105, %v3106
    %v3108 = vsel %vm3086, %v3077, 0.0
    %v3109 = vadd.f32 %v3107, %v3108
    %v3110 = vsel %vm3086, %v3078, 0.0
    %v3111 = vadd.f32 %v3109, %v3110
    %v3112 = vsel %vm3086, %v3079, 0.0
    %v3113 = vadd.f32 %v3111, %v3112
    %v3114 = vsel %vm3086, %v3080, 0.0
    %v3115 = vadd.f32 %v3113, %v3114
    %v3116 = vsel %vm3086, %v3081, 0.0
    %v3117 = vadd.f32 %v3115, %v3116
    %v3118 = vsel %vm3086, %v3082, 0.0
    %v3119 = vadd.f32 %v3117, %v3118
    %v3120 = vsel %vm3086, %v3083, 0.0
    %v3121 = vadd.f32 %v3119, %v3120
    %v3122 = vsel %vm3086, %v3084, 0.0
    %v3123 = vadd.f32 %v3121, %v3122
    %v3124 = vsel %vm3086, %v3085, 0.0
    %v3125 = vadd.f32 %v3123, %v3124
    %v3126 = vrot.slane %v3125, 4
    %v3127 = vadd.f32 %v3125, %v3126
    %v3128 = vrot.slane %v3127, 2
    %v3129 = vadd.f32 %v3127, %v3128
    %v3130 = vrot.slane %v3129, 1
    %v3131 = vadd.f32 %v3129, %v3130
    %v3132 = vmul.f32 %v3131, 0.00625
    %v3133 = vsub.f32 %v3046, %v3132
    %v3134 = vsub.f32 %v3047, %v3132
    %v3135 = vsub.f32 %v3048, %v3132
    %v3136 = vsub.f32 %v3049, %v3132
    %v3137 = vsub.f32 %v3050, %v3132
    %v3138 = vsub.f32 %v3051, %v3132
    %v3139 = vsub.f32 %v3052, %v3132
    %v3140 = vsub.f32 %v3053, %v3132
    %v3141 = vsub.f32 %v3054, %v3132
    %v3142 = vsub.f32 %v3055, %v3132
    %v3143 = vsub.f32 %v3056, %v3132
    %v3144 = vsub.f32 %v3057, %v3132
    %v3145 = vsub.f32 %v3058, %v3132
    %v3146 = vsub.f32 %v3059, %v3132
    %v3147 = vsub.f32 %v3060, %v3132
    %v3148 = vsub.f32 %v3061, %v3132
    %v3149 = vsub.f32 %v3062, %v3132
    %v3150 = vsub.f32 %v3063, %v3132
    %v3151 = vsub.f32 %v3064, %v3132
    %v3152 = vsub.f32 %v3065, %v3132
    %v3153 = vmul.f32 %v3133, %v300
    %v3154 = vmul.f32 %v3134, %v301
    %v3155 = vmul.f32 %v3135, %v302
    %v3156 = vmul.f32 %v3136, %v303
    %v3157 = vmul.f32 %v3137, %v304
    %v3158 = vmul.f32 %v3138, %v305
    %v3159 = vmul.f32 %v3139, %v306
    %v3160 = vmul.f32 %v3140, %v307
    %v3161 = vmul.f32 %v3141, %v308
    %v3162 = vmul.f32 %v3142, %v309
    %v3163 = vmul.f32 %v3143, %v310
    %v3164 = vmul.f32 %v3144, %v311
    %v3165 = vmul.f32 %v3145, %v312
    %v3166 = vmul.f32 %v3146, %v313
    %v3167 = vmul.f32 %v3147, %v314
    %v3168 = vmul.f32 %v3148, %v315
    %v3169 = vmul.f32 %v3149, %v316
    %v3170 = vmul.f32 %v3150, %v317
    %v3171 = vmul.f32 %v3151, %v318
    %v3172 = vmul.f32 %v3152, %v319
    %v3173 = vmul.f32 %v3153, %v3153
    %v3174 = vmul.f32 %v3154, %v3154
    %v3175 = vmul.f32 %v3155, %v3155
    %v3176 = vmul.f32 %v3156, %v3156
    %v3177 = vmul.f32 %v3157, %v3157
    %v3178 = vmul.f32 %v3158, %v3158
    %v3179 = vmul.f32 %v3159, %v3159
    %v3180 = vmul.f32 %v3160, %v3160
    %v3181 = vmul.f32 %v3161, %v3161
    %v3182 = vmul.f32 %v3162, %v3162
    %v3183 = vmul.f32 %v3163, %v3163
    %v3184 = vmul.f32 %v3164, %v3164
    %v3185 = vmul.f32 %v3165, %v3165
    %v3186 = vmul.f32 %v3166, %v3166
    %v3187 = vmul.f32 %v3167, %v3167
    %v3188 = vmul.f32 %v3168, %v3168
    %v3189 = vmul.f32 %v3169, %v3169
    %v3190 = vmul.f32 %v3170, %v3170
    %v3191 = vmul.f32 %v3171, %v3171
    %v3192 = vmul.f32 %v3172, %v3172
    %v3193 = vsel %vm3086, %v3173, 0.0
    %v3194 = vsel %vm3086, %v3174, 0.0
    %v3195 = vadd.f32 %v3193, %v3194
    %v3196 = vsel %vm3086, %v3175, 0.0
    %v3197 = vadd.f32 %v3195, %v3196
    %v3198 = vsel %vm3086, %v3176, 0.0
    %v3199 = vadd.f32 %v3197, %v3198
    %v3200 = vsel %vm3086, %v3177, 0.0
    %v3201 = vadd.f32 %v3199, %v3200
    %v3202 = vsel %vm3086, %v3178, 0.0
    %v3203 = vadd.f32 %v3201, %v3202
    %v3204 = vsel %vm3086, %v3179, 0.0
    %v3205 = vadd.f32 %v3203, %v3204
    %v3206 = vsel %vm3086, %v3180, 0.0
    %v3207 = vadd.f32 %v3205, %v3206
    %v3208 = vsel %vm3086, %v3181, 0.0
    %v3209 = vadd.f32 %v3207, %v3208
    %v3210 = vsel %vm3086, %v3182, 0.0
    %v3211 = vadd.f32 %v3209, %v3210
    %v3212 = vsel %vm3086, %v3183, 0.0
    %v3213 = vadd.f32 %v3211, %v3212
    %v3214 = vsel %vm3086, %v3184, 0.0
    %v3215 = vadd.f32 %v3213, %v3214
    %v3216 = vsel %vm3086, %v3185, 0.0
    %v3217 = vadd.f32 %v3215, %v3216
    %v3218 = vsel %vm3086, %v3186, 0.0
    %v3219 = vadd.f32 %v3217, %v3218
    %v3220 = vsel %vm3086, %v3187, 0.0
    %v3221 = vadd.f32 %v3219, %v3220
    %v3222 = vsel %vm3086, %v3188, 0.0
    %v3223 = vadd.f32 %v3221, %v3222
    %v3224 = vsel %vm3086, %v3189, 0.0
    %v3225 = vadd.f32 %v3223, %v3224
    %v3226 = vsel %vm3086, %v3190, 0.0
    %v3227 = vadd.f32 %v3225, %v3226
    %v3228 = vsel %vm3086, %v3191, 0.0
    %v3229 = vadd.f32 %v3227, %v3228
    %v3230 = vsel %vm3086, %v3192, 0.0
    %v3231 = vadd.f32 %v3229, %v3230
    %v3232 = vrot.slane %v3231, 4
    %v3233 = vadd.f32 %v3231, %v3232
    %v3234 = vrot.slane %v3233, 2
    %v3235 = vadd.f32 %v3233, %v3234
    %v3236 = vrot.slane %v3235, 1
    %v3237 = vadd.f32 %v3235, %v3236
    %v3238 = vmul.f32 %v3237, 0.00625
    %v3239 = vadd.f32 %v3238, 1e-05
    %v3240 = vrsqrt.pop %v3239
    %v3241 = vmul.f32 %v3133, %v3240
    %v3242 = vmul.f32 %v3134, %v3240
    %v3243 = vmul.f32 %v3135, %v3240
    %v3244 = vmul.f32 %v3136, %v3240
    %v3245 = vmul.f32 %v3137, %v3240
    %v3246 = vmul.f32 %v3138, %v3240
    %v3247 = vmul.f32 %v3139, %v3240
    %v3248 = vmul.f32 %v3140, %v3240
    %v3249 = vmul.f32 %v3141, %v3240
    %v3250 = vmul.f32 %v3142, %v3240
    %v3251 = vmul.f32 %v3143, %v3240
    %v3252 = vmul.f32 %v3144, %v3240
    %v3253 = vmul.f32 %v3145, %v3240
    %v3254 = vmul.f32 %v3146, %v3240
    %v3255 = vmul.f32 %v3147, %v3240
    %v3256 = vmul.f32 %v3148, %v3240
    %v3257 = vmul.f32 %v3149, %v3240
    %v3258 = vmul.f32 %v3150, %v3240
    %v3259 = vmul.f32 %v3151, %v3240
    %v3260 = vmul.f32 %v3152, %v3240
    %v3261 = vld [vmem:[%s11] sm:$0x1]
    %v3263 = vlaneseq
    %v3264 = vshrl.u32 %v3263, 7
    %v3265 = vsub.s32 0, %v3264
    %v3266 = vrot.slane %v3261, %v3265
    %v3268 = vmul.f32 %v3241, %v3266
    %v3269 = vmul.f32 %v3242, %v3266
    %v3270 = vmul.f32 %v3243, %v3266
    %v3271 = vmul.f32 %v3244, %v3266
    %v3272 = vmul.f32 %v3245, %v3266
    %v3273 = vmul.f32 %v3246, %v3266
    %v3274 = vmul.f32 %v3247, %v3266
    %v3275 = vmul.f32 %v3248, %v3266
    %v3276 = vmul.f32 %v3249, %v3266
    %v3277 = vmul.f32 %v3250, %v3266
    %v3278 = vmul.f32 %v3251, %v3266
    %v3279 = vmul.f32 %v3252, %v3266
    %v3280 = vmul.f32 %v3253, %v3266
    %v3281 = vmul.f32 %v3254, %v3266
    %v3282 = vmul.f32 %v3255, %v3266
    %v3283 = vmul.f32 %v3256, %v3266
    %v3284 = vmul.f32 %v3257, %v3266
    %v3285 = vmul.f32 %v3258, %v3266
    %v3286 = vmul.f32 %v3259, %v3266
    %v3287 = vmul.f32 %v3260, %v3266
    %v3288 = vld [vmem:[%s12] sm:$0x1]
    %v3290 = vlaneseq
    %v3291 = vshrl.u32 %v3290, 7
    %v3292 = vsub.s32 0, %v3291
    %v3293 = vrot.slane %v3288, %v3292
    %v3295 = vadd.f32 %v3268, %v3293
    %v3296 = vadd.f32 %v3269, %v3293
    %v3297 = vadd.f32 %v3270, %v3293
    %v3298 = vadd.f32 %v3271, %v3293
    %v3299 = vadd.f32 %v3272, %v3293
    %v3300 = vadd.f32 %v3273, %v3293
    %v3301 = vadd.f32 %v3274, %v3293
    %v3302 = vadd.f32 %v3275, %v3293
    %v3303 = vadd.f32 %v3276, %v3293
    %v3304 = vadd.f32 %v3277, %v3293
    %v3305 = vadd.f32 %v3278, %v3293
    %v3306 = vadd.f32 %v3279, %v3293
    %v3307 = vadd.f32 %v3280, %v3293
    %v3308 = vadd.f32 %v3281, %v3293
    %v3309 = vadd.f32 %v3282, %v3293
    %v3310 = vadd.f32 %v3283, %v3293
    %v3311 = vadd.f32 %v3284, %v3293
    %v3312 = vadd.f32 %v3285, %v3293
    %v3313 = vadd.f32 %v3286, %v3293
    %v3314 = vadd.f32 %v3287, %v3293
    %v3315 = vld [vmem:[%s13] sm:$0xff]
    %v3316 = vld [vmem:[%s13 + $0x8] sm:$0xff]
    %v3317 = vld [vmem:[%s13 + $0x10] sm:$0xff]
    %v3318 = vld [vmem:[%s13 + $0x18] sm:$0xff]
    %v3319 = vld [vmem:[%s13 + $0x20] sm:$0xff]
    %v3320 = vld [vmem:[%s13 + $0x28] sm:$0xff]
    %v3321 = vld [vmem:[%s13 + $0x30] sm:$0xff]
    %v3322 = vld [vmem:[%s13 + $0x38] sm:$0xff]
    %v3323 = vld [vmem:[%s13 + $0x40] sm:$0xff]
    %v3324 = vld [vmem:[%s13 + $0x48] sm:$0xff]
    %v3325 = vld [vmem:[%s13 + $0x50] sm:$0xff]
    %v3326 = vld [vmem:[%s13 + $0x58] sm:$0xff]
    %v3327 = vld [vmem:[%s13 + $0x60] sm:$0xf]
    %v3328 = vld [vmem:[#allocation15] sm:$0x1]
    %v3330 = vlaneseq
    %v3331 = vshrl.u32 %v3330, 7
    %v3332 = vsub.s32 0, %v3331
    %v3333 = vrot.slane %v3328, %v3332
    %v3336 = vsel %vm3086, %v3295, 0
    %v3339 = vsel %vm3086, %v3296, 0
    %v3342 = vsel %vm3086, %v3297, 0
    %v3345 = vsel %vm3086, %v3298, 0
    %v3348 = vsel %vm3086, %v3299, 0
    %v3351 = vsel %vm3086, %v3300, 0
    %v3354 = vsel %vm3086, %v3301, 0
    %v3357 = vsel %vm3086, %v3302, 0
    %v3360 = vsel %vm3086, %v3303, 0
    %v3363 = vsel %vm3086, %v3304, 0
    %v3366 = vsel %vm3086, %v3305, 0
    %v3369 = vsel %vm3086, %v3306, 0
    %v3372 = vsel %vm3086, %v3307, 0
    %v3375 = vsel %vm3086, %v3308, 0
    %v3378 = vsel %vm3086, %v3309, 0
    %v3381 = vsel %vm3086, %v3310, 0
    %v3384 = vsel %vm3086, %v3311, 0
    %v3387 = vsel %vm3086, %v3312, 0
    %v3390 = vsel %vm3086, %v3313, 0
    %v3393 = vsel %vm3086, %v3314, 0
    %v3396 = vsel %vm2712, %v3327, 0
    %3398 = vmatprep.subr.mxu0 0.0
    %3399 = vmatpush1.msra.mxu0 0.0
    %3400 = vmatprep.subr.mxu0 0.0
    %3401 = vmatpush1.msra.mxu0 0.0
    %3402 = vmatprep.subr.mxu0 0.0
    %3403 = vmatpush1.msra.mxu0 0.0
    %3404 = vmatprep.subr.mxu0 0.0
    %3405 = vmatpush1.msra.mxu0 %v3396
    %3406 = vmatprep.subr.mxu0 0.0
    %3407 = vmatpush1.msra.mxu0 %v3326
    %3408 = vmatprep.subr.mxu0 0.0
    %3409 = vmatpush1.msra.mxu0 %v3325
    %3410 = vmatprep.subr.mxu0 0.0
    %3411 = vmatpush1.msra.mxu0 %v3324
    %3412 = vmatprep.subr.mxu0 0.0
    %3413 = vmatpush1.msra.mxu0 %v3323
    %3414 = vmatprep.subr.mxu0 0.0
    %3415 = vmatpush1.msra.mxu0 %v3322
    %3416 = vmatprep.subr.mxu0 0.0
    %3417 = vmatpush1.msra.mxu0 %v3321
    %3418 = vmatprep.subr.mxu0 0.0
    %3419 = vmatpush1.msra.mxu0 %v3320
    %3420 = vmatprep.subr.mxu0 0.0
    %3421 = vmatpush1.msra.mxu0 %v3319
    %3422 = vmatprep.subr.mxu0 0.0
    %3423 = vmatpush1.msra.mxu0 %v3318
    %3424 = vmatprep.subr.mxu0 0.0
    %3425 = vmatpush1.msra.mxu0 %v3317
    %3426 = vmatprep.subr.mxu0 0.0
    %3427 = vmatpush1.msra.mxu0 %v3316
    %3428 = vmatprep.subr.mxu0 0.0
    %3429 = vmatpush1.msra.mxu0 %v3315
    %3430 = vmatprep.subr.mxu0 0.0
    %3431 = vmatpush2.msra.mxu0 0.0
    %3432 = vmatprep.subr.mxu0 0.0
    %3433 = vmatpush2.msra.mxu0 0.0
    %3434 = vmatprep.subr.mxu0 0.0
    %3435 = vmatpush2.msra.mxu0 0.0
    %3436 = vmatprep.subr.mxu0 0.0
    %3437 = vmatpush2.msra.mxu0 0.0
    %3438 = vmatprep.subr.mxu0 0.0
    %3439 = vmatpush2.msra.mxu0 0.0
    %3440 = vmatprep.subr.mxu0 0.0
    %3441 = vmatpush2.msra.mxu0 0.0
    %3442 = vmatprep.subr.mxu0 0.0
    %3443 = vmatpush2.msra.mxu0 0.0
    %3444 = vmatprep.subr.mxu0 0.0
    %3445 = vmatpush2.msra.mxu0 0.0
    %3446 = vmatprep.subr.mxu0 0.0
    %3447 = vmatpush2.msra.mxu0 0.0
    %3448 = vmatprep.subr.mxu0 0.0
    %3449 = vmatpush2.msra.mxu0 0.0
    %3450 = vmatprep.subr.mxu0 0.0
    %3451 = vmatpush2.msra.mxu0 0.0
    %3452 = vmatprep.subr.mxu0 0.0
    %3453 = vmatpush2.msra.mxu0 0.0
    %3454 = vmatprep.subr.mxu0 0.0
    %3455 = vmatpush2.msra.mxu0 0.0
    %3456 = vmatprep.subr.mxu0 0.0
    %3457 = vmatpush2.msra.mxu0 0.0
    %3458 = vmatprep.subr.mxu0 0.0
    %3459 = vmatpush2.msra.mxu0 0.0
    %3460 = vmatprep.subr.mxu0 0.0
    %3461 = vmatpush2.msra.mxu0 0.0
    %3462 = vmatprep.mubr.f32.mxu0 0.0
    %3463 = vmatmul.mubr.f32.gmra.mxu0 %v3336
    %v3464 = vpop.f32.mrf.mxu0
    %v3465 = vadd.f32 %v3333, %v3464
    %v3466 = vpop.f32.mrf.mxu0
    %3467 = vmatprep.mubr.f32.mxu0 0.0
    %3468 = vmatmul.mubr.f32.gmra.mxu0 %v3339
    %v3469 = vpop.f32.mrf.mxu0
    %v3470 = vadd.f32 %v3333, %v3469
    %v3471 = vpop.f32.mrf.mxu0
    %3472 = vmatprep.mubr.f32.mxu0 0.0
    %3473 = vmatmul.mubr.f32.gmra.mxu0 %v3342
    %v3474 = vpop.f32.mrf.mxu0
    %v3475 = vadd.f32 %v3333, %v3474
    %v3476 = vpop.f32.mrf.mxu0
    %3477 = vmatprep.mubr.f32.mxu0 0.0
    %3478 = vmatmul.mubr.f32.gmra.mxu0 %v3345
    %v3479 = vpop.f32.mrf.mxu0
    %v3480 = vadd.f32 %v3333, %v3479
    %v3481 = vpop.f32.mrf.mxu0
    %3482 = vmatprep.mubr.f32.mxu0 0.0
    %3483 = vmatmul.mubr.f32.gmra.mxu0 %v3348
    %v3484 = vpop.f32.mrf.mxu0
    %v3485 = vadd.f32 %v3333, %v3484
    %v3486 = vpop.f32.mrf.mxu0
    %3487 = vmatprep.mubr.f32.mxu0 0.0
    %3488 = vmatmul.mubr.f32.gmra.mxu0 %v3351
    %v3489 = vpop.f32.mrf.mxu0
    %v3490 = vadd.f32 %v3333, %v3489
    %v3491 = vpop.f32.mrf.mxu0
    %3492 = vmatprep.mubr.f32.mxu0 0.0
    %3493 = vmatmul.mubr.f32.gmra.mxu0 %v3354
    %v3494 = vpop.f32.mrf.mxu0
    %v3495 = vadd.f32 %v3333, %v3494
    %v3496 = vpop.f32.mrf.mxu0
    %3497 = vmatprep.mubr.f32.mxu0 0.0
    %3498 = vmatmul.mubr.f32.gmra.mxu0 %v3357
    %v3499 = vpop.f32.mrf.mxu0
    %v3500 = vadd.f32 %v3333, %v3499
    %v3501 = vpop.f32.mrf.mxu0
    %3502 = vmatprep.mubr.f32.mxu0 0.0
    %3503 = vmatmul.mubr.f32.gmra.mxu0 %v3360
    %v3504 = vpop.f32.mrf.mxu0
    %v3505 = vadd.f32 %v3333, %v3504
    %v3506 = vpop.f32.mrf.mxu0
    %3507 = vmatprep.mubr.f32.mxu0 0.0
    %3508 = vmatmul.mubr.f32.gmra.mxu0 %v3363
    %v3509 = vpop.f32.mrf.mxu0
    %v3510 = vadd.f32 %v3333, %v3509
    %v3511 = vpop.f32.mrf.mxu0
    %3512 = vmatprep.mubr.f32.mxu0 0.0
    %3513 = vmatmul.mubr.f32.gmra.mxu0 %v3366
    %v3514 = vpop.f32.mrf.mxu0
    %v3515 = vadd.f32 %v3333, %v3514
    %v3516 = vpop.f32.mrf.mxu0
    %3517 = vmatprep.mubr.f32.mxu0 0.0
    %3518 = vmatmul.mubr.f32.gmra.mxu0 %v3369
    %v3519 = vpop.f32.mrf.mxu0
    %v3520 = vadd.f32 %v3333, %v3519
    %v3521 = vpop.f32.mrf.mxu0
    %3522 = vmatprep.mubr.f32.mxu0 0.0
    %3523 = vmatmul.mubr.f32.gmra.mxu0 %v3372
    %v3524 = vpop.f32.mrf.mxu0
    %v3525 = vadd.f32 %v3333, %v3524
    %v3526 = vpop.f32.mrf.mxu0
    %3527 = vmatprep.mubr.f32.mxu0 0.0
    %3528 = vmatmul.mubr.f32.gmra.mxu0 %v3375
    %v3529 = vpop.f32.mrf.mxu0
    %v3530 = vadd.f32 %v3333, %v3529
    %v3531 = vpop.f32.mrf.mxu0
    %3532 = vmatprep.mubr.f32.mxu0 0.0
    %3533 = vmatmul.mubr.f32.gmra.mxu0 %v3378
    %v3534 = vpop.f32.mrf.mxu0
    %v3535 = vadd.f32 %v3333, %v3534
    %v3536 = vpop.f32.mrf.mxu0
    %3537 = vmatprep.mubr.f32.mxu0 0.0
    %3538 = vmatmul.mubr.f32.gmra.mxu0 %v3381
    %v3539 = vpop.f32.mrf.mxu0
    %v3540 = vadd.f32 %v3333, %v3539
    %v3541 = vpop.f32.mrf.mxu0
    %3542 = vmatprep.mubr.f32.mxu0 0.0
    %3543 = vmatmul.mubr.f32.gmra.mxu0 %v3384
    %v3544 = vpop.f32.mrf.mxu0
    %v3545 = vadd.f32 %v3333, %v3544
    %v3546 = vpop.f32.mrf.mxu0
    %3547 = vmatprep.mubr.f32.mxu0 0.0
    %3548 = vmatmul.mubr.f32.gmra.mxu0 %v3387
    %v3549 = vpop.f32.mrf.mxu0
    %v3550 = vadd.f32 %v3333, %v3549
    %v3551 = vpop.f32.mrf.mxu0
    %3552 = vmatprep.mubr.f32.mxu0 0.0
    %3553 = vmatmul.mubr.f32.gmra.mxu0 %v3390
    %v3554 = vpop.f32.mrf.mxu0
    %v3555 = vadd.f32 %v3333, %v3554
    %v3556 = vpop.f32.mrf.mxu0
    %3557 = vmatprep.mubr.f32.mxu0 0.0
    %3558 = vmatmul.mubr.f32.gmra.mxu0 %v3393
    %v3559 = vpop.f32.mrf.mxu0
    %v3560 = vadd.f32 %v3333, %v3559
    %v3561 = vpop.f32.mrf.mxu0
    %3562 = vdwg.mxu0
    %v3563 = vtanh.pop %v3465
    %v3564 = vtanh.pop %v3470
    %v3565 = vtanh.pop %v3475
    %v3566 = vtanh.pop %v3480
    %v3567 = vtanh.pop %v3485
    %v3568 = vtanh.pop %v3490
    %v3569 = vtanh.pop %v3495
    %v3570 = vtanh.pop %v3500
    %v3571 = vtanh.pop %v3505
    %v3572 = vtanh.pop %v3510
    %v3573 = vtanh.pop %v3515
    %v3574 = vtanh.pop %v3520
    %v3575 = vtanh.pop %v3525
    %v3576 = vtanh.pop %v3530
    %v3577 = vtanh.pop %v3535
    %v3578 = vtanh.pop %v3540
    %v3579 = vtanh.pop %v3545
    %v3580 = vtanh.pop %v3550
    %v3581 = vtanh.pop %v3555
    %v3582 = vtanh.pop %v3560
    %v3583 = vld [vmem:[%s15] sm:$0xff]
    %v3584 = vld [vmem:[%s15 + $0x8] sm:$0xff]
    %v3585 = vld [vmem:[%s15 + $0x10] sm:$0xff]
    %v3586 = vld [vmem:[%s15 + $0x18] sm:$0xff]
    %v3587 = vld [vmem:[%s15 + $0x20] sm:$0xff]
    %v3588 = vld [vmem:[%s15 + $0x28] sm:$0xff]
    %v3589 = vld [vmem:[%s15 + $0x30] sm:$0xff]
    %v3590 = vld [vmem:[%s15 + $0x38] sm:$0xff]
    %v3591 = vld [vmem:[%s15 + $0x40] sm:$0xff]
    %v3592 = vld [vmem:[%s15 + $0x48] sm:$0xff]
    %v3593 = vld [vmem:[%s15 + $0x50] sm:$0xff]
    %v3594 = vld [vmem:[%s15 + $0x58] sm:$0xff]
    %v3595 = vld [vmem:[%s15 + $0x60] sm:$0xf]
    %v3596 = vld [vmem:[%s16] sm:$0x1]
    %v3598 = vlaneseq
    %v3599 = vshrl.u32 %v3598, 7
    %v3600 = vsub.s32 0, %v3599
    %v3601 = vrot.slane %v3596, %v3600
    %v3604 = vsel %vm3086, %v3563, 0
    %v3607 = vsel %vm3086, %v3564, 0
    %v3610 = vsel %vm3086, %v3565, 0
    %v3613 = vsel %vm3086, %v3566, 0
    %v3616 = vsel %vm3086, %v3567, 0
    %v3619 = vsel %vm3086, %v3568, 0
    %v3622 = vsel %vm3086, %v3569, 0
    %v3625 = vsel %vm3086, %v3570, 0
    %v3628 = vsel %vm3086, %v3571, 0
    %v3631 = vsel %vm3086, %v3572, 0
    %v3634 = vsel %vm3086, %v3573, 0
    %v3637 = vsel %vm3086, %v3574, 0
    %v3640 = vsel %vm3086, %v3575, 0
    %v3643 = vsel %vm3086, %v3576, 0
    %v3646 = vsel %vm3086, %v3577, 0
    %v3649 = vsel %vm3086, %v3578, 0
    %v3652 = vsel %vm3086, %v3579, 0
    %v3655 = vsel %vm3086, %v3580, 0
    %v3658 = vsel %vm3086, %v3581, 0
    %v3661 = vsel %vm3086, %v3582, 0
    %v3664 = vsel %vm2712, %v3595, 0
    %3666 = vmatprep.subr.mxu0 0.0
    %3667 = vmatpush1.msra.mxu0 0.0
    %3668 = vmatprep.subr.mxu0 0.0
    %3669 = vmatpush1.msra.mxu0 0.0
    %3670 = vmatprep.subr.mxu0 0.0
    %3671 = vmatpush1.msra.mxu0 0.0
    %3672 = vmatprep.subr.mxu0 0.0
    %3673 = vmatpush1.msra.mxu0 %v3664
    %3674 = vmatprep.subr.mxu0 0.0
    %3675 = vmatpush1.msra.mxu0 %v3594
    %3676 = vmatprep.subr.mxu0 0.0
    %3677 = vmatpush1.msra.mxu0 %v3593
    %3678 = vmatprep.subr.mxu0 0.0
    %3679 = vmatpush1.msra.mxu0 %v3592
    %3680 = vmatprep.subr.mxu0 0.0
    %3681 = vmatpush1.msra.mxu0 %v3591
    %3682 = vmatprep.subr.mxu0 0.0
    %3683 = vmatpush1.msra.mxu0 %v3590
    %3684 = vmatprep.subr.mxu0 0.0
    %3685 = vmatpush1.msra.mxu0 %v3589
    %3686 = vmatprep.subr.mxu0 0.0
    %3687 = vmatpush1.msra.mxu0 %v3588
    %3688 = vmatprep.subr.mxu0 0.0
    %3689 = vmatpush1.msra.mxu0 %v3587
    %3690 = vmatprep.subr.mxu0 0.0
    %3691 = vmatpush1.msra.mxu0 %v3586
    %3692 = vmatprep.subr.mxu0 0.0
    %3693 = vmatpush1.msra.mxu0 %v3585
    %3694 = vmatprep.subr.mxu0 0.0
    %3695 = vmatpush1.msra.mxu0 %v3584
    %3696 = vmatprep.subr.mxu0 0.0
    %3697 = vmatpush1.msra.mxu0 %v3583
    %3698 = vmatprep.subr.mxu0 0.0
    %3699 = vmatpush2.msra.mxu0 0.0
    %3700 = vmatprep.subr.mxu0 0.0
    %3701 = vmatpush2.msra.mxu0 0.0
    %3702 = vmatprep.subr.mxu0 0.0
    %3703 = vmatpush2.msra.mxu0 0.0
    %3704 = vmatprep.subr.mxu0 0.0
    %3705 = vmatpush2.msra.mxu0 0.0
    %3706 = vmatprep.subr.mxu0 0.0
    %3707 = vmatpush2.msra.mxu0 0.0
    %3708 = vmatprep.subr.mxu0 0.0
    %3709 = vmatpush2.msra.mxu0 0.0
    %3710 = vmatprep.subr.mxu0 0.0
    %3711 = vmatpush2.msra.mxu0 0.0
    %3712 = vmatprep.subr.mxu0 0.0
    %3713 = vmatpush2.msra.mxu0 0.0
    %3714 = vmatprep.subr.mxu0 0.0
    %3715 = vmatpush2.msra.mxu0 0.0
    %3716 = vmatprep.subr.mxu0 0.0
    %3717 = vmatpush2.msra.mxu0 0.0
    %3718 = vmatprep.subr.mxu0 0.0
    %3719 = vmatpush2.msra.mxu0 0.0
    %3720 = vmatprep.subr.mxu0 0.0
    %3721 = vmatpush2.msra.mxu0 0.0
    %3722 = vmatprep.subr.mxu0 0.0
    %3723 = vmatpush2.msra.mxu0 0.0
    %3724 = vmatprep.subr.mxu0 0.0
    %3725 = vmatpush2.msra.mxu0 0.0
    %3726 = vmatprep.subr.mxu0 0.0
    %3727 = vmatpush2.msra.mxu0 0.0
    %3728 = vmatprep.subr.mxu0 0.0
    %3729 = vmatpush2.msra.mxu0 0.0
    %3730 = vmatprep.mubr.f32.mxu0 0.0
    %3731 = vmatmul.mubr.f32.gmra.mxu0 %v3604
    %v3732 = vpop.f32.mrf.mxu0
    %v3733 = vadd.f32 %v3601, %v3732
    %v3734 = vpop.f32.mrf.mxu0
    %3735 = vmatprep.mubr.f32.mxu0 0.0
    %3736 = vmatmul.mubr.f32.gmra.mxu0 %v3607
    %v3737 = vpop.f32.mrf.mxu0
    %v3738 = vadd.f32 %v3601, %v3737
    %v3739 = vpop.f32.mrf.mxu0
    %3740 = vmatprep.mubr.f32.mxu0 0.0
    %3741 = vmatmul.mubr.f32.gmra.mxu0 %v3610
    %v3742 = vpop.f32.mrf.mxu0
    %v3743 = vadd.f32 %v3601, %v3742
    %v3744 = vpop.f32.mrf.mxu0
    %3745 = vmatprep.mubr.f32.mxu0 0.0
    %3746 = vmatmul.mubr.f32.gmra.mxu0 %v3613
    %v3747 = vpop.f32.mrf.mxu0
    %v3748 = vadd.f32 %v3601, %v3747
    %v3749 = vpop.f32.mrf.mxu0
    %3750 = vmatprep.mubr.f32.mxu0 0.0
    %3751 = vmatmul.mubr.f32.gmra.mxu0 %v3616
    %v3752 = vpop.f32.mrf.mxu0
    %v3753 = vadd.f32 %v3601, %v3752
    %v3754 = vpop.f32.mrf.mxu0
    %3755 = vmatprep.mubr.f32.mxu0 0.0
    %3756 = vmatmul.mubr.f32.gmra.mxu0 %v3619
    %v3757 = vpop.f32.mrf.mxu0
    %v3758 = vadd.f32 %v3601, %v3757
    %v3759 = vpop.f32.mrf.mxu0
    %3760 = vmatprep.mubr.f32.mxu0 0.0
    %3761 = vmatmul.mubr.f32.gmra.mxu0 %v3622
    %v3762 = vpop.f32.mrf.mxu0
    %v3763 = vadd.f32 %v3601, %v3762
    %v3764 = vpop.f32.mrf.mxu0
    %3765 = vmatprep.mubr.f32.mxu0 0.0
    %3766 = vmatmul.mubr.f32.gmra.mxu0 %v3625
    %v3767 = vpop.f32.mrf.mxu0
    %v3768 = vadd.f32 %v3601, %v3767
    %v3769 = vpop.f32.mrf.mxu0
    %3770 = vmatprep.mubr.f32.mxu0 0.0
    %3771 = vmatmul.mubr.f32.gmra.mxu0 %v3628
    %v3772 = vpop.f32.mrf.mxu0
    %v3773 = vadd.f32 %v3601, %v3772
    %v3774 = vpop.f32.mrf.mxu0
    %3775 = vmatprep.mubr.f32.mxu0 0.0
    %3776 = vmatmul.mubr.f32.gmra.mxu0 %v3631
    %v3777 = vpop.f32.mrf.mxu0
    %v3778 = vadd.f32 %v3601, %v3777
    %v3779 = vpop.f32.mrf.mxu0
    %3780 = vmatprep.mubr.f32.mxu0 0.0
    %3781 = vmatmul.mubr.f32.gmra.mxu0 %v3634
    %v3782 = vpop.f32.mrf.mxu0
    %v3783 = vadd.f32 %v3601, %v3782
    %v3784 = vpop.f32.mrf.mxu0
    %3785 = vmatprep.mubr.f32.mxu0 0.0
    %3786 = vmatmul.mubr.f32.gmra.mxu0 %v3637
    %v3787 = vpop.f32.mrf.mxu0
    %v3788 = vadd.f32 %v3601, %v3787
    %v3789 = vpop.f32.mrf.mxu0
    %3790 = vmatprep.mubr.f32.mxu0 0.0
    %3791 = vmatmul.mubr.f32.gmra.mxu0 %v3640
    %v3792 = vpop.f32.mrf.mxu0
    %v3793 = vadd.f32 %v3601, %v3792
    %v3794 = vpop.f32.mrf.mxu0
    %3795 = vmatprep.mubr.f32.mxu0 0.0
    %3796 = vmatmul.mubr.f32.gmra.mxu0 %v3643
    %v3797 = vpop.f32.mrf.mxu0
    %v3798 = vadd.f32 %v3601, %v3797
    %v3799 = vpop.f32.mrf.mxu0
    %3800 = vmatprep.mubr.f32.mxu0 0.0
    %3801 = vmatmul.mubr.f32.gmra.mxu0 %v3646
    %v3802 = vpop.f32.mrf.mxu0
    %v3803 = vadd.f32 %v3601, %v3802
    %v3804 = vpop.f32.mrf.mxu0
    %3805 = vmatprep.mubr.f32.mxu0 0.0
    %3806 = vmatmul.mubr.f32.gmra.mxu0 %v3649
    %v3807 = vpop.f32.mrf.mxu0
    %v3808 = vadd.f32 %v3601, %v3807
    %v3809 = vpop.f32.mrf.mxu0
    %3810 = vmatprep.mubr.f32.mxu0 0.0
    %3811 = vmatmul.mubr.f32.gmra.mxu0 %v3652
    %v3812 = vpop.f32.mrf.mxu0
    %v3813 = vadd.f32 %v3601, %v3812
    %v3814 = vpop.f32.mrf.mxu0
    %3815 = vmatprep.mubr.f32.mxu0 0.0
    %3816 = vmatmul.mubr.f32.gmra.mxu0 %v3655
    %v3817 = vpop.f32.mrf.mxu0
    %v3818 = vadd.f32 %v3601, %v3817
    %v3819 = vpop.f32.mrf.mxu0
    %3820 = vmatprep.mubr.f32.mxu0 0.0
    %3821 = vmatmul.mubr.f32.gmra.mxu0 %v3658
    %v3822 = vpop.f32.mrf.mxu0
    %v3823 = vadd.f32 %v3601, %v3822
    %v3824 = vpop.f32.mrf.mxu0
    %3825 = vmatprep.mubr.f32.mxu0 0.0
    %3826 = vmatmul.mubr.f32.gmra.mxu0 %v3661
    %v3827 = vpop.f32.mrf.mxu0
    %v3828 = vadd.f32 %v3601, %v3827
    %v3829 = vpop.f32.mrf.mxu0
    %3830 = vdwg.mxu0
    %v3831 = vmul.f32 %v3733, %v300
    %v3832 = vmul.f32 %v3738, %v301
    %v3833 = vmul.f32 %v3743, %v302
    %v3834 = vmul.f32 %v3748, %v303
    %v3835 = vmul.f32 %v3753, %v304
    %v3836 = vmul.f32 %v3758, %v305
    %v3837 = vmul.f32 %v3763, %v306
    %v3838 = vmul.f32 %v3768, %v307
    %v3839 = vmul.f32 %v3773, %v308
    %v3840 = vmul.f32 %v3778, %v309
    %v3841 = vmul.f32 %v3783, %v310
    %v3842 = vmul.f32 %v3788, %v311
    %v3843 = vmul.f32 %v3793, %v312
    %v3844 = vmul.f32 %v3798, %v313
    %v3845 = vmul.f32 %v3803, %v314
    %v3846 = vmul.f32 %v3808, %v315
    %v3847 = vmul.f32 %v3813, %v316
    %v3848 = vmul.f32 %v3818, %v317
    %v3849 = vmul.f32 %v3823, %v318
    %v3850 = vmul.f32 %v3828, %v319
    %vm3851 = vcmask 408576
    %v3852 = vsel %vm3851, %v3831, 0.0
    %v3853 = vsel %vm3851, %v3832, 0.0
    %v3854 = vadd.f32 %v3852, %v3853
    %v3855 = vsel %vm3851, %v3833, 0.0
    %v3856 = vadd.f32 %v3854, %v3855
    %v3857 = vsel %vm3851, %v3834, 0.0
    %v3858 = vadd.f32 %v3856, %v3857
    %v3859 = vsel %vm3851, %v3835, 0.0
    %v3860 = vadd.f32 %v3858, %v3859
    %v3861 = vsel %vm3851, %v3836, 0.0
    %v3862 = vadd.f32 %v3860, %v3861
    %v3863 = vsel %vm3851, %v3837, 0.0
    %v3864 = vadd.f32 %v3862, %v3863
    %v3865 = vsel %vm3851, %v3838, 0.0
    %v3866 = vadd.f32 %v3864, %v3865
    %v3867 = vsel %vm3851, %v3839, 0.0
    %v3868 = vadd.f32 %v3866, %v3867
    %v3869 = vsel %vm3851, %v3840, 0.0
    %v3870 = vadd.f32 %v3868, %v3869
    %v3871 = vsel %vm3851, %v3841, 0.0
    %v3872 = vadd.f32 %v3870, %v3871
    %v3873 = vsel %vm3851, %v3842, 0.0
    %v3874 = vadd.f32 %v3872, %v3873
    %v3875 = vsel %vm3851, %v3843, 0.0
    %v3876 = vadd.f32 %v3874, %v3875
    %v3877 = vsel %vm3851, %v3844, 0.0
    %v3878 = vadd.f32 %v3876, %v3877
    %v3879 = vsel %vm3851, %v3845, 0.0
    %v3880 = vadd.f32 %v3878, %v3879
    %v3881 = vsel %vm3851, %v3846, 0.0
    %v3882 = vadd.f32 %v3880, %v3881
    %v3883 = vsel %vm3851, %v3847, 0.0
    %v3884 = vadd.f32 %v3882, %v3883
    %v3885 = vsel %vm3851, %v3848, 0.0
    %v3886 = vadd.f32 %v3884, %v3885
    %v3887 = vsel %vm3851, %v3849, 0.0
    %v3888 = vadd.f32 %v3886, %v3887
    %v3889 = vsel %vm3851, %v3850, 0.0
    %v3890 = vadd.f32 %v3888, %v3889
    %v3891 = vrot.slane %v3890, 4
    %v3892 = vadd.f32 %v3890, %v3891
    %v3893 = vrot.slane %v3892, 2
    %v3894 = vadd.f32 %v3892, %v3893
    %v3895 = vrot.slane %v3894, 1
    %v3896 = vadd.f32 %v3894, %v3895
    %v3897 = vmul.f32 %v3896, 0.00625
    %v3898 = vsub.f32 %v3733, %v3897
    %v3899 = vsub.f32 %v3738, %v3897
    %v3900 = vsub.f32 %v3743, %v3897
    %v3901 = vsub.f32 %v3748, %v3897
    %v3902 = vsub.f32 %v3753, %v3897
    %v3903 = vsub.f32 %v3758, %v3897
    %v3904 = vsub.f32 %v3763, %v3897
    %v3905 = vsub.f32 %v3768, %v3897
    %v3906 = vsub.f32 %v3773, %v3897
    %v3907 = vsub.f32 %v3778, %v3897
    %v3908 = vsub.f32 %v3783, %v3897
    %v3909 = vsub.f32 %v3788, %v3897
    %v3910 = vsub.f32 %v3793, %v3897
    %v3911 = vsub.f32 %v3798, %v3897
    %v3912 = vsub.f32 %v3803, %v3897
    %v3913 = vsub.f32 %v3808, %v3897
    %v3914 = vsub.f32 %v3813, %v3897
    %v3915 = vsub.f32 %v3818, %v3897
    %v3916 = vsub.f32 %v3823, %v3897
    %v3917 = vsub.f32 %v3828, %v3897
    %v3918 = vmul.f32 %v3898, %v300
    %v3919 = vmul.f32 %v3899, %v301
    %v3920 = vmul.f32 %v3900, %v302
    %v3921 = vmul.f32 %v3901, %v303
    %v3922 = vmul.f32 %v3902, %v304
    %v3923 = vmul.f32 %v3903, %v305
    %v3924 = vmul.f32 %v3904, %v306
    %v3925 = vmul.f32 %v3905, %v307
    %v3926 = vmul.f32 %v3906, %v308
    %v3927 = vmul.f32 %v3907, %v309
    %v3928 = vmul.f32 %v3908, %v310
    %v3929 = vmul.f32 %v3909, %v311
    %v3930 = vmul.f32 %v3910, %v312
    %v3931 = vmul.f32 %v3911, %v313
    %v3932 = vmul.f32 %v3912, %v314
    %v3933 = vmul.f32 %v3913, %v315
    %v3934 = vmul.f32 %v3914, %v316
    %v3935 = vmul.f32 %v3915, %v317
    %v3936 = vmul.f32 %v3916, %v318
    %v3937 = vmul.f32 %v3917, %v319
    %v3938 = vmul.f32 %v3918, %v3918
    %v3939 = vmul.f32 %v3919, %v3919
    %v3940 = vmul.f32 %v3920, %v3920
    %v3941 = vmul.f32 %v3921, %v3921
    %v3942 = vmul.f32 %v3922, %v3922
    %v3943 = vmul.f32 %v3923, %v3923
    %v3944 = vmul.f32 %v3924, %v3924
    %v3945 = vmul.f32 %v3925, %v3925
    %v3946 = vmul.f32 %v3926, %v3926
    %v3947 = vmul.f32 %v3927, %v3927
    %v3948 = vmul.f32 %v3928, %v3928
    %v3949 = vmul.f32 %v3929, %v3929
    %v3950 = vmul.f32 %v3930, %v3930
    %v3951 = vmul.f32 %v3931, %v3931
    %v3952 = vmul.f32 %v3932, %v3932
    %v3953 = vmul.f32 %v3933, %v3933
    %v3954 = vmul.f32 %v3934, %v3934
    %v3955 = vmul.f32 %v3935, %v3935
    %v3956 = vmul.f32 %v3936, %v3936
    %v3957 = vmul.f32 %v3937, %v3937
    %v3958 = vsel %vm3851, %v3938, 0.0
    %v3959 = vsel %vm3851, %v3939, 0.0
    %v3960 = vadd.f32 %v3958, %v3959
    %v3961 = vsel %vm3851, %v3940, 0.0
    %v3962 = vadd.f32 %v3960, %v3961
    %v3963 = vsel %vm3851, %v3941, 0.0
    %v3964 = vadd.f32 %v3962, %v3963
    %v3965 = vsel %vm3851, %v3942, 0.0
    %v3966 = vadd.f32 %v3964, %v3965
    %v3967 = vsel %vm3851, %v3943, 0.0
    %v3968 = vadd.f32 %v3966, %v3967
    %v3969 = vsel %vm3851, %v3944, 0.0
    %v3970 = vadd.f32 %v3968, %v3969
    %v3971 = vsel %vm3851, %v3945, 0.0
    %v3972 = vadd.f32 %v3970, %v3971
    %v3973 = vsel %vm3851, %v3946, 0.0
    %v3974 = vadd.f32 %v3972, %v3973
    %v3975 = vsel %vm3851, %v3947, 0.0
    %v3976 = vadd.f32 %v3974, %v3975
    %v3977 = vsel %vm3851, %v3948, 0.0
    %v3978 = vadd.f32 %v3976, %v3977
    %v3979 = vsel %vm3851, %v3949, 0.0
    %v3980 = vadd.f32 %v3978, %v3979
    %v3981 = vsel %vm3851, %v3950, 0.0
    %v3982 = vadd.f32 %v3980, %v3981
    %v3983 = vsel %vm3851, %v3951, 0.0
    %v3984 = vadd.f32 %v3982, %v3983
    %v3985 = vsel %vm3851, %v3952, 0.0
    %v3986 = vadd.f32 %v3984, %v3985
    %v3987 = vsel %vm3851, %v3953, 0.0
    %v3988 = vadd.f32 %v3986, %v3987
    %v3989 = vsel %vm3851, %v3954, 0.0
    %v3990 = vadd.f32 %v3988, %v3989
    %v3991 = vsel %vm3851, %v3955, 0.0
    %v3992 = vadd.f32 %v3990, %v3991
    %v3993 = vsel %vm3851, %v3956, 0.0
    %v3994 = vadd.f32 %v3992, %v3993
    %v3995 = vsel %vm3851, %v3957, 0.0
    %v3996 = vadd.f32 %v3994, %v3995
    %v3997 = vrot.slane %v3996, 4
    %v3998 = vadd.f32 %v3996, %v3997
    %v3999 = vrot.slane %v3998, 2
    %v4000 = vadd.f32 %v3998, %v3999
    %v4001 = vrot.slane %v4000, 1
    %v4002 = vadd.f32 %v4000, %v4001
    %v4003 = vmul.f32 %v4002, 0.00625
    %v4004 = vadd.f32 %v4003, 1e-05
    %v4005 = vrsqrt.pop %v4004
    %v4006 = vmul.f32 %v3898, %v4005
    %v4007 = vmul.f32 %v3899, %v4005
    %v4008 = vmul.f32 %v3900, %v4005
    %v4009 = vmul.f32 %v3901, %v4005
    %v4010 = vmul.f32 %v3902, %v4005
    %v4011 = vmul.f32 %v3903, %v4005
    %v4012 = vmul.f32 %v3904, %v4005
    %v4013 = vmul.f32 %v3905, %v4005
    %v4014 = vmul.f32 %v3906, %v4005
    %v4015 = vmul.f32 %v3907, %v4005
    %v4016 = vmul.f32 %v3908, %v4005
    %v4017 = vmul.f32 %v3909, %v4005
    %v4018 = vmul.f32 %v3910, %v4005
    %v4019 = vmul.f32 %v3911, %v4005
    %v4020 = vmul.f32 %v3912, %v4005
    %v4021 = vmul.f32 %v3913, %v4005
    %v4022 = vmul.f32 %v3914, %v4005
    %v4023 = vmul.f32 %v3915, %v4005
    %v4024 = vmul.f32 %v3916, %v4005
    %v4025 = vmul.f32 %v3917, %v4005
    %v4026 = vld [vmem:[#allocation16] sm:$0xff]
    %v4027 = vld [vmem:[#allocation16 + $0x8] sm:$0xff]
    %v4028 = vld [vmem:[#allocation16 + $0x10] sm:$0xff]
    %v4029 = vld [vmem:[#allocation16 + $0x18] sm:$0xff]
    %v4030 = vld [vmem:[#allocation16 + $0x20] sm:$0xff]
    %v4031 = vld [vmem:[#allocation16 + $0x28] sm:$0xff]
    %v4032 = vld [vmem:[#allocation16 + $0x30] sm:$0x3]
    %v4033 = vld [vmem:[%s18] sm:$0x1]
    %v4035 = vlaneseq
    %v4036 = vshrl.u32 %v4035, 7
    %v4037 = vsub.s32 0, %v4036
    %v4038 = vrot.slane %v4033, %v4037
    %v4041 = vsel %vm3851, %v4006, 0
    %v4044 = vsel %vm3851, %v4007, 0
    %v4047 = vsel %vm3851, %v4008, 0
    %v4050 = vsel %vm3851, %v4009, 0
    %v4053 = vsel %vm3851, %v4010, 0
    %v4056 = vsel %vm3851, %v4011, 0
    %v4059 = vsel %vm3851, %v4012, 0
    %v4062 = vsel %vm3851, %v4013, 0
    %v4065 = vsel %vm3851, %v4014, 0
    %v4068 = vsel %vm3851, %v4015, 0
    %v4071 = vsel %vm3851, %v4016, 0
    %v4074 = vsel %vm3851, %v4017, 0
    %v4077 = vsel %vm3851, %v4018, 0
    %v4080 = vsel %vm3851, %v4019, 0
    %v4083 = vsel %vm3851, %v4020, 0
    %v4086 = vsel %vm3851, %v4021, 0
    %v4089 = vsel %vm3851, %v4022, 0
    %v4092 = vsel %vm3851, %v4023, 0
    %v4095 = vsel %vm3851, %v4024, 0
    %v4098 = vsel %vm3851, %v4025, 0
    %vm4100 = vcmask 1041408
    %v4102 = vsel %vm4100, %v4032, 0
    %4104 = vmatprep.subr.mxu0 0.0
    %4105 = vmatpush1.msra.mxu0 0.0
    %4106 = vmatprep.subr.mxu0 0.0
    %4107 = vmatpush1.msra.mxu0 0.0
    %4108 = vmatprep.subr.mxu0 0.0
    %4109 = vmatpush1.msra.mxu0 0.0
    %4110 = vmatprep.subr.mxu0 0.0
    %4111 = vmatpush1.msra.mxu0 0.0
    %4112 = vmatprep.subr.mxu0 0.0
    %4113 = vmatpush1.msra.mxu0 0.0
    %4114 = vmatprep.subr.mxu0 0.0
    %4115 = vmatpush1.msra.mxu0 0.0
    %4116 = vmatprep.subr.mxu0 0.0
    %4117 = vmatpush1.msra.mxu0 0.0
    %4118 = vmatprep.subr.mxu0 0.0
    %4119 = vmatpush1.msra.mxu0 0.0
    %4120 = vmatprep.subr.mxu0 0.0
    %4121 = vmatpush1.msra.mxu0 0.0
    %4122 = vmatprep.subr.mxu0 0.0
    %4123 = vmatpush1.msra.mxu0 %v4102
    %4124 = vmatprep.subr.mxu0 0.0
    %4125 = vmatpush1.msra.mxu0 %v4031
    %4126 = vmatprep.subr.mxu0 0.0
    %4127 = vmatpush1.msra.mxu0 %v4030
    %4128 = vmatprep.subr.mxu0 0.0
    %4129 = vmatpush1.msra.mxu0 %v4029
    %4130 = vmatprep.subr.mxu0 0.0
    %4131 = vmatpush1.msra.mxu0 %v4028
    %4132 = vmatprep.subr.mxu0 0.0
    %4133 = vmatpush1.msra.mxu0 %v4027
    %4134 = vmatprep.subr.mxu0 0.0
    %4135 = vmatpush1.msra.mxu0 %v4026
    %4136 = vmatprep.subr.mxu0 0.0
    %4137 = vmatpush2.msra.mxu0 0.0
    %4138 = vmatprep.subr.mxu0 0.0
    %4139 = vmatpush2.msra.mxu0 0.0
    %4140 = vmatprep.subr.mxu0 0.0
    %4141 = vmatpush2.msra.mxu0 0.0
    %4142 = vmatprep.subr.mxu0 0.0
    %4143 = vmatpush2.msra.mxu0 0.0
    %4144 = vmatprep.subr.mxu0 0.0
    %4145 = vmatpush2.msra.mxu0 0.0
    %4146 = vmatprep.subr.mxu0 0.0
    %4147 = vmatpush2.msra.mxu0 0.0
    %4148 = vmatprep.subr.mxu0 0.0
    %4149 = vmatpush2.msra.mxu0 0.0
    %4150 = vmatprep.subr.mxu0 0.0
    %4151 = vmatpush2.msra.mxu0 0.0
    %4152 = vmatprep.subr.mxu0 0.0
    %4153 = vmatpush2.msra.mxu0 0.0
    %4154 = vmatprep.subr.mxu0 0.0
    %4155 = vmatpush2.msra.mxu0 0.0
    %4156 = vmatprep.subr.mxu0 0.0
    %4157 = vmatpush2.msra.mxu0 0.0
    %4158 = vmatprep.subr.mxu0 0.0
    %4159 = vmatpush2.msra.mxu0 0.0
    %4160 = vmatprep.subr.mxu0 0.0
    %4161 = vmatpush2.msra.mxu0 0.0
    %4162 = vmatprep.subr.mxu0 0.0
    %4163 = vmatpush2.msra.mxu0 0.0
    %4164 = vmatprep.subr.mxu0 0.0
    %4165 = vmatpush2.msra.mxu0 0.0
    %4166 = vmatprep.subr.mxu0 0.0
    %4167 = vmatpush2.msra.mxu0 0.0
    %4168 = vmatprep.mubr.f32.mxu0 0.0
    %4169 = vmatmul.mubr.f32.gmra.mxu0 %v4041
    %v4170 = vpop.f32.mrf.mxu0
    %v4171 = vadd.f32 %v4038, %v4170
    %v4172 = vpop.f32.mrf.mxu0
    %4173 = vmatprep.mubr.f32.mxu0 0.0
    %4174 = vmatmul.mubr.f32.gmra.mxu0 %v4044
    %v4175 = vpop.f32.mrf.mxu0
    %v4176 = vadd.f32 %v4038, %v4175
    %v4177 = vpop.f32.mrf.mxu0
    %4178 = vmatprep.mubr.f32.mxu0 0.0
    %4179 = vmatmul.mubr.f32.gmra.mxu0 %v4047
    %v4180 = vpop.f32.mrf.mxu0
    %v4181 = vadd.f32 %v4038, %v4180
    %v4182 = vpop.f32.mrf.mxu0
    %4183 = vmatprep.mubr.f32.mxu0 0.0
    %4184 = vmatmul.mubr.f32.gmra.mxu0 %v4050
    %v4185 = vpop.f32.mrf.mxu0
    %v4186 = vadd.f32 %v4038, %v4185
    %v4187 = vpop.f32.mrf.mxu0
    %4188 = vmatprep.mubr.f32.mxu0 0.0
    %4189 = vmatmul.mubr.f32.gmra.mxu0 %v4053
    %v4190 = vpop.f32.mrf.mxu0
    %v4191 = vadd.f32 %v4038, %v4190
    %v4192 = vpop.f32.mrf.mxu0
    %4193 = vmatprep.mubr.f32.mxu0 0.0
    %4194 = vmatmul.mubr.f32.gmra.mxu0 %v4056
    %v4195 = vpop.f32.mrf.mxu0
    %v4196 = vadd.f32 %v4038, %v4195
    %v4197 = vpop.f32.mrf.mxu0
    %4198 = vmatprep.mubr.f32.mxu0 0.0
    %4199 = vmatmul.mubr.f32.gmra.mxu0 %v4059
    %v4200 = vpop.f32.mrf.mxu0
    %v4201 = vadd.f32 %v4038, %v4200
    %v4202 = vpop.f32.mrf.mxu0
    %4203 = vmatprep.mubr.f32.mxu0 0.0
    %4204 = vmatmul.mubr.f32.gmra.mxu0 %v4062
    %v4205 = vpop.f32.mrf.mxu0
    %v4206 = vadd.f32 %v4038, %v4205
    %v4207 = vpop.f32.mrf.mxu0
    %4208 = vmatprep.mubr.f32.mxu0 0.0
    %4209 = vmatmul.mubr.f32.gmra.mxu0 %v4065
    %v4210 = vpop.f32.mrf.mxu0
    %v4211 = vadd.f32 %v4038, %v4210
    %v4212 = vpop.f32.mrf.mxu0
    %4213 = vmatprep.mubr.f32.mxu0 0.0
    %4214 = vmatmul.mubr.f32.gmra.mxu0 %v4068
    %v4215 = vpop.f32.mrf.mxu0
    %v4216 = vadd.f32 %v4038, %v4215
    %v4217 = vpop.f32.mrf.mxu0
    %4218 = vmatprep.mubr.f32.mxu0 0.0
    %4219 = vmatmul.mubr.f32.gmra.mxu0 %v4071
    %v4220 = vpop.f32.mrf.mxu0
    %v4221 = vadd.f32 %v4038, %v4220
    %v4222 = vpop.f32.mrf.mxu0
    %4223 = vmatprep.mubr.f32.mxu0 0.0
    %4224 = vmatmul.mubr.f32.gmra.mxu0 %v4074
    %v4225 = vpop.f32.mrf.mxu0
    %v4226 = vadd.f32 %v4038, %v4225
    %v4227 = vpop.f32.mrf.mxu0
    %4228 = vmatprep.mubr.f32.mxu0 0.0
    %4229 = vmatmul.mubr.f32.gmra.mxu0 %v4077
    %v4230 = vpop.f32.mrf.mxu0
    %v4231 = vadd.f32 %v4038, %v4230
    %v4232 = vpop.f32.mrf.mxu0
    %4233 = vmatprep.mubr.f32.mxu0 0.0
    %4234 = vmatmul.mubr.f32.gmra.mxu0 %v4080
    %v4235 = vpop.f32.mrf.mxu0
    %v4236 = vadd.f32 %v4038, %v4235
    %v4237 = vpop.f32.mrf.mxu0
    %4238 = vmatprep.mubr.f32.mxu0 0.0
    %4239 = vmatmul.mubr.f32.gmra.mxu0 %v4083
    %v4240 = vpop.f32.mrf.mxu0
    %v4241 = vadd.f32 %v4038, %v4240
    %v4242 = vpop.f32.mrf.mxu0
    %4243 = vmatprep.mubr.f32.mxu0 0.0
    %4244 = vmatmul.mubr.f32.gmra.mxu0 %v4086
    %v4245 = vpop.f32.mrf.mxu0
    %v4246 = vadd.f32 %v4038, %v4245
    %v4247 = vpop.f32.mrf.mxu0
    %4248 = vmatprep.mubr.f32.mxu0 0.0
    %4249 = vmatmul.mubr.f32.gmra.mxu0 %v4089
    %v4250 = vpop.f32.mrf.mxu0
    %v4251 = vadd.f32 %v4038, %v4250
    %v4252 = vpop.f32.mrf.mxu0
    %4253 = vmatprep.mubr.f32.mxu0 0.0
    %4254 = vmatmul.mubr.f32.gmra.mxu0 %v4092
    %v4255 = vpop.f32.mrf.mxu0
    %v4256 = vadd.f32 %v4038, %v4255
    %v4257 = vpop.f32.mrf.mxu0
    %4258 = vmatprep.mubr.f32.mxu0 0.0
    %4259 = vmatmul.mubr.f32.gmra.mxu0 %v4095
    %v4260 = vpop.f32.mrf.mxu0
    %v4261 = vadd.f32 %v4038, %v4260
    %v4262 = vpop.f32.mrf.mxu0
    %4263 = vmatprep.mubr.f32.mxu0 0.0
    %4264 = vmatmul.mubr.f32.gmra.mxu0 %v4098
    %v4265 = vpop.f32.mrf.mxu0
    %v4266 = vadd.f32 %v4038, %v4265
    %v4267 = vpop.f32.mrf.mxu0
    %4268 = vdwg.mxu0
    %v4269 = vtanh.pop %v4171
    %v4270 = vtanh.pop %v4176
    %v4271 = vtanh.pop %v4181
    %v4272 = vtanh.pop %v4186
    %v4273 = vtanh.pop %v4191
    %v4274 = vtanh.pop %v4196
    %v4275 = vtanh.pop %v4201
    %v4276 = vtanh.pop %v4206
    %v4277 = vtanh.pop %v4211
    %v4278 = vtanh.pop %v4216
    %v4279 = vtanh.pop %v4221
    %v4280 = vtanh.pop %v4226
    %v4281 = vtanh.pop %v4231
    %v4282 = vtanh.pop %v4236
    %v4283 = vtanh.pop %v4241
    %v4284 = vtanh.pop %v4246
    %v4285 = vtanh.pop %v4251
    %v4286 = vtanh.pop %v4256
    %v4287 = vtanh.pop %v4261
    %v4288 = vtanh.pop %v4266
    %v4289 = vmul.f32 %v4269, %v300
    %v4290 = vmul.f32 %v4270, %v301
    %v4291 = vmul.f32 %v4271, %v302
    %v4292 = vmul.f32 %v4272, %v303
    %v4293 = vmul.f32 %v4273, %v304
    %v4294 = vmul.f32 %v4274, %v305
    %v4295 = vmul.f32 %v4275, %v306
    %v4296 = vmul.f32 %v4276, %v307
    %v4297 = vmul.f32 %v4277, %v308
    %v4298 = vmul.f32 %v4278, %v309
    %v4299 = vmul.f32 %v4279, %v310
    %v4300 = vmul.f32 %v4280, %v311
    %v4301 = vmul.f32 %v4281, %v312
    %v4302 = vmul.f32 %v4282, %v313
    %v4303 = vmul.f32 %v4283, %v314
    %v4304 = vmul.f32 %v4284, %v315
    %v4305 = vmul.f32 %v4285, %v316
    %v4306 = vmul.f32 %v4286, %v317
    %v4307 = vmul.f32 %v4287, %v318
    %v4308 = vmul.f32 %v4288, %v319
    %vm4309 = vcmask 80896
    %v4310 = vsel %vm4309, %v4289, 0.0
    %v4311 = vsel %vm4309, %v4290, 0.0
    %v4312 = vadd.f32 %v4310, %v4311
    %v4313 = vsel %vm4309, %v4291, 0.0
    %v4314 = vadd.f32 %v4312, %v4313
    %v4315 = vsel %vm4309, %v4292, 0.0
    %v4316 = vadd.f32 %v4314, %v4315
    %v4317 = vsel %vm4309, %v4293, 0.0
    %v4318 = vadd.f32 %v4316, %v4317
    %v4319 = vsel %vm4309, %v4294, 0.0
    %v4320 = vadd.f32 %v4318, %v4319
    %v4321 = vsel %vm4309, %v4295, 0.0
    %v4322 = vadd.f32 %v4320, %v4321
    %v4323 = vsel %vm4309, %v4296, 0.0
    %v4324 = vadd.f32 %v4322, %v4323
    %v4325 = vsel %vm4309, %v4297, 0.0
    %v4326 = vadd.f32 %v4324, %v4325
    %v4327 = vsel %vm4309, %v4298, 0.0
    %v4328 = vadd.f32 %v4326, %v4327
    %v4329 = vsel %vm4309, %v4299, 0.0
    %v4330 = vadd.f32 %v4328, %v4329
    %v4331 = vsel %vm4309, %v4300, 0.0
    %v4332 = vadd.f32 %v4330, %v4331
    %v4333 = vsel %vm4309, %v4301, 0.0
    %v4334 = vadd.f32 %v4332, %v4333
    %v4335 = vsel %vm4309, %v4302, 0.0
    %v4336 = vadd.f32 %v4334, %v4335
    %v4337 = vsel %vm4309, %v4303, 0.0
    %v4338 = vadd.f32 %v4336, %v4337
    %v4339 = vsel %vm4309, %v4304, 0.0
    %v4340 = vadd.f32 %v4338, %v4339
    %v4341 = vsel %vm4309, %v4305, 0.0
    %v4342 = vadd.f32 %v4340, %v4341
    %v4343 = vsel %vm4309, %v4306, 0.0
    %v4344 = vadd.f32 %v4342, %v4343
    %v4345 = vsel %vm4309, %v4307, 0.0
    %v4346 = vadd.f32 %v4344, %v4345
    %v4347 = vsel %vm4309, %v4308, 0.0
    %v4348 = vadd.f32 %v4346, %v4347
    %v4349 = vrot.slane %v4348, 4
    %v4350 = vadd.f32 %v4348, %v4349
    %v4351 = vrot.slane %v4350, 2
    %v4352 = vadd.f32 %v4350, %v4351
    %v4353 = vrot.slane %v4352, 1
    %v4354 = vadd.f32 %v4352, %v4353
    %v4355 = vmul.f32 %v4354, 0.00625
    %v4356 = vsub.f32 %v4269, %v4355
    %v4357 = vsub.f32 %v4270, %v4355
    %v4358 = vsub.f32 %v4271, %v4355
    %v4359 = vsub.f32 %v4272, %v4355
    %v4360 = vsub.f32 %v4273, %v4355
    %v4361 = vsub.f32 %v4274, %v4355
    %v4362 = vsub.f32 %v4275, %v4355
    %v4363 = vsub.f32 %v4276, %v4355
    %v4364 = vsub.f32 %v4277, %v4355
    %v4365 = vsub.f32 %v4278, %v4355
    %v4366 = vsub.f32 %v4279, %v4355
    %v4367 = vsub.f32 %v4280, %v4355
    %v4368 = vsub.f32 %v4281, %v4355
    %v4369 = vsub.f32 %v4282, %v4355
    %v4370 = vsub.f32 %v4283, %v4355
    %v4371 = vsub.f32 %v4284, %v4355
    %v4372 = vsub.f32 %v4285, %v4355
    %v4373 = vsub.f32 %v4286, %v4355
    %v4374 = vsub.f32 %v4287, %v4355
    %v4375 = vsub.f32 %v4288, %v4355
    %v4376 = vmul.f32 %v4356, %v300
    %v4377 = vmul.f32 %v4357, %v301
    %v4378 = vmul.f32 %v4358, %v302
    %v4379 = vmul.f32 %v4359, %v303
    %v4380 = vmul.f32 %v4360, %v304
    %v4381 = vmul.f32 %v4361, %v305
    %v4382 = vmul.f32 %v4362, %v306
    %v4383 = vmul.f32 %v4363, %v307
    %v4384 = vmul.f32 %v4364, %v308
    %v4385 = vmul.f32 %v4365, %v309
    %v4386 = vmul.f32 %v4366, %v310
    %v4387 = vmul.f32 %v4367, %v311
    %v4388 = vmul.f32 %v4368, %v312
    %v4389 = vmul.f32 %v4369, %v313
    %v4390 = vmul.f32 %v4370, %v314
    %v4391 = vmul.f32 %v4371, %v315
    %v4392 = vmul.f32 %v4372, %v316
    %v4393 = vmul.f32 %v4373, %v317
    %v4394 = vmul.f32 %v4374, %v318
    %v4395 = vmul.f32 %v4375, %v319
    %v4396 = vmul.f32 %v4376, %v4376
    %v4397 = vmul.f32 %v4377, %v4377
    %v4398 = vmul.f32 %v4378, %v4378
    %v4399 = vmul.f32 %v4379, %v4379
    %v4400 = vmul.f32 %v4380, %v4380
    %v4401 = vmul.f32 %v4381, %v4381
    %v4402 = vmul.f32 %v4382, %v4382
    %v4403 = vmul.f32 %v4383, %v4383
    %v4404 = vmul.f32 %v4384, %v4384
    %v4405 = vmul.f32 %v4385, %v4385
    %v4406 = vmul.f32 %v4386, %v4386
    %v4407 = vmul.f32 %v4387, %v4387
    %v4408 = vmul.f32 %v4388, %v4388
    %v4409 = vmul.f32 %v4389, %v4389
    %v4410 = vmul.f32 %v4390, %v4390
    %v4411 = vmul.f32 %v4391, %v4391
    %v4412 = vmul.f32 %v4392, %v4392
    %v4413 = vmul.f32 %v4393, %v4393
    %v4414 = vmul.f32 %v4394, %v4394
    %v4415 = vmul.f32 %v4395, %v4395
    %v4416 = vsel %vm4309, %v4396, 0.0
    %v4417 = vsel %vm4309, %v4397, 0.0
    %v4418 = vadd.f32 %v4416, %v4417
    %v4419 = vsel %vm4309, %v4398, 0.0
    %v4420 = vadd.f32 %v4418, %v4419
    %v4421 = vsel %vm4309, %v4399, 0.0
    %v4422 = vadd.f32 %v4420, %v4421
    %v4423 = vsel %vm4309, %v4400, 0.0
    %v4424 = vadd.f32 %v4422, %v4423
    %v4425 = vsel %vm4309, %v4401, 0.0
    %v4426 = vadd.f32 %v4424, %v4425
    %v4427 = vsel %vm4309, %v4402, 0.0
    %v4428 = vadd.f32 %v4426, %v4427
    %v4429 = vsel %vm4309, %v4403, 0.0
    %v4430 = vadd.f32 %v4428, %v4429
    %v4431 = vsel %vm4309, %v4404, 0.0
    %v4432 = vadd.f32 %v4430, %v4431
    %v4433 = vsel %vm4309, %v4405, 0.0
    %v4434 = vadd.f32 %v4432, %v4433
    %v4435 = vsel %vm4309, %v4406, 0.0
    %v4436 = vadd.f32 %v4434, %v4435
    %v4437 = vsel %vm4309, %v4407, 0.0
    %v4438 = vadd.f32 %v4436, %v4437
    %v4439 = vsel %vm4309, %v4408, 0.0
    %v4440 = vadd.f32 %v4438, %v4439
    %v4441 = vsel %vm4309, %v4409, 0.0
    %v4442 = vadd.f32 %v4440, %v4441
    %v4443 = vsel %vm4309, %v4410, 0.0
    %v4444 = vadd.f32 %v4442, %v4443
    %v4445 = vsel %vm4309, %v4411, 0.0
    %v4446 = vadd.f32 %v4444, %v4445
    %v4447 = vsel %vm4309, %v4412, 0.0
    %v4448 = vadd.f32 %v4446, %v4447
    %v4449 = vsel %vm4309, %v4413, 0.0
    %v4450 = vadd.f32 %v4448, %v4449
    %v4451 = vsel %vm4309, %v4414, 0.0
    %v4452 = vadd.f32 %v4450, %v4451
    %v4453 = vsel %vm4309, %v4415, 0.0
    %v4454 = vadd.f32 %v4452, %v4453
    %v4455 = vrot.slane %v4454, 4
    %v4456 = vadd.f32 %v4454, %v4455
    %v4457 = vrot.slane %v4456, 2
    %v4458 = vadd.f32 %v4456, %v4457
    %v4459 = vrot.slane %v4458, 1
    %v4460 = vadd.f32 %v4458, %v4459
    %v4461 = vmul.f32 %v4460, 0.00625
    %v4462 = vadd.f32 %v4461, 1e-05
    %v4463 = vrsqrt.pop %v4462
    %v4464 = vmul.f32 %v4356, %v4463
    %v4465 = vmul.f32 %v4357, %v4463
    %v4466 = vmul.f32 %v4358, %v4463
    %v4467 = vmul.f32 %v4359, %v4463
    %v4468 = vmul.f32 %v4360, %v4463
    %v4469 = vmul.f32 %v4361, %v4463
    %v4470 = vmul.f32 %v4362, %v4463
    %v4471 = vmul.f32 %v4363, %v4463
    %v4472 = vmul.f32 %v4364, %v4463
    %v4473 = vmul.f32 %v4365, %v4463
    %v4474 = vmul.f32 %v4366, %v4463
    %v4475 = vmul.f32 %v4367, %v4463
    %v4476 = vmul.f32 %v4368, %v4463
    %v4477 = vmul.f32 %v4369, %v4463
    %v4478 = vmul.f32 %v4370, %v4463
    %v4479 = vmul.f32 %v4371, %v4463
    %v4480 = vmul.f32 %v4372, %v4463
    %v4481 = vmul.f32 %v4373, %v4463
    %v4482 = vmul.f32 %v4374, %v4463
    %v4483 = vmul.f32 %v4375, %v4463
    %v4484 = vld [vmem:[%s19] sm:$0x1]
    %v4486 = vlaneseq
    %v4487 = vshrl.u32 %v4486, 7
    %v4488 = vsub.s32 0, %v4487
    %v4489 = vrot.slane %v4484, %v4488
    %v4491 = vmul.f32 %v4464, %v4489
    %v4492 = vmul.f32 %v4465, %v4489
    %v4493 = vmul.f32 %v4466, %v4489
    %v4494 = vmul.f32 %v4467, %v4489
    %v4495 = vmul.f32 %v4468, %v4489
    %v4496 = vmul.f32 %v4469, %v4489
    %v4497 = vmul.f32 %v4470, %v4489
    %v4498 = vmul.f32 %v4471, %v4489
    %v4499 = vmul.f32 %v4472, %v4489
    %v4500 = vmul.f32 %v4473, %v4489
    %v4501 = vmul.f32 %v4474, %v4489
    %v4502 = vmul.f32 %v4475, %v4489
    %v4503 = vmul.f32 %v4476, %v4489
    %v4504 = vmul.f32 %v4477, %v4489
    %v4505 = vmul.f32 %v4478, %v4489
    %v4506 = vmul.f32 %v4479, %v4489
    %v4507 = vmul.f32 %v4480, %v4489
    %v4508 = vmul.f32 %v4481, %v4489
    %v4509 = vmul.f32 %v4482, %v4489
    %v4510 = vmul.f32 %v4483, %v4489
    %v4511 = vld [vmem:[%s20] sm:$0x1]
    %v4513 = vlaneseq
    %v4514 = vshrl.u32 %v4513, 7
    %v4515 = vsub.s32 0, %v4514
    %v4516 = vrot.slane %v4511, %v4515
    %v4518 = vadd.f32 %v4491, %v4516
    %v4519 = vadd.f32 %v4492, %v4516
    %v4520 = vadd.f32 %v4493, %v4516
    %v4521 = vadd.f32 %v4494, %v4516
    %v4522 = vadd.f32 %v4495, %v4516
    %v4523 = vadd.f32 %v4496, %v4516
    %v4524 = vadd.f32 %v4497, %v4516
    %v4525 = vadd.f32 %v4498, %v4516
    %v4526 = vadd.f32 %v4499, %v4516
    %v4527 = vadd.f32 %v4500, %v4516
    %v4528 = vadd.f32 %v4501, %v4516
    %v4529 = vadd.f32 %v4502, %v4516
    %v4530 = vadd.f32 %v4503, %v4516
    %v4531 = vadd.f32 %v4504, %v4516
    %v4532 = vadd.f32 %v4505, %v4516
    %v4533 = vadd.f32 %v4506, %v4516
    %v4534 = vadd.f32 %v4507, %v4516
    %v4535 = vadd.f32 %v4508, %v4516
    %v4536 = vadd.f32 %v4509, %v4516
    %v4537 = vadd.f32 %v4510, %v4516
    %v4538 = vld [vmem:[#allocation18] sm:$0xff]
    %v4539 = vld [vmem:[#allocation18 + $0x8] sm:$0x3]
    %v4540 = vld [vmem:[%s22] sm:$0x1]
    %v4542 = vlaneseq
    %v4543 = vshrl.u32 %v4542, 7
    %v4544 = vsub.s32 0, %v4543
    %v4545 = vrot.slane %v4540, %v4544
    %v4548 = vsel %vm4309, %v4518, 0
    %v4551 = vsel %vm4309, %v4519, 0
    %v4554 = vsel %vm4309, %v4520, 0
    %v4557 = vsel %vm4309, %v4521, 0
    %v4560 = vsel %vm4309, %v4522, 0
    %v4563 = vsel %vm4309, %v4523, 0
    %v4566 = vsel %vm4309, %v4524, 0
    %v4569 = vsel %vm4309, %v4525, 0
    %v4572 = vsel %vm4309, %v4526, 0
    %v4575 = vsel %vm4309, %v4527, 0
    %v4578 = vsel %vm4309, %v4528, 0
    %v4581 = vsel %vm4309, %v4529, 0
    %v4584 = vsel %vm4309, %v4530, 0
    %v4587 = vsel %vm4309, %v4531, 0
    %v4590 = vsel %vm4309, %v4532, 0
    %v4593 = vsel %vm4309, %v4533, 0
    %v4596 = vsel %vm4309, %v4534, 0
    %v4599 = vsel %vm4309, %v4535, 0
    %v4602 = vsel %vm4309, %v4536, 0
    %v4605 = vsel %vm4309, %v4537, 0
    %v4608 = vsel %vm4100, %v4539, 0
    %4610 = vmatprep.subr.mxu0 0.0
    %4611 = vmatpush1.msra.mxu0 0.0
    %4612 = vmatprep.subr.mxu0 0.0
    %4613 = vmatpush1.msra.mxu0 0.0
    %4614 = vmatprep.subr.mxu0 0.0
    %4615 = vmatpush1.msra.mxu0 0.0
    %4616 = vmatprep.subr.mxu0 0.0
    %4617 = vmatpush1.msra.mxu0 0.0
    %4618 = vmatprep.subr.mxu0 0.0
    %4619 = vmatpush1.msra.mxu0 0.0
    %4620 = vmatprep.subr.mxu0 0.0
    %4621 = vmatpush1.msra.mxu0 0.0
    %4622 = vmatprep.subr.mxu0 0.0
    %4623 = vmatpush1.msra.mxu0 0.0
    %4624 = vmatprep.subr.mxu0 0.0
    %4625 = vmatpush1.msra.mxu0 0.0
    %4626 = vmatprep.subr.mxu0 0.0
    %4627 = vmatpush1.msra.mxu0 0.0
    %4628 = vmatprep.subr.mxu0 0.0
    %4629 = vmatpush1.msra.mxu0 0.0
    %4630 = vmatprep.subr.mxu0 0.0
    %4631 = vmatpush1.msra.mxu0 0.0
    %4632 = vmatprep.subr.mxu0 0.0
    %4633 = vmatpush1.msra.mxu0 0.0
    %4634 = vmatprep.subr.mxu0 0.0
    %4635 = vmatpush1.msra.mxu0 0.0
    %4636 = vmatprep.subr.mxu0 0.0
    %4637 = vmatpush1.msra.mxu0 0.0
    %4638 = vmatprep.subr.mxu0 0.0
    %4639 = vmatpush1.msra.mxu0 %v4608
    %4640 = vmatprep.subr.mxu0 0.0
    %4641 = vmatpush1.msra.mxu0 %v4538
    %4642 = vmatprep.subr.mxu0 0.0
    %4643 = vmatpush2.msra.mxu0 0.0
    %4644 = vmatprep.subr.mxu0 0.0
    %4645 = vmatpush2.msra.mxu0 0.0
    %4646 = vmatprep.subr.mxu0 0.0
    %4647 = vmatpush2.msra.mxu0 0.0
    %4648 = vmatprep.subr.mxu0 0.0
    %4649 = vmatpush2.msra.mxu0 0.0
    %4650 = vmatprep.subr.mxu0 0.0
    %4651 = vmatpush2.msra.mxu0 0.0
    %4652 = vmatprep.subr.mxu0 0.0
    %4653 = vmatpush2.msra.mxu0 0.0
    %4654 = vmatprep.subr.mxu0 0.0
    %4655 = vmatpush2.msra.mxu0 0.0
    %4656 = vmatprep.subr.mxu0 0.0
    %4657 = vmatpush2.msra.mxu0 0.0
    %4658 = vmatprep.subr.mxu0 0.0
    %4659 = vmatpush2.msra.mxu0 0.0
    %4660 = vmatprep.subr.mxu0 0.0
    %4661 = vmatpush2.msra.mxu0 0.0
    %4662 = vmatprep.subr.mxu0 0.0
    %4663 = vmatpush2.msra.mxu0 0.0
    %4664 = vmatprep.subr.mxu0 0.0
    %4665 = vmatpush2.msra.mxu0 0.0
    %4666 = vmatprep.subr.mxu0 0.0
    %4667 = vmatpush2.msra.mxu0 0.0
    %4668 = vmatprep.subr.mxu0 0.0
    %4669 = vmatpush2.msra.mxu0 0.0
    %4670 = vmatprep.subr.mxu0 0.0
    %4671 = vmatpush2.msra.mxu0 0.0
    %4672 = vmatprep.subr.mxu0 0.0
    %4673 = vmatpush2.msra.mxu0 0.0
    %4674 = vmatprep.mubr.f32.mxu0 0.0
    %4675 = vmatmul.mubr.f32.gmra.mxu0 %v4548
    %v4676 = vpop.f32.mrf.mxu0
    %v4677 = vadd.f32 %v4545, %v4676
    %v4678 = vpop.f32.mrf.mxu0
    %4679 = vmatprep.mubr.f32.mxu0 0.0
    %4680 = vmatmul.mubr.f32.gmra.mxu0 %v4551
    %v4681 = vpop.f32.mrf.mxu0
    %v4682 = vadd.f32 %v4545, %v4681
    %v4683 = vpop.f32.mrf.mxu0
    %4684 = vmatprep.mubr.f32.mxu0 0.0
    %4685 = vmatmul.mubr.f32.gmra.mxu0 %v4554
    %v4686 = vpop.f32.mrf.mxu0
    %v4687 = vadd.f32 %v4545, %v4686
    %v4688 = vpop.f32.mrf.mxu0
    %4689 = vmatprep.mubr.f32.mxu0 0.0
    %4690 = vmatmul.mubr.f32.gmra.mxu0 %v4557
    %v4691 = vpop.f32.mrf.mxu0
    %v4692 = vadd.f32 %v4545, %v4691
    %v4693 = vpop.f32.mrf.mxu0
    %4694 = vmatprep.mubr.f32.mxu0 0.0
    %4695 = vmatmul.mubr.f32.gmra.mxu0 %v4560
    %v4696 = vpop.f32.mrf.mxu0
    %v4697 = vadd.f32 %v4545, %v4696
    %v4698 = vpop.f32.mrf.mxu0
    %4699 = vmatprep.mubr.f32.mxu0 0.0
    %4700 = vmatmul.mubr.f32.gmra.mxu0 %v4563
    %v4701 = vpop.f32.mrf.mxu0
    %v4702 = vadd.f32 %v4545, %v4701
    %v4703 = vpop.f32.mrf.mxu0
    %4704 = vmatprep.mubr.f32.mxu0 0.0
    %4705 = vmatmul.mubr.f32.gmra.mxu0 %v4566
    %v4706 = vpop.f32.mrf.mxu0
    %v4707 = vadd.f32 %v4545, %v4706
    %v4708 = vpop.f32.mrf.mxu0
    %4709 = vmatprep.mubr.f32.mxu0 0.0
    %4710 = vmatmul.mubr.f32.gmra.mxu0 %v4569
    %v4711 = vpop.f32.mrf.mxu0
    %v4712 = vadd.f32 %v4545, %v4711
    %v4713 = vpop.f32.mrf.mxu0
    %4714 = vmatprep.mubr.f32.mxu0 0.0
    %4715 = vmatmul.mubr.f32.gmra.mxu0 %v4572
    %v4716 = vpop.f32.mrf.mxu0
    %v4717 = vadd.f32 %v4545, %v4716
    %v4718 = vpop.f32.mrf.mxu0
    %4719 = vmatprep.mubr.f32.mxu0 0.0
    %4720 = vmatmul.mubr.f32.gmra.mxu0 %v4575
    %v4721 = vpop.f32.mrf.mxu0
    %v4722 = vadd.f32 %v4545, %v4721
    %v4723 = vpop.f32.mrf.mxu0
    %4724 = vmatprep.mubr.f32.mxu0 0.0
    %4725 = vmatmul.mubr.f32.gmra.mxu0 %v4578
    %v4726 = vpop.f32.mrf.mxu0
    %v4727 = vadd.f32 %v4545, %v4726
    %v4728 = vpop.f32.mrf.mxu0
    %4729 = vmatprep.mubr.f32.mxu0 0.0
    %4730 = vmatmul.mubr.f32.gmra.mxu0 %v4581
    %v4731 = vpop.f32.mrf.mxu0
    %v4732 = vadd.f32 %v4545, %v4731
    %v4733 = vpop.f32.mrf.mxu0
    %4734 = vmatprep.mubr.f32.mxu0 0.0
    %4735 = vmatmul.mubr.f32.gmra.mxu0 %v4584
    %v4736 = vpop.f32.mrf.mxu0
    %v4737 = vadd.f32 %v4545, %v4736
    %v4738 = vpop.f32.mrf.mxu0
    %4739 = vmatprep.mubr.f32.mxu0 0.0
    %4740 = vmatmul.mubr.f32.gmra.mxu0 %v4587
    %v4741 = vpop.f32.mrf.mxu0
    %v4742 = vadd.f32 %v4545, %v4741
    %v4743 = vpop.f32.mrf.mxu0
    %4744 = vmatprep.mubr.f32.mxu0 0.0
    %4745 = vmatmul.mubr.f32.gmra.mxu0 %v4590
    %v4746 = vpop.f32.mrf.mxu0
    %v4747 = vadd.f32 %v4545, %v4746
    %v4748 = vpop.f32.mrf.mxu0
    %4749 = vmatprep.mubr.f32.mxu0 0.0
    %4750 = vmatmul.mubr.f32.gmra.mxu0 %v4593
    %v4751 = vpop.f32.mrf.mxu0
    %v4752 = vadd.f32 %v4545, %v4751
    %v4753 = vpop.f32.mrf.mxu0
    %4754 = vmatprep.mubr.f32.mxu0 0.0
    %4755 = vmatmul.mubr.f32.gmra.mxu0 %v4596
    %v4756 = vpop.f32.mrf.mxu0
    %v4757 = vadd.f32 %v4545, %v4756
    %v4758 = vpop.f32.mrf.mxu0
    %4759 = vmatprep.mubr.f32.mxu0 0.0
    %4760 = vmatmul.mubr.f32.gmra.mxu0 %v4599
    %v4761 = vpop.f32.mrf.mxu0
    %v4762 = vadd.f32 %v4545, %v4761
    %v4763 = vpop.f32.mrf.mxu0
    %4764 = vmatprep.mubr.f32.mxu0 0.0
    %4765 = vmatmul.mubr.f32.gmra.mxu0 %v4602
    %v4766 = vpop.f32.mrf.mxu0
    %v4767 = vadd.f32 %v4545, %v4766
    %v4768 = vpop.f32.mrf.mxu0
    %4769 = vmatprep.mubr.f32.mxu0 0.0
    %4770 = vmatmul.mubr.f32.gmra.mxu0 %v4605
    %v4771 = vpop.f32.mrf.mxu0
    %v4772 = vadd.f32 %v4545, %v4771
    %v4773 = vpop.f32.mrf.mxu0
    %4774 = vdwg.mxu0
    %v4775 = vtanh.pop %v4677
    %v4776 = vtanh.pop %v4682
    %v4777 = vtanh.pop %v4687
    %v4778 = vtanh.pop %v4692
    %v4779 = vtanh.pop %v4697
    %v4780 = vtanh.pop %v4702
    %v4781 = vtanh.pop %v4707
    %v4782 = vtanh.pop %v4712
    %v4783 = vtanh.pop %v4717
    %v4784 = vtanh.pop %v4722
    %v4785 = vtanh.pop %v4727
    %v4786 = vtanh.pop %v4732
    %v4787 = vtanh.pop %v4737
    %v4788 = vtanh.pop %v4742
    %v4789 = vtanh.pop %v4747
    %v4790 = vtanh.pop %v4752
    %v4791 = vtanh.pop %v4757
    %v4792 = vtanh.pop %v4762
    %v4793 = vtanh.pop %v4767
    %v4794 = vtanh.pop %v4772
    %v4795 = vld [vmem:[%s23] sm:$0xff]
    %v4796 = vld [vmem:[%s23 + $0x8] sm:$0x3]
    %v4797 = vld [vmem:[%s24] sm:$0x1]
    %v4799 = vlaneseq
    %v4800 = vshrl.u32 %v4799, 7
    %v4801 = vsub.s32 0, %v4800
    %v4802 = vrot.slane %v4797, %v4801
    %v4805 = vsel %vm4309, %v4775, 0
    %v4808 = vsel %vm4309, %v4776, 0
    %v4811 = vsel %vm4309, %v4777, 0
    %v4814 = vsel %vm4309, %v4778, 0
    %v4817 = vsel %vm4309, %v4779, 0
    %v4820 = vsel %vm4309, %v4780, 0
    %v4823 = vsel %vm4309, %v4781, 0
    %v4826 = vsel %vm4309, %v4782, 0
    %v4829 = vsel %vm4309, %v4783, 0
    %v4832 = vsel %vm4309, %v4784, 0
    %v4835 = vsel %vm4309, %v4785, 0
    %v4838 = vsel %vm4309, %v4786, 0
    %v4841 = vsel %vm4309, %v4787, 0
    %v4844 = vsel %vm4309, %v4788, 0
    %v4847 = vsel %vm4309, %v4789, 0
    %v4850 = vsel %vm4309, %v4790, 0
    %v4853 = vsel %vm4309, %v4791, 0
    %v4856 = vsel %vm4309, %v4792, 0
    %v4859 = vsel %vm4309, %v4793, 0
    %v4862 = vsel %vm4309, %v4794, 0
    %v4865 = vsel %vm4100, %v4796, 0
    %4867 = vmatprep.subr.mxu0 0.0
    %4868 = vmatpush1.msra.mxu0 0.0
    %4869 = vmatprep.subr.mxu0 0.0
    %4870 = vmatpush1.msra.mxu0 0.0
    %4871 = vmatprep.subr.mxu0 0.0
    %4872 = vmatpush1.msra.mxu0 0.0
    %4873 = vmatprep.subr.mxu0 0.0
    %4874 = vmatpush1.msra.mxu0 0.0
    %4875 = vmatprep.subr.mxu0 0.0
    %4876 = vmatpush1.msra.mxu0 0.0
    %4877 = vmatprep.subr.mxu0 0.0
    %4878 = vmatpush1.msra.mxu0 0.0
    %4879 = vmatprep.subr.mxu0 0.0
    %4880 = vmatpush1.msra.mxu0 0.0
    %4881 = vmatprep.subr.mxu0 0.0
    %4882 = vmatpush1.msra.mxu0 0.0
    %4883 = vmatprep.subr.mxu0 0.0
    %4884 = vmatpush1.msra.mxu0 0.0
    %4885 = vmatprep.subr.mxu0 0.0
    %4886 = vmatpush1.msra.mxu0 0.0
    %4887 = vmatprep.subr.mxu0 0.0
    %4888 = vmatpush1.msra.mxu0 0.0
    %4889 = vmatprep.subr.mxu0 0.0
    %4890 = vmatpush1.msra.mxu0 0.0
    %4891 = vmatprep.subr.mxu0 0.0
    %4892 = vmatpush1.msra.mxu0 0.0
    %4893 = vmatprep.subr.mxu0 0.0
    %4894 = vmatpush1.msra.mxu0 0.0
    %4895 = vmatprep.subr.mxu0 0.0
    %4896 = vmatpush1.msra.mxu0 %v4865
    %4897 = vmatprep.subr.mxu0 0.0
    %4898 = vmatpush1.msra.mxu0 %v4795
    %4899 = vmatprep.subr.mxu0 0.0
    %4900 = vmatpush2.msra.mxu0 0.0
    %4901 = vmatprep.subr.mxu0 0.0
    %4902 = vmatpush2.msra.mxu0 0.0
    %4903 = vmatprep.subr.mxu0 0.0
    %4904 = vmatpush2.msra.mxu0 0.0
    %4905 = vmatprep.subr.mxu0 0.0
    %4906 = vmatpush2.msra.mxu0 0.0
    %4907 = vmatprep.subr.mxu0 0.0
    %4908 = vmatpush2.msra.mxu0 0.0
    %4909 = vmatprep.subr.mxu0 0.0
    %4910 = vmatpush2.msra.mxu0 0.0
    %4911 = vmatprep.subr.mxu0 0.0
    %4912 = vmatpush2.msra.mxu0 0.0
    %4913 = vmatprep.subr.mxu0 0.0
    %4914 = vmatpush2.msra.mxu0 0.0
    %4915 = vmatprep.subr.mxu0 0.0
    %4916 = vmatpush2.msra.mxu0 0.0
    %4917 = vmatprep.subr.mxu0 0.0
    %4918 = vmatpush2.msra.mxu0 0.0
    %4919 = vmatprep.subr.mxu0 0.0
    %4920 = vmatpush2.msra.mxu0 0.0
    %4921 = vmatprep.subr.mxu0 0.0
    %4922 = vmatpush2.msra.mxu0 0.0
    %4923 = vmatprep.subr.mxu0 0.0
    %4924 = vmatpush2.msra.mxu0 0.0
    %4925 = vmatprep.subr.mxu0 0.0
    %4926 = vmatpush2.msra.mxu0 0.0
    %4927 = vmatprep.subr.mxu0 0.0
    %4928 = vmatpush2.msra.mxu0 0.0
    %4929 = vmatprep.subr.mxu0 0.0
    %4930 = vmatpush2.msra.mxu0 0.0
    %4931 = vmatprep.mubr.f32.mxu0 0.0
    %4932 = vmatmul.mubr.f32.gmra.mxu0 %v4805
    %v4933 = vpop.f32.mrf.mxu0
    %v4934 = vadd.f32 %v4802, %v4933
    %v4935 = vpop.f32.mrf.mxu0
    %4936 = vmatprep.mubr.f32.mxu0 0.0
    %4937 = vmatmul.mubr.f32.gmra.mxu0 %v4808
    %v4938 = vpop.f32.mrf.mxu0
    %v4939 = vadd.f32 %v4802, %v4938
    %v4940 = vpop.f32.mrf.mxu0
    %4941 = vmatprep.mubr.f32.mxu0 0.0
    %4942 = vmatmul.mubr.f32.gmra.mxu0 %v4811
    %v4943 = vpop.f32.mrf.mxu0
    %v4944 = vadd.f32 %v4802, %v4943
    %v4945 = vpop.f32.mrf.mxu0
    %4946 = vmatprep.mubr.f32.mxu0 0.0
    %4947 = vmatmul.mubr.f32.gmra.mxu0 %v4814
    %v4948 = vpop.f32.mrf.mxu0
    %v4949 = vadd.f32 %v4802, %v4948
    %v4950 = vpop.f32.mrf.mxu0
    %4951 = vmatprep.mubr.f32.mxu0 0.0
    %4952 = vmatmul.mubr.f32.gmra.mxu0 %v4817
    %v4953 = vpop.f32.mrf.mxu0
    %v4954 = vadd.f32 %v4802, %v4953
    %v4955 = vpop.f32.mrf.mxu0
    %4956 = vmatprep.mubr.f32.mxu0 0.0
    %4957 = vmatmul.mubr.f32.gmra.mxu0 %v4820
    %v4958 = vpop.f32.mrf.mxu0
    %v4959 = vadd.f32 %v4802, %v4958
    %v4960 = vpop.f32.mrf.mxu0
    %4961 = vmatprep.mubr.f32.mxu0 0.0
    %4962 = vmatmul.mubr.f32.gmra.mxu0 %v4823
    %v4963 = vpop.f32.mrf.mxu0
    %v4964 = vadd.f32 %v4802, %v4963
    %v4965 = vpop.f32.mrf.mxu0
    %4966 = vmatprep.mubr.f32.mxu0 0.0
    %4967 = vmatmul.mubr.f32.gmra.mxu0 %v4826
    %v4968 = vpop.f32.mrf.mxu0
    %v4969 = vadd.f32 %v4802, %v4968
    %v4970 = vpop.f32.mrf.mxu0
    %4971 = vmatprep.mubr.f32.mxu0 0.0
    %4972 = vmatmul.mubr.f32.gmra.mxu0 %v4829
    %v4973 = vpop.f32.mrf.mxu0
    %v4974 = vadd.f32 %v4802, %v4973
    %v4975 = vpop.f32.mrf.mxu0
    %4976 = vmatprep.mubr.f32.mxu0 0.0
    %4977 = vmatmul.mubr.f32.gmra.mxu0 %v4832
    %v4978 = vpop.f32.mrf.mxu0
    %v4979 = vadd.f32 %v4802, %v4978
    %v4980 = vpop.f32.mrf.mxu0
    %4981 = vmatprep.mubr.f32.mxu0 0.0
    %4982 = vmatmul.mubr.f32.gmra.mxu0 %v4835
    %v4983 = vpop.f32.mrf.mxu0
    %v4984 = vadd.f32 %v4802, %v4983
    %v4985 = vpop.f32.mrf.mxu0
    %4986 = vmatprep.mubr.f32.mxu0 0.0
    %4987 = vmatmul.mubr.f32.gmra.mxu0 %v4838
    %v4988 = vpop.f32.mrf.mxu0
    %v4989 = vadd.f32 %v4802, %v4988
    %v4990 = vpop.f32.mrf.mxu0
    %4991 = vmatprep.mubr.f32.mxu0 0.0
    %4992 = vmatmul.mubr.f32.gmra.mxu0 %v4841
    %v4993 = vpop.f32.mrf.mxu0
    %v4994 = vadd.f32 %v4802, %v4993
    %v4995 = vpop.f32.mrf.mxu0
    %4996 = vmatprep.mubr.f32.mxu0 0.0
    %4997 = vmatmul.mubr.f32.gmra.mxu0 %v4844
    %v4998 = vpop.f32.mrf.mxu0
    %v4999 = vadd.f32 %v4802, %v4998
    %v5000 = vpop.f32.mrf.mxu0
    %5001 = vmatprep.mubr.f32.mxu0 0.0
    %5002 = vmatmul.mubr.f32.gmra.mxu0 %v4847
    %v5003 = vpop.f32.mrf.mxu0
    %v5004 = vadd.f32 %v4802, %v5003
    %v5005 = vpop.f32.mrf.mxu0
    %5006 = vmatprep.mubr.f32.mxu0 0.0
    %5007 = vmatmul.mubr.f32.gmra.mxu0 %v4850
    %v5008 = vpop.f32.mrf.mxu0
    %v5009 = vadd.f32 %v4802, %v5008
    %v5010 = vpop.f32.mrf.mxu0
    %5011 = vmatprep.mubr.f32.mxu0 0.0
    %5012 = vmatmul.mubr.f32.gmra.mxu0 %v4853
    %v5013 = vpop.f32.mrf.mxu0
    %v5014 = vadd.f32 %v4802, %v5013
    %v5015 = vpop.f32.mrf.mxu0
    %5016 = vmatprep.mubr.f32.mxu0 0.0
    %5017 = vmatmul.mubr.f32.gmra.mxu0 %v4856
    %v5018 = vpop.f32.mrf.mxu0
    %v5019 = vadd.f32 %v4802, %v5018
    %v5020 = vpop.f32.mrf.mxu0
    %5021 = vmatprep.mubr.f32.mxu0 0.0
    %5022 = vmatmul.mubr.f32.gmra.mxu0 %v4859
    %v5023 = vpop.f32.mrf.mxu0
    %v5024 = vadd.f32 %v4802, %v5023
    %v5025 = vpop.f32.mrf.mxu0
    %5026 = vmatprep.mubr.f32.mxu0 0.0
    %5027 = vmatmul.mubr.f32.gmra.mxu0 %v4862
    %v5028 = vpop.f32.mrf.mxu0
    %v5029 = vadd.f32 %v4802, %v5028
    %v5030 = vpop.f32.mrf.mxu0
    %5031 = vdwg.mxu0
    %vm5032 = vcmask 31744
    %5033 = vst.msk [vmem:[%s25] sm:$0xff] %vm5032, %v4934
    %5034 = vst.msk [vmem:[%s25 + $0x8] sm:$0xff] %vm5032, %v4939
    %5035 = vst.msk [vmem:[%s25 + $0x10] sm:$0xff] %vm5032, %v4944
    %5036 = vst.msk [vmem:[%s25 + $0x18] sm:$0xff] %vm5032, %v4949
    %5037 = vst.msk [vmem:[%s25 + $0x20] sm:$0xff] %vm5032, %v4954
    %5038 = vst.msk [vmem:[%s25 + $0x28] sm:$0xff] %vm5032, %v4959
    %5039 = vst.msk [vmem:[%s25 + $0x30] sm:$0xff] %vm5032, %v4964
    %5040 = vst.msk [vmem:[%s25 + $0x38] sm:$0xff] %vm5032, %v4969
    %5041 = vst.msk [vmem:[%s25 + $0x40] sm:$0xff] %vm5032, %v4974
    %5042 = vst.msk [vmem:[%s25 + $0x48] sm:$0xff] %vm5032, %v4979
    %5043 = vst.msk [vmem:[%s25 + $0x50] sm:$0xff] %vm5032, %v4984
    %5044 = vst.msk [vmem:[%s25 + $0x58] sm:$0xff] %vm5032, %v4989
    %5045 = vst.msk [vmem:[%s25 + $0x60] sm:$0xff] %vm5032, %v4994
    %5046 = vst.msk [vmem:[%s25 + $0x68] sm:$0xff] %vm5032, %v4999
    %5047 = vst.msk [vmem:[%s25 + $0x70] sm:$0xff] %vm5032, %v5004
    %5048 = vst.msk [vmem:[%s25 + $0x78] sm:$0xff] %vm5032, %v5009
    %5049 = vst.msk [vmem:[%s25 + $0x80] sm:$0xff] %vm5032, %v5014
    %5050 = vst.msk [vmem:[%s25 + $0x88] sm:$0xff] %vm5032, %v5019
    %5051 = vst.msk [vmem:[%s25 + $0x90] sm:$0xff] %vm5032, %v5024
    %5052 = vst.msk [vmem:[%s25 + $0x98] sm:$0xff] %vm5032, %v5029
    // Predicated region
    $region146: #{_lambda_.1} parent=1 // pred_check
      _
    $region147: #{_lambda_.1} parent=1 // pred_check_branch
      %5054 = sbr.rel (0) target = $region149
    $region148: #{_lambda_.1} parent=1 // pred_region
      _
    $region149: #{_lambda_.1} parent=1 // pred_fallthru
      _
    // Predicated region
    $region150: #{_lambda_.1} parent=1 // pred_check
      _
    $region151: #{_lambda_.1} parent=1 // pred_check_branch
      %5056 = sbr.rel (0) target = $region153
    $region152: #{_lambda_.1} parent=1 // pred_region
      _
    $region153: #{_lambda_.1} parent=1 // pred_fallthru
      _
    %5057 = vsyncpa [#allocation3], 1
    %5058 = vsyncpa [#allocation5], 1
    %5059 = vsyncpa [#allocation8], 1
    %5060 = vsyncpa [#allocation11], 1
    %5061 = vsyncpa [#allocation14], 1
    %5062 = vsyncpa [#allocation17], 1

</llo_original>
